<compile_context>
chip_gen: v7x
topology: tpu7x:2x2x1
jax: 0.10.0
libtpu: 0.0.40
codegen_flags: <defaults>
</compile_context>

<pallas_src>
import functools

import jax
import jax.numpy as jnp
from jax import lax
from jax.experimental import pallas as pl
from jax.experimental.pallas import tpu as pltpu


# ----------------------------------------------------------------------------
# Fused bidirectional LSTM layer (one Pallas kernel = both directions), batch-tiled.
#
#   x_ref   : (S, TB, In)  bf16   In = E for layer 0, 2H (fwd|bwd lanes) for layers > 0
#   wih_ref : (In, 8H)     bf16   input weights, [fwd gates | bwd gates] on output axis
#   whh_ref : (2H, 8H)     bf16   block-diag(W_hh_fwd, W_hh_bwd)          (fuse_whh=True)
#             (2, H, 4H)   bf16   separate per-direction weights          (fuse_whh=False)
#   b_ref   : (1, 8H)      f32    b_ih + b_hh, both directions
#   fcw_ref : (2H, O)      bf16   (only when with_fc)
#   fcb_ref : (1, O)       f32    (only when with_fc)
#   out_ref : (S, TB, 2H)  bf16   per-timestep outputs, lanes [:H]=fwd, [H:]=bwd
#   hn_ref  : (TB, 2H)     f32    final hidden = cat(hidden[-2], hidden[-1])
#   logit_ref: (TB, O)     f32    (only when with_fc) fc(h_n)
#   gx_ref  : (S, TB, 8H)  bf16 VMEM scratch  precomputed input projections
#   h_ref/c_ref : (TB, 2H) f32  VMEM scratch  recurrent state [fwd | bwd]
# Gate order along each 4H block follows PyTorch: i, f, g, o.
# ----------------------------------------------------------------------------
def bilstm_kernel(*refs, fuse_whh, with_fc):
    if with_fc:
        (x_ref, wih_ref, whh_ref, b_ref, fcw_ref, fcb_ref,
         out_ref, hn_ref, logit_ref, gx_ref, h_ref, c_ref) = refs
    else:
        (x_ref, wih_ref, whh_ref, b_ref,
         out_ref, hn_ref, gx_ref, h_ref, c_ref) = refs
        fcw_ref = fcb_ref = logit_ref = None

    S, TB, In = x_ref.shape
    H = out_ref.shape[2] // 2
    G = 4 * H            # per-direction gate width
    G2 = 8 * H           # both directions

    # ---- Phase 1: hoisted input projection for all timesteps, chunked over seq ----
    wih = wih_ref[...]                       # hoisted load (bf16)
    bias = b_ref[...]                        # (1, 8H) f32
    SC = max(1, min(S, 512 // max(TB, 1)))   # ~512 matmul rows per chunk
    for s0 in range(0, S, SC):               # static chunk loop (bounded live ranges)
        sc = min(SC, S - s0)
        xc = x_ref[pl.ds(s0, sc)].reshape(sc * TB, In)
        gc = jnp.dot(xc, wih, preferred_element_type=jnp.float32) + bias
        gx_ref[pl.ds(s0, sc)] = gc.reshape(sc, TB, G2).astype(gx_ref.dtype)

    # ---- Phase 2: fused fwd + bwd recurrence ----
    h_ref[...] = jnp.zeros_like(h_ref)
    c_ref[...] = jnp.zeros_like(c_ref)
    if fuse_whh:
        whh = whh_ref[...]                   # (2H, 8H) bf16, hoisted
    else:
        whh_f = whh_ref[0]                   # (H, 4H) bf16, hoisted
        whh_b = whh_ref[1]

    def cell(g, c):
        i = jax.nn.sigmoid(g[:, 0:H])
        f = jax.nn.sigmoid(g[:, H:2 * H])
        gg = jnp.tanh(g[:, 2 * H:3 * H])
        o = jax.nn.sigmoid(g[:, 3 * H:4 * H])
        c_new = f * c + i * gg
        return o * jnp.tanh(c_new), c_new

    def step(t, carry):
        h_prev = h_ref[...]
        if fuse_whh:
            # One wide recurrent matmul for both directions (block-diagonal W_hh).
            gh = jnp.dot(h_prev.astype(jnp.bfloat16), whh,
                         preferred_element_type=jnp.float32)          # (TB, 8H) f32
            gh_f, gh_b = gh[:, :G], gh[:, G:]
        else:
            gh_f = jnp.dot(h_prev[:, :H].astype(jnp.bfloat16), whh_f,
                           preferred_element_type=jnp.float32)
            gh_b = jnp.dot(h_prev[:, H:].astype(jnp.bfloat16), whh_b,
                           preferred_element_type=jnp.float32)

        g_f = gh_f + gx_ref[t, :, :G].astype(jnp.float32)             # fwd @ time t
        g_b = gh_b + gx_ref[S - 1 - t, :, G:].astype(jnp.float32)     # bwd @ time S-1-t

        c_prev = c_ref[...]
        h_f, c_f = cell(g_f, c_prev[:, :H])
        h_b, c_b = cell(g_b, c_prev[:, H:])

        # Direct slice stores (no concatenate temp / XLU shuffle).
        h_ref[:, :H] = h_f
        h_ref[:, H:] = h_b
        c_ref[:, :H] = c_f
        c_ref[:, H:] = c_b
        out_ref[t, :, :H] = h_f.astype(out_ref.dtype)
        out_ref[S - 1 - t, :, H:] = h_b.astype(out_ref.dtype)
        return carry

    # Unroll depth tied to the per-step live-state footprint (vreg budget).
    step_live_bytes = TB * G2 * 4
    if S <= 16:
        unroll = True
    elif step_live_bytes <= 16 * 1024:
        unroll = 8
    elif step_live_bytes <= 64 * 1024:
        unroll = 4
    else:
        unroll = 2
    lax.fori_loop(0, S, step, 0, unroll=unroll)

    # Final hidden state: [h_fwd(T-1) | h_bwd(after full reverse pass)]
    # == torch.cat((hidden[-2], hidden[-1]), dim=1) for this layer.
    hn_ref[...] = h_ref[...]

    if with_fc:
        # Fused classifier head: fc(cat(hidden[-2], hidden[-1])).
        # TODO(synk): output_dim is tiny -> masked partial-lane store; acceptable for the head.
        logit_ref[...] = (
            jnp.dot(h_ref[...].astype(jnp.bfloat16), fcw_ref[...],
                    preferred_element_type=jnp.float32)
            + fcb_ref[...])


# ----------------------------------------------------------------------------
# Wrapper: batch-tiled pallas_call with size/generation-aware VMEM limit.
# ----------------------------------------------------------------------------
def _full_spec(arr):
    nd = arr.ndim
    return pl.BlockSpec(arr.shape, lambda i, _nd=nd: (0,) * _nd)


def _vmem_cap_bytes():
    try:
        return int(pltpu.get_tpu_info().vmem_capacity_bytes)
    except Exception:
        return 128 * 1024 * 1024


def _vmem_limit_bytes(S, TB, In, H, O, with_fc, whh_nbytes):
    bf16, f32 = 2, 4
    G2 = 8 * H
    need = 0
    need += 2 * S * TB * In * bf16                 # x block, double-buffered
    need += 2 * S * TB * 2 * H * bf16              # out_seq block, double-buffered
    need += 2 * TB * 2 * H * f32                   # hn block
    need += S * TB * G2 * bf16                     # gx scratch (bf16)
    need += 2 * TB * 2 * H * f32                   # h + c scratch
    need += 2 * (In * G2 * bf16 + whh_nbytes + G2 * f32)   # weights (buffered)
    if with_fc:
        need += 2 * (2 * H * O * bf16 + O * f32 + TB * O * f32)
    need = int(need * 1.25) + (2 << 20)            # headroom for compiler temporaries
    cap = _vmem_cap_bytes()                        # 128 MiB v5e/v6e, 64 MiB v7x
    return max(16 << 20, min(need, cap - (8 << 20)))


def bilstm_layer(x, w_ih, w_hh, b, fc_w=None, fc_b=None, *, batch_tile):
    """x: (S, B, In) bf16 -> (out_seq (S, B, 2H) bf16, h_n (B, 2H) f32[, logits])."""
    S, B, In = x.shape
    fuse_whh = (w_hh.ndim == 2)
    H = (w_hh.shape[0] // 2) if fuse_whh else w_hh.shape[1]
    TB = batch_tile
    assert B % TB == 0, "batch must be padded to a multiple of the batch tile"
    with_fc = fc_w is not None
    O = fc_w.shape[1] if with_fc else 0

    kernel = functools.partial(bilstm_kernel, fuse_whh=fuse_whh, with_fc=with_fc)

    in_arrays = [x, w_ih, w_hh, b]
    in_specs = [
        pl.BlockSpec((S, TB, In), lambda i: (0, i, 0)),
        _full_spec(w_ih), _full_spec(w_hh), _full_spec(b),
    ]
    out_shape = [
        jax.ShapeDtypeStruct((S, B, 2 * H), jnp.bfloat16),
        jax.ShapeDtypeStruct((B, 2 * H), jnp.float32),
    ]
    out_specs = [
        pl.BlockSpec((S, TB, 2 * H), lambda i: (0, i, 0)),
        pl.BlockSpec((TB, 2 * H), lambda i: (i, 0)),
    ]
    if with_fc:
        in_arrays += [fc_w, fc_b]
        in_specs += [_full_spec(fc_w), _full_spec(fc_b)]
        out_shape.append(jax.ShapeDtypeStruct((B, O), jnp.float32))
        out_specs.append(pl.BlockSpec((TB, O), lambda i: (i, 0)))

    limit = _vmem_limit_bytes(S, TB, In, H, O, with_fc,
                              int(w_hh.size) * w_hh.dtype.itemsize)

    return pl.pallas_call(
        kernel,
        grid=(B // TB,),
        out_shape=tuple(out_shape),
        in_specs=in_specs,
        out_specs=tuple(out_specs),
        scratch_shapes=[
            pltpu.VMEM((S, TB, 8 * H), jnp.bfloat16),   # hoisted input projections
            pltpu.VMEM((TB, 2 * H), jnp.float32),       # h state (fwd | bwd)
            pltpu.VMEM((TB, 2 * H), jnp.float32),       # c state (fwd | bwd)
        ],
        compiler_params=pltpu.CompilerParams(
            dimension_semantics=("parallel",),           # batch tiles are independent
            vmem_limit_bytes=limit),
    )(*in_arrays)


# ----------------------------------------------------------------------------
# Full forward pass (glue in plain JAX, hot paths in the Pallas kernel above).
# ----------------------------------------------------------------------------
def _choose_batch_tile(B):
    B8 = max(8, ((B + 7) // 8) * 8)
    if B8 <= 128:
        return B8, B8
    TB = 128
    return TB, ((B8 + TB - 1) // TB) * TB


def lstm_forward(text, params, num_layers):
    B, S = text.shape
    TB, B_pad = _choose_batch_tile(B)
    # Padded rows use token 0 (assumed a valid embedding row); sliced off at the end.
    text_p = jnp.pad(text, ((0, B_pad - B), (0, 0)))

    # Embedding gather directly in seq-major (S, B_pad, E) order -> no activation transpose.
    embeds = jnp.take(params["embedding"], text_p.T, axis=0).astype(jnp.bfloat16)
    # TODO(synk): dropout (embeddings, inter-layer LSTM, pre-fc) omitted: eval mode -> identity.

    x = embeds
    logits = None
    for l in range(num_layers):
        w_ih, w_hh, b = params["lstm"][l]
        if l == num_layers - 1:
            x, _hn, logits = bilstm_layer(
                x, w_ih, w_hh, b,
                fc_w=params["fc_w"], fc_b=params["fc_b"], batch_tile=TB)
        else:
            x, _hn = bilstm_layer(x, w_ih, w_hh, b, batch_tile=TB)

    return {"output": logits[:B]}


# ----------------------------------------------------------------------------
# Deterministic synthetic parameter initialization (not a checkpoint).
# Weights are stored pre-packed for the fused kernel:
#   w_ih : (in_dim, 8H) bf16  = [W_ih_fwd | W_ih_bwd] stacked on the output axis
#          (for layers > 0, rows [:H] multiply the fwd half, rows [H:] the bwd half)
#   w_hh : (2H, 8H)   bf16  = block-diag(W_hh_fwd, W_hh_bwd)   if 2H <= 128
#          (2, H, 4H) bf16  = stacked per-direction weights     otherwise
#   b    : (1, 8H)    f32   = (b_ih + b_hh) for both directions
# ----------------------------------------------------------------------------
def init_params(key, vocab_size, embed_dim, hidden_dim, num_layers, output_dim):
    keys = iter(jax.random.split(key, 64))

    def u(shape, scale=0.1):
        return jax.random.uniform(next(keys), shape, jnp.float32, -scale, scale)

    H = hidden_dim
    params = {"embedding": u((vocab_size, embed_dim), 0.5), "lstm": []}
    for l in range(num_layers):
        in_dim = embed_dim if l == 0 else 2 * H
        w_ih = u((in_dim, 8 * H)).astype(jnp.bfloat16)
        whh_f = u((H, 4 * H))
        whh_b = u((H, 4 * H))
        if 2 * H <= 128:
            # Fused: one per-step (TB, 2H) @ (2H, 8H) MXU push for both directions.
            w_hh = jnp.zeros((2 * H, 8 * H), jnp.float32)
            w_hh = w_hh.at[:H, :4 * H].set(whh_f).at[H:, 4 * H:].set(whh_b)
        else:
            # Split: two per-step (TB, H) @ (H, 4H) matmuls (no 50%-zero block-diag pushes).
            w_hh = jnp.stack([whh_f, whh_b], axis=0)
        params["lstm"].append((w_ih, w_hh.astype(jnp.bfloat16), u((1, 8 * H))))
    params["fc_w"] = u((2 * H, output_dim)).astype(jnp.bfloat16)
    params["fc_b"] = u((1, output_dim))
    return params


if __name__ == "__main__":
    vocab_size = 50
    embed_dim = 32
    hidden_dim = 32
    num_layers = 2
    output_dim = 4
    batch = 2
    seq = 8

    key = jax.random.PRNGKey(0)
    pkey, tkey = jax.random.split(key)
    params = init_params(pkey, vocab_size, embed_dim, hidden_dim, num_layers, output_dim)
    text = jax.random.randint(tkey, (batch, seq), 0, vocab_size, dtype=jnp.int32)

    fwd = jax.jit(functools.partial(lstm_forward, num_layers=num_layers))
    out = fwd(text, params)
    jax.block_until_ready(out)

    assert out["output"].shape == (batch, output_dim)
    assert out["output"].dtype == jnp.float32
    print("KERNEL_OK")
</pallas_src>

<mosaic_0001>
module attributes {stable_mosaic.version = 11 : i64} {
  func.func @bilstm_kernel(%arg0: i32, %arg1: memref<8x8x32xbf16, #tpu.memory_space<vmem>>, %arg2: memref<32x256xbf16, #tpu.memory_space<vmem>>, %arg3: memref<64x256xbf16, #tpu.memory_space<vmem>>, %arg4: memref<1x256xf32, #tpu.memory_space<vmem>>, %arg5: memref<8x8x64xbf16, #tpu.memory_space<vmem>>, %arg6: memref<8x64xf32, #tpu.memory_space<vmem>>, %arg7: memref<8x8x256xbf16, #tpu.memory_space<vmem>>, %arg8: memref<8x64xf32, #tpu.memory_space<vmem>>, %arg9: memref<8x64xf32, #tpu.memory_space<vmem>>) attributes {dimension_semantics = [#tpu.dimension_semantics<parallel>], iteration_bounds = array<i64: 1>, scalar_prefetch = 0 : i64, scratch_operands = 3 : i64, tpu.core_type = #tpu.core_type<tc>, window_params = [{transform_indices = @transform_0, window_bounds = array<i64: 8, 8, 32>}, {pipeline_mode = #tpu.pipeline_mode<synchronous>, transform_indices = @transform_1, window_bounds = array<i64: 32, 256>}, {pipeline_mode = #tpu.pipeline_mode<synchronous>, transform_indices = @transform_2, window_bounds = array<i64: 64, 256>}, {pipeline_mode = #tpu.pipeline_mode<synchronous>, transform_indices = @transform_3, window_bounds = array<i64: 1, 256>}, {transform_indices = @transform_4, window_bounds = array<i64: 8, 8, 64>}, {transform_indices = @transform_5, window_bounds = array<i64: 8, 64>}]} {
    %c0 = arith.constant 0 : index
    %c0_0 = arith.constant 0 : index
    %0 = vector.load %arg2[%c0, %c0_0] : memref<32x256xbf16, #tpu.memory_space<vmem>>, vector<32x256xbf16>
    %c0_1 = arith.constant 0 : index
    %c0_2 = arith.constant 0 : index
    %1 = vector.load %arg4[%c0_1, %c0_2] : memref<1x256xf32, #tpu.memory_space<vmem>>, vector<1x256xf32>
    %c0_3 = arith.constant 0 : index
    %c0_4 = arith.constant 0 : index
    %c0_5 = arith.constant 0 : index
    %2 = vector.load %arg1[%c0_3, %c0_4, %c0_5] : memref<8x8x32xbf16, #tpu.memory_space<vmem>>, vector<8x8x32xbf16>
    %3 = vector.shape_cast %2 : vector<8x8x32xbf16> to vector<64x32xbf16>
    %cst = arith.constant dense<0.000000e+00> : vector<64x256xf32>
    %4 = tpu.matmul %3, %0, %cst {dimension_numbers = #tpu.dot_dimension_numbers<[1], [0], [0], [1], [0, 0, 1, 1], [], []>} : vector<64x32xbf16>, vector<32x256xbf16>, vector<64x256xf32> -> vector<64x256xf32>
    %5 = vector.broadcast %1 : vector<1x256xf32> to vector<64x256xf32>
    %6 = arith.addf %4, %5 : vector<64x256xf32>
    %7 = vector.shape_cast %6 : vector<64x256xf32> to vector<8x8x256xf32>
    %8 = arith.truncf %7 : vector<8x8x256xf32> to vector<8x8x256xbf16>
    %c0_6 = arith.constant 0 : index
    %c0_7 = arith.constant 0 : index
    %c0_8 = arith.constant 0 : index
    %9 = vector.load %arg7[%c0_6, %c0_7, %c0_8] : memref<8x8x256xbf16, #tpu.memory_space<vmem>>, vector<8x8x256xbf16>
    tpu.vector_store %arg7[%c0_6, %c0_7, %c0_8], %8 {strides = array<i32>} : memref<8x8x256xbf16, #tpu.memory_space<vmem>>, vector<8x8x256xbf16>,
    %cst_9 = arith.constant 0.000000e+00 : f32
    %10 = vector.broadcast %cst_9 : f32 to vector<8x64xf32>
    %c0_10 = arith.constant 0 : index
    %c0_11 = arith.constant 0 : index
    %11 = vector.load %arg8[%c0_10, %c0_11] : memref<8x64xf32, #tpu.memory_space<vmem>>, vector<8x64xf32>
    tpu.vector_store %arg8[%c0_10, %c0_11], %10 {strides = array<i32>} : memref<8x64xf32, #tpu.memory_space<vmem>>, vector<8x64xf32>,
    %cst_12 = arith.constant 0.000000e+00 : f32
    %12 = vector.broadcast %cst_12 : f32 to vector<8x64xf32>
    %c0_13 = arith.constant 0 : index
    %c0_14 = arith.constant 0 : index
    %13 = vector.load %arg9[%c0_13, %c0_14] : memref<8x64xf32, #tpu.memory_space<vmem>>, vector<8x64xf32>
    tpu.vector_store %arg9[%c0_13, %c0_14], %12 {strides = array<i32>} : memref<8x64xf32, #tpu.memory_space<vmem>>, vector<8x64xf32>,
    %c0_15 = arith.constant 0 : index
    %c0_16 = arith.constant 0 : index
    %14 = vector.load %arg3[%c0_15, %c0_16] : memref<64x256xbf16, #tpu.memory_space<vmem>>, vector<64x256xbf16>
    %c0_i32 = arith.constant 0 : i32
    %c0_17 = arith.constant 0 : index
    %c0_18 = arith.constant 0 : index
    %15 = vector.load %arg8[%c0_17, %c0_18] : memref<8x64xf32, #tpu.memory_space<vmem>>, vector<8x64xf32>
    %16 = arith.truncf %15 : vector<8x64xf32> to vector<8x64xbf16>
    %cst_19 = arith.constant dense<0.000000e+00> : vector<8x256xf32>
    %17 = tpu.matmul %16, %14, %cst_19 {dimension_numbers = #tpu.dot_dimension_numbers<[1], [0], [0], [1], [0, 0, 1, 1], [], []>} : vector<8x64xbf16>, vector<64x256xbf16>, vector<8x256xf32> -> vector<8x256xf32>
    %18 = vector.extract_strided_slice %17 {offsets = [0, 0], sizes = [8, 128], strides = [1, 1]} : vector<8x256xf32> to vector<8x128xf32>
    %19 = vector.extract_strided_slice %17 {offsets = [0, 128], sizes = [8, 128], strides = [1, 1]} : vector<8x256xf32> to vector<8x128xf32>
    %20 = arith.index_cast %c0_i32 : i32 to index
    %c0_20 = arith.constant 0 : index
    %c0_21 = arith.constant 0 : index
    %21 = vector.load %arg7[%20, %c0_20, %c0_21] : memref<8x8x256xbf16, #tpu.memory_space<vmem>>, vector<1x8x128xbf16>
    %22 = vector.shape_cast %21 : vector<1x8x128xbf16> to vector<8x128xbf16>
    %23 = arith.extf %22 : vector<8x128xbf16> to vector<8x128xf32>
    %24 = arith.addf %18, %23 : vector<8x128xf32>
    %c7_i32 = arith.constant 7 : i32
    %25 = arith.subi %c7_i32, %c0_i32 : i32
    %26 = arith.index_cast %25 : i32 to index
    %c0_22 = arith.constant 0 : index
    %c128 = arith.constant 128 : index
    %27 = vector.load %arg7[%26, %c0_22, %c128] : memref<8x8x256xbf16, #tpu.memory_space<vmem>>, vector<1x8x128xbf16>
    %28 = vector.shape_cast %27 : vector<1x8x128xbf16> to vector<8x128xbf16>
    %29 = arith.extf %28 : vector<8x128xbf16> to vector<8x128xf32>
    %30 = arith.addf %19, %29 : vector<8x128xf32>
    %c0_23 = arith.constant 0 : index
    %c0_24 = arith.constant 0 : index
    %31 = vector.load %arg9[%c0_23, %c0_24] : memref<8x64xf32, #tpu.memory_space<vmem>>, vector<8x64xf32>
    %32 = vector.extract_strided_slice %31 {offsets = [0, 0], sizes = [8, 32], strides = [1, 1]} : vector<8x64xf32> to vector<8x32xf32>
    %33 = vector.extract_strided_slice %24 {offsets = [0, 0], sizes = [8, 32], strides = [1, 1]} : vector<8x128xf32> to vector<8x32xf32>
    %34 = arith.negf %33 : vector<8x32xf32>
    %35 = math.exp %34 : vector<8x32xf32>
    %cst_25 = arith.constant 1.000000e+00 : f32
    %36 = vector.broadcast %cst_25 : f32 to vector<8x32xf32>
    %37 = arith.addf %36, %35 : vector<8x32xf32>
    %38 = arith.divf %36, %37 : vector<8x32xf32>
    %39 = vector.extract_strided_slice %24 {offsets = [0, 32], sizes = [8, 32], strides = [1, 1]} : vector<8x128xf32> to vector<8x32xf32>
    %40 = arith.negf %39 : vector<8x32xf32>
    %41 = math.exp %40 : vector<8x32xf32>
    %cst_26 = arith.constant 1.000000e+00 : f32
    %42 = vector.broadcast %cst_26 : f32 to vector<8x32xf32>
    %43 = arith.addf %42, %41 : vector<8x32xf32>
    %44 = arith.divf %42, %43 : vector<8x32xf32>
    %45 = vector.extract_strided_slice %24 {offsets = [0, 64], sizes = [8, 32], strides = [1, 1]} : vector<8x128xf32> to vector<8x32xf32>
    %46 = math.tanh %45 : vector<8x32xf32>
    %47 = vector.extract_strided_slice %24 {offsets = [0, 96], sizes = [8, 32], strides = [1, 1]} : vector<8x128xf32> to vector<8x32xf32>
    %48 = arith.negf %47 : vector<8x32xf32>
    %49 = math.exp %48 : vector<8x32xf32>
    %cst_27 = arith.constant 1.000000e+00 : f32
    %50 = vector.broadcast %cst_27 : f32 to vector<8x32xf32>
    %51 = arith.addf %50, %49 : vector<8x32xf32>
    %52 = arith.divf %50, %51 : vector<8x32xf32>
    %53 = arith.mulf %44, %32 : vector<8x32xf32>
    %54 = arith.mulf %38, %46 : vector<8x32xf32>
    %55 = arith.addf %53, %54 : vector<8x32xf32>
    %56 = math.tanh %55 : vector<8x32xf32>
    %57 = arith.mulf %52, %56 : vector<8x32xf32>
    %58 = vector.extract_strided_slice %31 {offsets = [0, 32], sizes = [8, 32], strides = [1, 1]} : vector<8x64xf32> to vector<8x32xf32>
    %59 = vector.extract_strided_slice %30 {offsets = [0, 0], sizes = [8, 32], strides = [1, 1]} : vector<8x128xf32> to vector<8x32xf32>
    %60 = arith.negf %59 : vector<8x32xf32>
    %61 = math.exp %60 : vector<8x32xf32>
    %cst_28 = arith.constant 1.000000e+00 : f32
    %62 = vector.broadcast %cst_28 : f32 to vector<8x32xf32>
    %63 = arith.addf %62, %61 : vector<8x32xf32>
    %64 = arith.divf %62, %63 : vector<8x32xf32>
    %65 = vector.extract_strided_slice %30 {offsets = [0, 32], sizes = [8, 32], strides = [1, 1]} : vector<8x128xf32> to vector<8x32xf32>
    %66 = arith.negf %65 : vector<8x32xf32>
    %67 = math.exp %66 : vector<8x32xf32>
    %cst_29 = arith.constant 1.000000e+00 : f32
    %68 = vector.broadcast %cst_29 : f32 to vector<8x32xf32>
    %69 = arith.addf %68, %67 : vector<8x32xf32>
    %70 = arith.divf %68, %69 : vector<8x32xf32>
    %71 = vector.extract_strided_slice %30 {offsets = [0, 64], sizes = [8, 32], strides = [1, 1]} : vector<8x128xf32> to vector<8x32xf32>
    %72 = math.tanh %71 : vector<8x32xf32>
    %73 = vector.extract_strided_slice %30 {offsets = [0, 96], sizes = [8, 32], strides = [1, 1]} : vector<8x128xf32> to vector<8x32xf32>
    %74 = arith.negf %73 : vector<8x32xf32>
    %75 = math.exp %74 : vector<8x32xf32>
    %cst_30 = arith.constant 1.000000e+00 : f32
    %76 = vector.broadcast %cst_30 : f32 to vector<8x32xf32>
    %77 = arith.addf %76, %75 : vector<8x32xf32>
    %78 = arith.divf %76, %77 : vector<8x32xf32>
    %79 = arith.mulf %70, %58 : vector<8x32xf32>
    %80 = arith.mulf %64, %72 : vector<8x32xf32>
    %81 = arith.addf %79, %80 : vector<8x32xf32>
    %82 = math.tanh %81 : vector<8x32xf32>
    %83 = arith.mulf %78, %82 : vector<8x32xf32>
    %c0_31 = arith.constant 0 : index
    %c0_32 = arith.constant 0 : index
    %84 = vector.load %arg8[%c0_31, %c0_32] : memref<8x64xf32, #tpu.memory_space<vmem>>, vector<8x32xf32>
    tpu.vector_store %arg8[%c0_31, %c0_32], %57 {strides = array<i32>} : memref<8x64xf32, #tpu.memory_space<vmem>>, vector<8x32xf32>,
    %c0_33 = arith.constant 0 : index
    %c32 = arith.constant 32 : index
    %85 = vector.load %arg8[%c0_33, %c32] : memref<8x64xf32, #tpu.memory_space<vmem>>, vector<8x32xf32>
    tpu.vector_store %arg8[%c0_33, %c32], %83 {strides = array<i32>} : memref<8x64xf32, #tpu.memory_space<vmem>>, vector<8x32xf32>,
    %c0_34 = arith.constant 0 : index
    %c0_35 = arith.constant 0 : index
    %86 = vector.load %arg9[%c0_34, %c0_35] : memref<8x64xf32, #tpu.memory_space<vmem>>, vector<8x32xf32>
    tpu.vector_store %arg9[%c0_34, %c0_35], %55 {strides = array<i32>} : memref<8x64xf32, #tpu.memory_space<vmem>>, vector<8x32xf32>,
    %c0_36 = arith.constant 0 : index
    %c32_37 = arith.constant 32 : index
    %87 = vector.load %arg9[%c0_36, %c32_37] : memref<8x64xf32, #tpu.memory_space<vmem>>, vector<8x32xf32>
    tpu.vector_store %arg9[%c0_36, %c32_37], %81 {strides = array<i32>} : memref<8x64xf32, #tpu.memory_space<vmem>>, vector<8x32xf32>,
    %88 = arith.truncf %57 : vector<8x32xf32> to vector<8x32xbf16>
    %89 = arith.index_cast %c0_i32 : i32 to index
    %c0_38 = arith.constant 0 : index
    %c0_39 = arith.constant 0 : index
    %90 = vector.load %arg5[%89, %c0_38, %c0_39] : memref<8x8x64xbf16, #tpu.memory_space<vmem>>, vector<1x8x32xbf16>
    %91 = vector.shape_cast %90 : vector<1x8x32xbf16> to vector<8x32xbf16>
    %92 = vector.shape_cast %88 : vector<8x32xbf16> to vector<1x8x32xbf16>
    tpu.vector_store %arg5[%89, %c0_38, %c0_39], %92 {strides = array<i32>} : memref<8x8x64xbf16, #tpu.memory_space<vmem>>, vector<1x8x32xbf16>,
    %93 = arith.truncf %83 : vector<8x32xf32> to vector<8x32xbf16>
    %c7_i32_40 = arith.constant 7 : i32
    %94 = arith.subi %c7_i32_40, %c0_i32 : i32
    %95 = arith.index_cast %94 : i32 to index
    %c0_41 = arith.constant 0 : index
    %c32_42 = arith.constant 32 : index
    %96 = vector.load %arg5[%95, %c0_41, %c32_42] : memref<8x8x64xbf16, #tpu.memory_space<vmem>>, vector<1x8x32xbf16>
    %97 = vector.shape_cast %96 : vector<1x8x32xbf16> to vector<8x32xbf16>
    %98 = vector.shape_cast %93 : vector<8x32xbf16> to vector<1x8x32xbf16>
    tpu.vector_store %arg5[%95, %c0_41, %c32_42], %98 {strides = array<i32>} : memref<8x8x64xbf16, #tpu.memory_space<vmem>>, vector<1x8x32xbf16>,
    %c1_i32 = arith.constant 1 : i32
    %c0_43 = arith.constant 0 : index
    %c0_44 = arith.constant 0 : index
    %99 = vector.load %arg8[%c0_43, %c0_44] : memref<8x64xf32, #tpu.memory_space<vmem>>, vector<8x64xf32>
    %100 = arith.truncf %99 : vector<8x64xf32> to vector<8x64xbf16>
    %cst_45 = arith.constant dense<0.000000e+00> : vector<8x256xf32>
    %101 = tpu.matmul %100, %14, %cst_45 {dimension_numbers = #tpu.dot_dimension_numbers<[1], [0], [0], [1], [0, 0, 1, 1], [], []>} : vector<8x64xbf16>, vector<64x256xbf16>, vector<8x256xf32> -> vector<8x256xf32>
    %102 = vector.extract_strided_slice %101 {offsets = [0, 0], sizes = [8, 128], strides = [1, 1]} : vector<8x256xf32> to vector<8x128xf32>
    %103 = vector.extract_strided_slice %101 {offsets = [0, 128], sizes = [8, 128], strides = [1, 1]} : vector<8x256xf32> to vector<8x128xf32>
    %104 = arith.index_cast %c1_i32 : i32 to index
    %c0_46 = arith.constant 0 : index
    %c0_47 = arith.constant 0 : index
    %105 = vector.load %arg7[%104, %c0_46, %c0_47] : memref<8x8x256xbf16, #tpu.memory_space<vmem>>, vector<1x8x128xbf16>
    %106 = vector.shape_cast %105 : vector<1x8x128xbf16> to vector<8x128xbf16>
    %107 = arith.extf %106 : vector<8x128xbf16> to vector<8x128xf32>
    %108 = arith.addf %102, %107 : vector<8x128xf32>
    %c7_i32_48 = arith.constant 7 : i32
    %109 = arith.subi %c7_i32_48, %c1_i32 : i32
    %110 = arith.index_cast %109 : i32 to index
    %c0_49 = arith.constant 0 : index
    %c128_50 = arith.constant 128 : index
    %111 = vector.load %arg7[%110, %c0_49, %c128_50] : memref<8x8x256xbf16, #tpu.memory_space<vmem>>, vector<1x8x128xbf16>
    %112 = vector.shape_cast %111 : vector<1x8x128xbf16> to vector<8x128xbf16>
    %113 = arith.extf %112 : vector<8x128xbf16> to vector<8x128xf32>
    %114 = arith.addf %103, %113 : vector<8x128xf32>
    %c0_51 = arith.constant 0 : index
    %c0_52 = arith.constant 0 : index
    %115 = vector.load %arg9[%c0_51, %c0_52] : memref<8x64xf32, #tpu.memory_space<vmem>>, vector<8x64xf32>
    %116 = vector.extract_strided_slice %115 {offsets = [0, 0], sizes = [8, 32], strides = [1, 1]} : vector<8x64xf32> to vector<8x32xf32>
    %117 = vector.extract_strided_slice %108 {offsets = [0, 0], sizes = [8, 32], strides = [1, 1]} : vector<8x128xf32> to vector<8x32xf32>
    %118 = arith.negf %117 : vector<8x32xf32>
    %119 = math.exp %118 : vector<8x32xf32>
    %cst_53 = arith.constant 1.000000e+00 : f32
    %120 = vector.broadcast %cst_53 : f32 to vector<8x32xf32>
    %121 = arith.addf %120, %119 : vector<8x32xf32>
    %122 = arith.divf %120, %121 : vector<8x32xf32>
    %123 = vector.extract_strided_slice %108 {offsets = [0, 32], sizes = [8, 32], strides = [1, 1]} : vector<8x128xf32> to vector<8x32xf32>
    %124 = arith.negf %123 : vector<8x32xf32>
    %125 = math.exp %124 : vector<8x32xf32>
    %cst_54 = arith.constant 1.000000e+00 : f32
    %126 = vector.broadcast %cst_54 : f32 to vector<8x32xf32>
    %127 = arith.addf %126, %125 : vector<8x32xf32>
    %128 = arith.divf %126, %127 : vector<8x32xf32>
    %129 = vector.extract_strided_slice %108 {offsets = [0, 64], sizes = [8, 32], strides = [1, 1]} : vector<8x128xf32> to vector<8x32xf32>
    %130 = math.tanh %129 : vector<8x32xf32>
    %131 = vector.extract_strided_slice %108 {offsets = [0, 96], sizes = [8, 32], strides = [1, 1]} : vector<8x128xf32> to vector<8x32xf32>
    %132 = arith.negf %131 : vector<8x32xf32>
    %133 = math.exp %132 : vector<8x32xf32>
    %cst_55 = arith.constant 1.000000e+00 : f32
    %134 = vector.broadcast %cst_55 : f32 to vector<8x32xf32>
    %135 = arith.addf %134, %133 : vector<8x32xf32>
    %136 = arith.divf %134, %135 : vector<8x32xf32>
    %137 = arith.mulf %128, %116 : vector<8x32xf32>
    %138 = arith.mulf %122, %130 : vector<8x32xf32>
    %139 = arith.addf %137, %138 : vector<8x32xf32>
    %140 = math.tanh %139 : vector<8x32xf32>
    %141 = arith.mulf %136, %140 : vector<8x32xf32>
    %142 = vector.extract_strided_slice %115 {offsets = [0, 32], sizes = [8, 32], strides = [1, 1]} : vector<8x64xf32> to vector<8x32xf32>
    %143 = vector.extract_strided_slice %114 {offsets = [0, 0], sizes = [8, 32], strides = [1, 1]} : vector<8x128xf32> to vector<8x32xf32>
    %144 = arith.negf %143 : vector<8x32xf32>
    %145 = math.exp %144 : vector<8x32xf32>
    %cst_56 = arith.constant 1.000000e+00 : f32
    %146 = vector.broadcast %cst_56 : f32 to vector<8x32xf32>
    %147 = arith.addf %146, %145 : vector<8x32xf32>
    %148 = arith.divf %146, %147 : vector<8x32xf32>
    %149 = vector.extract_strided_slice %114 {offsets = [0, 32], sizes = [8, 32], strides = [1, 1]} : vector<8x128xf32> to vector<8x32xf32>
    %150 = arith.negf %149 : vector<8x32xf32>
    %151 = math.exp %150 : vector<8x32xf32>
    %cst_57 = arith.constant 1.000000e+00 : f32
    %152 = vector.broadcast %cst_57 : f32 to vector<8x32xf32>
    %153 = arith.addf %152, %151 : vector<8x32xf32>
    %154 = arith.divf %152, %153 : vector<8x32xf32>
    %155 = vector.extract_strided_slice %114 {offsets = [0, 64], sizes = [8, 32], strides = [1, 1]} : vector<8x128xf32> to vector<8x32xf32>
    %156 = math.tanh %155 : vector<8x32xf32>
    %157 = vector.extract_strided_slice %114 {offsets = [0, 96], sizes = [8, 32], strides = [1, 1]} : vector<8x128xf32> to vector<8x32xf32>
    %158 = arith.negf %157 : vector<8x32xf32>
    %159 = math.exp %158 : vector<8x32xf32>
    %cst_58 = arith.constant 1.000000e+00 : f32
    %160 = vector.broadcast %cst_58 : f32 to vector<8x32xf32>
    %161 = arith.addf %160, %159 : vector<8x32xf32>
    %162 = arith.divf %160, %161 : vector<8x32xf32>
    %163 = arith.mulf %154, %142 : vector<8x32xf32>
    %164 = arith.mulf %148, %156 : vector<8x32xf32>
    %165 = arith.addf %163, %164 : vector<8x32xf32>
    %166 = math.tanh %165 : vector<8x32xf32>
    %167 = arith.mulf %162, %166 : vector<8x32xf32>
    %c0_59 = arith.constant 0 : index
    %c0_60 = arith.constant 0 : index
    %168 = vector.load %arg8[%c0_59, %c0_60] : memref<8x64xf32, #tpu.memory_space<vmem>>, vector<8x32xf32>
    tpu.vector_store %arg8[%c0_59, %c0_60], %141 {strides = array<i32>} : memref<8x64xf32, #tpu.memory_space<vmem>>, vector<8x32xf32>,
    %c0_61 = arith.constant 0 : index
    %c32_62 = arith.constant 32 : index
    %169 = vector.load %arg8[%c0_61, %c32_62] : memref<8x64xf32, #tpu.memory_space<vmem>>, vector<8x32xf32>
    tpu.vector_store %arg8[%c0_61, %c32_62], %167 {strides = array<i32>} : memref<8x64xf32, #tpu.memory_space<vmem>>, vector<8x32xf32>,
    %c0_63 = arith.constant 0 : index
    %c0_64 = arith.constant 0 : index
    %170 = vector.load %arg9[%c0_63, %c0_64] : memref<8x64xf32, #tpu.memory_space<vmem>>, vector<8x32xf32>
    tpu.vector_store %arg9[%c0_63, %c0_64], %139 {strides = array<i32>} : memref<8x64xf32, #tpu.memory_space<vmem>>, vector<8x32xf32>,
    %c0_65 = arith.constant 0 : index
    %c32_66 = arith.constant 32 : index
    %171 = vector.load %arg9[%c0_65, %c32_66] : memref<8x64xf32, #tpu.memory_space<vmem>>, vector<8x32xf32>
    tpu.vector_store %arg9[%c0_65, %c32_66], %165 {strides = array<i32>} : memref<8x64xf32, #tpu.memory_space<vmem>>, vector<8x32xf32>,
    %172 = arith.truncf %141 : vector<8x32xf32> to vector<8x32xbf16>
    %173 = arith.index_cast %c1_i32 : i32 to index
    %c0_67 = arith.constant 0 : index
    %c0_68 = arith.constant 0 : index
    %174 = vector.load %arg5[%173, %c0_67, %c0_68] : memref<8x8x64xbf16, #tpu.memory_space<vmem>>, vector<1x8x32xbf16>
    %175 = vector.shape_cast %174 : vector<1x8x32xbf16> to vector<8x32xbf16>
    %176 = vector.shape_cast %172 : vector<8x32xbf16> to vector<1x8x32xbf16>
    tpu.vector_store %arg5[%173, %c0_67, %c0_68], %176 {strides = array<i32>} : memref<8x8x64xbf16, #tpu.memory_space<vmem>>, vector<1x8x32xbf16>,
    %177 = arith.truncf %167 : vector<8x32xf32> to vector<8x32xbf16>
    %c7_i32_69 = arith.constant 7 : i32
    %178 = arith.subi %c7_i32_69, %c1_i32 : i32
    %179 = arith.index_cast %178 : i32 to index
    %c0_70 = arith.constant 0 : index
    %c32_71 = arith.constant 32 : index
    %180 = vector.load %arg5[%179, %c0_70, %c32_71] : memref<8x8x64xbf16, #tpu.memory_space<vmem>>, vector<1x8x32xbf16>
    %181 = vector.shape_cast %180 : vector<1x8x32xbf16> to vector<8x32xbf16>
    %182 = vector.shape_cast %177 : vector<8x32xbf16> to vector<1x8x32xbf16>
    tpu.vector_store %arg5[%179, %c0_70, %c32_71], %182 {strides = array<i32>} : memref<8x8x64xbf16, #tpu.memory_space<vmem>>, vector<1x8x32xbf16>,
    %c2_i32 = arith.constant 2 : i32
    %c0_72 = arith.constant 0 : index
    %c0_73 = arith.constant 0 : index
    %183 = vector.load %arg8[%c0_72, %c0_73] : memref<8x64xf32, #tpu.memory_space<vmem>>, vector<8x64xf32>
    %184 = arith.truncf %183 : vector<8x64xf32> to vector<8x64xbf16>
    %cst_74 = arith.constant dense<0.000000e+00> : vector<8x256xf32>
    %185 = tpu.matmul %184, %14, %cst_74 {dimension_numbers = #tpu.dot_dimension_numbers<[1], [0], [0], [1], [0, 0, 1, 1], [], []>} : vector<8x64xbf16>, vector<64x256xbf16>, vector<8x256xf32> -> vector<8x256xf32>
    %186 = vector.extract_strided_slice %185 {offsets = [0, 0], sizes = [8, 128], strides = [1, 1]} : vector<8x256xf32> to vector<8x128xf32>
    %187 = vector.extract_strided_slice %185 {offsets = [0, 128], sizes = [8, 128], strides = [1, 1]} : vector<8x256xf32> to vector<8x128xf32>
    %188 = arith.index_cast %c2_i32 : i32 to index
    %c0_75 = arith.constant 0 : index
    %c0_76 = arith.constant 0 : index
    %189 = vector.load %arg7[%188, %c0_75, %c0_76] : memref<8x8x256xbf16, #tpu.memory_space<vmem>>, vector<1x8x128xbf16>
    %190 = vector.shape_cast %189 : vector<1x8x128xbf16> to vector<8x128xbf16>
    %191 = arith.extf %190 : vector<8x128xbf16> to vector<8x128xf32>
    %192 = arith.addf %186, %191 : vector<8x128xf32>
    %c7_i32_77 = arith.constant 7 : i32
    %193 = arith.subi %c7_i32_77, %c2_i32 : i32
    %194 = arith.index_cast %193 : i32 to index
    %c0_78 = arith.constant 0 : index
    %c128_79 = arith.constant 128 : index
    %195 = vector.load %arg7[%194, %c0_78, %c128_79] : memref<8x8x256xbf16, #tpu.memory_space<vmem>>, vector<1x8x128xbf16>
    %196 = vector.shape_cast %195 : vector<1x8x128xbf16> to vector<8x128xbf16>
    %197 = arith.extf %196 : vector<8x128xbf16> to vector<8x128xf32>
    %198 = arith.addf %187, %197 : vector<8x128xf32>
    %c0_80 = arith.constant 0 : index
    %c0_81 = arith.constant 0 : index
    %199 = vector.load %arg9[%c0_80, %c0_81] : memref<8x64xf32, #tpu.memory_space<vmem>>, vector<8x64xf32>
    %200 = vector.extract_strided_slice %199 {offsets = [0, 0], sizes = [8, 32], strides = [1, 1]} : vector<8x64xf32> to vector<8x32xf32>
    %201 = vector.extract_strided_slice %192 {offsets = [0, 0], sizes = [8, 32], strides = [1, 1]} : vector<8x128xf32> to vector<8x32xf32>
    %202 = arith.negf %201 : vector<8x32xf32>
    %203 = math.exp %202 : vector<8x32xf32>
    %cst_82 = arith.constant 1.000000e+00 : f32
    %204 = vector.broadcast %cst_82 : f32 to vector<8x32xf32>
    %205 = arith.addf %204, %203 : vector<8x32xf32>
    %206 = arith.divf %204, %205 : vector<8x32xf32>
    %207 = vector.extract_strided_slice %192 {offsets = [0, 32], sizes = [8, 32], strides = [1, 1]} : vector<8x128xf32> to vector<8x32xf32>
    %208 = arith.negf %207 : vector<8x32xf32>
    %209 = math.exp %208 : vector<8x32xf32>
    %cst_83 = arith.constant 1.000000e+00 : f32
    %210 = vector.broadcast %cst_83 : f32 to vector<8x32xf32>
    %211 = arith.addf %210, %209 : vector<8x32xf32>
    %212 = arith.divf %210, %211 : vector<8x32xf32>
    %213 = vector.extract_strided_slice %192 {offsets = [0, 64], sizes = [8, 32], strides = [1, 1]} : vector<8x128xf32> to vector<8x32xf32>
    %214 = math.tanh %213 : vector<8x32xf32>
    %215 = vector.extract_strided_slice %192 {offsets = [0, 96], sizes = [8, 32], strides = [1, 1]} : vector<8x128xf32> to vector<8x32xf32>
    %216 = arith.negf %215 : vector<8x32xf32>
    %217 = math.exp %216 : vector<8x32xf32>
    %cst_84 = arith.constant 1.000000e+00 : f32
    %218 = vector.broadcast %cst_84 : f32 to vector<8x32xf32>
    %219 = arith.addf %218, %217 : vector<8x32xf32>
    %220 = arith.divf %218, %219 : vector<8x32xf32>
    %221 = arith.mulf %212, %200 : vector<8x32xf32>
    %222 = arith.mulf %206, %214 : vector<8x32xf32>
    %223 = arith.addf %221, %222 : vector<8x32xf32>
    %224 = math.tanh %223 : vector<8x32xf32>
    %225 = arith.mulf %220, %224 : vector<8x32xf32>
    %226 = vector.extract_strided_slice %199 {offsets = [0, 32], sizes = [8, 32], strides = [1, 1]} : vector<8x64xf32> to vector<8x32xf32>
    %227 = vector.extract_strided_slice %198 {offsets = [0, 0], sizes = [8, 32], strides = [1, 1]} : vector<8x128xf32> to vector<8x32xf32>
    %228 = arith.negf %227 : vector<8x32xf32>
    %229 = math.exp %228 : vector<8x32xf32>
    %cst_85 = arith.constant 1.000000e+00 : f32
    %230 = vector.broadcast %cst_85 : f32 to vector<8x32xf32>
    %231 = arith.addf %230, %229 : vector<8x32xf32>
    %232 = arith.divf %230, %231 : vector<8x32xf32>
    %233 = vector.extract_strided_slice %198 {offsets = [0, 32], sizes = [8, 32], strides = [1, 1]} : vector<8x128xf32> to vector<8x32xf32>
    %234 = arith.negf %233 : vector<8x32xf32>
    %235 = math.exp %234 : vector<8x32xf32>
    %cst_86 = arith.constant 1.000000e+00 : f32
    %236 = vector.broadcast %cst_86 : f32 to vector<8x32xf32>
    %237 = arith.addf %236, %235 : vector<8x32xf32>
    %238 = arith.divf %236, %237 : vector<8x32xf32>
    %239 = vector.extract_strided_slice %198 {offsets = [0, 64], sizes = [8, 32], strides = [1, 1]} : vector<8x128xf32> to vector<8x32xf32>
    %240 = math.tanh %239 : vector<8x32xf32>
    %241 = vector.extract_strided_slice %198 {offsets = [0, 96], sizes = [8, 32], strides = [1, 1]} : vector<8x128xf32> to vector<8x32xf32>
    %242 = arith.negf %241 : vector<8x32xf32>
    %243 = math.exp %242 : vector<8x32xf32>
    %cst_87 = arith.constant 1.000000e+00 : f32
    %244 = vector.broadcast %cst_87 : f32 to vector<8x32xf32>
    %245 = arith.addf %244, %243 : vector<8x32xf32>
    %246 = arith.divf %244, %245 : vector<8x32xf32>
    %247 = arith.mulf %238, %226 : vector<8x32xf32>
    %248 = arith.mulf %232, %240 : vector<8x32xf32>
    %249 = arith.addf %247, %248 : vector<8x32xf32>
    %250 = math.tanh %249 : vector<8x32xf32>
    %251 = arith.mulf %246, %250 : vector<8x32xf32>
    %c0_88 = arith.constant 0 : index
    %c0_89 = arith.constant 0 : index
    %252 = vector.load %arg8[%c0_88, %c0_89] : memref<8x64xf32, #tpu.memory_space<vmem>>, vector<8x32xf32>
    tpu.vector_store %arg8[%c0_88, %c0_89], %225 {strides = array<i32>} : memref<8x64xf32, #tpu.memory_space<vmem>>, vector<8x32xf32>,
    %c0_90 = arith.constant 0 : index
    %c32_91 = arith.constant 32 : index
    %253 = vector.load %arg8[%c0_90, %c32_91] : memref<8x64xf32, #tpu.memory_space<vmem>>, vector<8x32xf32>
    tpu.vector_store %arg8[%c0_90, %c32_91], %251 {strides = array<i32>} : memref<8x64xf32, #tpu.memory_space<vmem>>, vector<8x32xf32>,
    %c0_92 = arith.constant 0 : index
    %c0_93 = arith.constant 0 : index
    %254 = vector.load %arg9[%c0_92, %c0_93] : memref<8x64xf32, #tpu.memory_space<vmem>>, vector<8x32xf32>
    tpu.vector_store %arg9[%c0_92, %c0_93], %223 {strides = array<i32>} : memref<8x64xf32, #tpu.memory_space<vmem>>, vector<8x32xf32>,
    %c0_94 = arith.constant 0 : index
    %c32_95 = arith.constant 32 : index
    %255 = vector.load %arg9[%c0_94, %c32_95] : memref<8x64xf32, #tpu.memory_space<vmem>>, vector<8x32xf32>
    tpu.vector_store %arg9[%c0_94, %c32_95], %249 {strides = array<i32>} : memref<8x64xf32, #tpu.memory_space<vmem>>, vector<8x32xf32>,
    %256 = arith.truncf %225 : vector<8x32xf32> to vector<8x32xbf16>
    %257 = arith.index_cast %c2_i32 : i32 to index
    %c0_96 = arith.constant 0 : index
    %c0_97 = arith.constant 0 : index
    %258 = vector.load %arg5[%257, %c0_96, %c0_97] : memref<8x8x64xbf16, #tpu.memory_space<vmem>>, vector<1x8x32xbf16>
    %259 = vector.shape_cast %258 : vector<1x8x32xbf16> to vector<8x32xbf16>
    %260 = vector.shape_cast %256 : vector<8x32xbf16> to vector<1x8x32xbf16>
    tpu.vector_store %arg5[%257, %c0_96, %c0_97], %260 {strides = array<i32>} : memref<8x8x64xbf16, #tpu.memory_space<vmem>>, vector<1x8x32xbf16>,
    %261 = arith.truncf %251 : vector<8x32xf32> to vector<8x32xbf16>
    %c7_i32_98 = arith.constant 7 : i32
    %262 = arith.subi %c7_i32_98, %c2_i32 : i32
    %263 = arith.index_cast %262 : i32 to index
    %c0_99 = arith.constant 0 : index
    %c32_100 = arith.constant 32 : index
    %264 = vector.load %arg5[%263, %c0_99, %c32_100] : memref<8x8x64xbf16, #tpu.memory_space<vmem>>, vector<1x8x32xbf16>
    %265 = vector.shape_cast %264 : vector<1x8x32xbf16> to vector<8x32xbf16>
    %266 = vector.shape_cast %261 : vector<8x32xbf16> to vector<1x8x32xbf16>
    tpu.vector_store %arg5[%263, %c0_99, %c32_100], %266 {strides = array<i32>} : memref<8x8x64xbf16, #tpu.memory_space<vmem>>, vector<1x8x32xbf16>,
    %c3_i32 = arith.constant 3 : i32
    %c0_101 = arith.constant 0 : index
    %c0_102 = arith.constant 0 : index
    %267 = vector.load %arg8[%c0_101, %c0_102] : memref<8x64xf32, #tpu.memory_space<vmem>>, vector<8x64xf32>
    %268 = arith.truncf %267 : vector<8x64xf32> to vector<8x64xbf16>
    %cst_103 = arith.constant dense<0.000000e+00> : vector<8x256xf32>
    %269 = tpu.matmul %268, %14, %cst_103 {dimension_numbers = #tpu.dot_dimension_numbers<[1], [0], [0], [1], [0, 0, 1, 1], [], []>} : vector<8x64xbf16>, vector<64x256xbf16>, vector<8x256xf32> -> vector<8x256xf32>
    %270 = vector.extract_strided_slice %269 {offsets = [0, 0], sizes = [8, 128], strides = [1, 1]} : vector<8x256xf32> to vector<8x128xf32>
    %271 = vector.extract_strided_slice %269 {offsets = [0, 128], sizes = [8, 128], strides = [1, 1]} : vector<8x256xf32> to vector<8x128xf32>
    %272 = arith.index_cast %c3_i32 : i32 to index
    %c0_104 = arith.constant 0 : index
    %c0_105 = arith.constant 0 : index
    %273 = vector.load %arg7[%272, %c0_104, %c0_105] : memref<8x8x256xbf16, #tpu.memory_space<vmem>>, vector<1x8x128xbf16>
    %274 = vector.shape_cast %273 : vector<1x8x128xbf16> to vector<8x128xbf16>
    %275 = arith.extf %274 : vector<8x128xbf16> to vector<8x128xf32>
    %276 = arith.addf %270, %275 : vector<8x128xf32>
    %c7_i32_106 = arith.constant 7 : i32
    %277 = arith.subi %c7_i32_106, %c3_i32 : i32
    %278 = arith.index_cast %277 : i32 to index
    %c0_107 = arith.constant 0 : index
    %c128_108 = arith.constant 128 : index
    %279 = vector.load %arg7[%278, %c0_107, %c128_108] : memref<8x8x256xbf16, #tpu.memory_space<vmem>>, vector<1x8x128xbf16>
    %280 = vector.shape_cast %279 : vector<1x8x128xbf16> to vector<8x128xbf16>
    %281 = arith.extf %280 : vector<8x128xbf16> to vector<8x128xf32>
    %282 = arith.addf %271, %281 : vector<8x128xf32>
    %c0_109 = arith.constant 0 : index
    %c0_110 = arith.constant 0 : index
    %283 = vector.load %arg9[%c0_109, %c0_110] : memref<8x64xf32, #tpu.memory_space<vmem>>, vector<8x64xf32>
    %284 = vector.extract_strided_slice %283 {offsets = [0, 0], sizes = [8, 32], strides = [1, 1]} : vector<8x64xf32> to vector<8x32xf32>
    %285 = vector.extract_strided_slice %276 {offsets = [0, 0], sizes = [8, 32], strides = [1, 1]} : vector<8x128xf32> to vector<8x32xf32>
    %286 = arith.negf %285 : vector<8x32xf32>
    %287 = math.exp %286 : vector<8x32xf32>
    %cst_111 = arith.constant 1.000000e+00 : f32
    %288 = vector.broadcast %cst_111 : f32 to vector<8x32xf32>
    %289 = arith.addf %288, %287 : vector<8x32xf32>
    %290 = arith.divf %288, %289 : vector<8x32xf32>
    %291 = vector.extract_strided_slice %276 {offsets = [0, 32], sizes = [8, 32], strides = [1, 1]} : vector<8x128xf32> to vector<8x32xf32>
    %292 = arith.negf %291 : vector<8x32xf32>
    %293 = math.exp %292 : vector<8x32xf32>
    %cst_112 = arith.constant 1.000000e+00 : f32
    %294 = vector.broadcast %cst_112 : f32 to vector<8x32xf32>
    %295 = arith.addf %294, %293 : vector<8x32xf32>
    %296 = arith.divf %294, %295 : vector<8x32xf32>
    %297 = vector.extract_strided_slice %276 {offsets = [0, 64], sizes = [8, 32], strides = [1, 1]} : vector<8x128xf32> to vector<8x32xf32>
    %298 = math.tanh %297 : vector<8x32xf32>
    %299 = vector.extract_strided_slice %276 {offsets = [0, 96], sizes = [8, 32], strides = [1, 1]} : vector<8x128xf32> to vector<8x32xf32>
    %300 = arith.negf %299 : vector<8x32xf32>
    %301 = math.exp %300 : vector<8x32xf32>
    %cst_113 = arith.constant 1.000000e+00 : f32
    %302 = vector.broadcast %cst_113 : f32 to vector<8x32xf32>
    %303 = arith.addf %302, %301 : vector<8x32xf32>
    %304 = arith.divf %302, %303 : vector<8x32xf32>
    %305 = arith.mulf %296, %284 : vector<8x32xf32>
    %306 = arith.mulf %290, %298 : vector<8x32xf32>
    %307 = arith.addf %305, %306 : vector<8x32xf32>
    %308 = math.tanh %307 : vector<8x32xf32>
    %309 = arith.mulf %304, %308 : vector<8x32xf32>
    %310 = vector.extract_strided_slice %283 {offsets = [0, 32], sizes = [8, 32], strides = [1, 1]} : vector<8x64xf32> to vector<8x32xf32>
    %311 = vector.extract_strided_slice %282 {offsets = [0, 0], sizes = [8, 32], strides = [1, 1]} : vector<8x128xf32> to vector<8x32xf32>
    %312 = arith.negf %311 : vector<8x32xf32>
    %313 = math.exp %312 : vector<8x32xf32>
    %cst_114 = arith.constant 1.000000e+00 : f32
    %314 = vector.broadcast %cst_114 : f32 to vector<8x32xf32>
    %315 = arith.addf %314, %313 : vector<8x32xf32>
    %316 = arith.divf %314, %315 : vector<8x32xf32>
    %317 = vector.extract_strided_slice %282 {offsets = [0, 32], sizes = [8, 32], strides = [1, 1]} : vector<8x128xf32> to vector<8x32xf32>
    %318 = arith.negf %317 : vector<8x32xf32>
    %319 = math.exp %318 : vector<8x32xf32>
    %cst_115 = arith.constant 1.000000e+00 : f32
    %320 = vector.broadcast %cst_115 : f32 to vector<8x32xf32>
    %321 = arith.addf %320, %319 : vector<8x32xf32>
    %322 = arith.divf %320, %321 : vector<8x32xf32>
    %323 = vector.extract_strided_slice %282 {offsets = [0, 64], sizes = [8, 32], strides = [1, 1]} : vector<8x128xf32> to vector<8x32xf32>
    %324 = math.tanh %323 : vector<8x32xf32>
    %325 = vector.extract_strided_slice %282 {offsets = [0, 96], sizes = [8, 32], strides = [1, 1]} : vector<8x128xf32> to vector<8x32xf32>
    %326 = arith.negf %325 : vector<8x32xf32>
    %327 = math.exp %326 : vector<8x32xf32>
    %cst_116 = arith.constant 1.000000e+00 : f32
    %328 = vector.broadcast %cst_116 : f32 to vector<8x32xf32>
    %329 = arith.addf %328, %327 : vector<8x32xf32>
    %330 = arith.divf %328, %329 : vector<8x32xf32>
    %331 = arith.mulf %322, %310 : vector<8x32xf32>
    %332 = arith.mulf %316, %324 : vector<8x32xf32>
    %333 = arith.addf %331, %332 : vector<8x32xf32>
    %334 = math.tanh %333 : vector<8x32xf32>
    %335 = arith.mulf %330, %334 : vector<8x32xf32>
    %c0_117 = arith.constant 0 : index
    %c0_118 = arith.constant 0 : index
    %336 = vector.load %arg8[%c0_117, %c0_118] : memref<8x64xf32, #tpu.memory_space<vmem>>, vector<8x32xf32>
    tpu.vector_store %arg8[%c0_117, %c0_118], %309 {strides = array<i32>} : memref<8x64xf32, #tpu.memory_space<vmem>>, vector<8x32xf32>,
    %c0_119 = arith.constant 0 : index
    %c32_120 = arith.constant 32 : index
    %337 = vector.load %arg8[%c0_119, %c32_120] : memref<8x64xf32, #tpu.memory_space<vmem>>, vector<8x32xf32>
    tpu.vector_store %arg8[%c0_119, %c32_120], %335 {strides = array<i32>} : memref<8x64xf32, #tpu.memory_space<vmem>>, vector<8x32xf32>,
    %c0_121 = arith.constant 0 : index
    %c0_122 = arith.constant 0 : index
    %338 = vector.load %arg9[%c0_121, %c0_122] : memref<8x64xf32, #tpu.memory_space<vmem>>, vector<8x32xf32>
    tpu.vector_store %arg9[%c0_121, %c0_122], %307 {strides = array<i32>} : memref<8x64xf32, #tpu.memory_space<vmem>>, vector<8x32xf32>,
    %c0_123 = arith.constant 0 : index
    %c32_124 = arith.constant 32 : index
    %339 = vector.load %arg9[%c0_123, %c32_124] : memref<8x64xf32, #tpu.memory_space<vmem>>, vector<8x32xf32>
    tpu.vector_store %arg9[%c0_123, %c32_124], %333 {strides = array<i32>} : memref<8x64xf32, #tpu.memory_space<vmem>>, vector<8x32xf32>,
    %340 = arith.truncf %309 : vector<8x32xf32> to vector<8x32xbf16>
    %341 = arith.index_cast %c3_i32 : i32 to index
    %c0_125 = arith.constant 0 : index
    %c0_126 = arith.constant 0 : index
    %342 = vector.load %arg5[%341, %c0_125, %c0_126] : memref<8x8x64xbf16, #tpu.memory_space<vmem>>, vector<1x8x32xbf16>
    %343 = vector.shape_cast %342 : vector<1x8x32xbf16> to vector<8x32xbf16>
    %344 = vector.shape_cast %340 : vector<8x32xbf16> to vector<1x8x32xbf16>
    tpu.vector_store %arg5[%341, %c0_125, %c0_126], %344 {strides = array<i32>} : memref<8x8x64xbf16, #tpu.memory_space<vmem>>, vector<1x8x32xbf16>,
    %345 = arith.truncf %335 : vector<8x32xf32> to vector<8x32xbf16>
    %c7_i32_127 = arith.constant 7 : i32
    %346 = arith.subi %c7_i32_127, %c3_i32 : i32
    %347 = arith.index_cast %346 : i32 to index
    %c0_128 = arith.constant 0 : index
    %c32_129 = arith.constant 32 : index
    %348 = vector.load %arg5[%347, %c0_128, %c32_129] : memref<8x8x64xbf16, #tpu.memory_space<vmem>>, vector<1x8x32xbf16>
    %349 = vector.shape_cast %348 : vector<1x8x32xbf16> to vector<8x32xbf16>
    %350 = vector.shape_cast %345 : vector<8x32xbf16> to vector<1x8x32xbf16>
    tpu.vector_store %arg5[%347, %c0_128, %c32_129], %350 {strides = array<i32>} : memref<8x8x64xbf16, #tpu.memory_space<vmem>>, vector<1x8x32xbf16>,
    %c4_i32 = arith.constant 4 : i32
    %c0_130 = arith.constant 0 : index
    %c0_131 = arith.constant 0 : index
    %351 = vector.load %arg8[%c0_130, %c0_131] : memref<8x64xf32, #tpu.memory_space<vmem>>, vector<8x64xf32>
    %352 = arith.truncf %351 : vector<8x64xf32> to vector<8x64xbf16>
    %cst_132 = arith.constant dense<0.000000e+00> : vector<8x256xf32>
    %353 = tpu.matmul %352, %14, %cst_132 {dimension_numbers = #tpu.dot_dimension_numbers<[1], [0], [0], [1], [0, 0, 1, 1], [], []>} : vector<8x64xbf16>, vector<64x256xbf16>, vector<8x256xf32> -> vector<8x256xf32>
    %354 = vector.extract_strided_slice %353 {offsets = [0, 0], sizes = [8, 128], strides = [1, 1]} : vector<8x256xf32> to vector<8x128xf32>
    %355 = vector.extract_strided_slice %353 {offsets = [0, 128], sizes = [8, 128], strides = [1, 1]} : vector<8x256xf32> to vector<8x128xf32>
    %356 = arith.index_cast %c4_i32 : i32 to index
    %c0_133 = arith.constant 0 : index
    %c0_134 = arith.constant 0 : index
    %357 = vector.load %arg7[%356, %c0_133, %c0_134] : memref<8x8x256xbf16, #tpu.memory_space<vmem>>, vector<1x8x128xbf16>
    %358 = vector.shape_cast %357 : vector<1x8x128xbf16> to vector<8x128xbf16>
    %359 = arith.extf %358 : vector<8x128xbf16> to vector<8x128xf32>
    %360 = arith.addf %354, %359 : vector<8x128xf32>
    %c7_i32_135 = arith.constant 7 : i32
    %361 = arith.subi %c7_i32_135, %c4_i32 : i32
    %362 = arith.index_cast %361 : i32 to index
    %c0_136 = arith.constant 0 : index
    %c128_137 = arith.constant 128 : index
    %363 = vector.load %arg7[%362, %c0_136, %c128_137] : memref<8x8x256xbf16, #tpu.memory_space<vmem>>, vector<1x8x128xbf16>
    %364 = vector.shape_cast %363 : vector<1x8x128xbf16> to vector<8x128xbf16>
    %365 = arith.extf %364 : vector<8x128xbf16> to vector<8x128xf32>
    %366 = arith.addf %355, %365 : vector<8x128xf32>
    %c0_138 = arith.constant 0 : index
    %c0_139 = arith.constant 0 : index
    %367 = vector.load %arg9[%c0_138, %c0_139] : memref<8x64xf32, #tpu.memory_space<vmem>>, vector<8x64xf32>
    %368 = vector.extract_strided_slice %367 {offsets = [0, 0], sizes = [8, 32], strides = [1, 1]} : vector<8x64xf32> to vector<8x32xf32>
    %369 = vector.extract_strided_slice %360 {offsets = [0, 0], sizes = [8, 32], strides = [1, 1]} : vector<8x128xf32> to vector<8x32xf32>
    %370 = arith.negf %369 : vector<8x32xf32>
    %371 = math.exp %370 : vector<8x32xf32>
    %cst_140 = arith.constant 1.000000e+00 : f32
    %372 = vector.broadcast %cst_140 : f32 to vector<8x32xf32>
    %373 = arith.addf %372, %371 : vector<8x32xf32>
    %374 = arith.divf %372, %373 : vector<8x32xf32>
    %375 = vector.extract_strided_slice %360 {offsets = [0, 32], sizes = [8, 32], strides = [1, 1]} : vector<8x128xf32> to vector<8x32xf32>
    %376 = arith.negf %375 : vector<8x32xf32>
    %377 = math.exp %376 : vector<8x32xf32>
    %cst_141 = arith.constant 1.000000e+00 : f32
    %378 = vector.broadcast %cst_141 : f32 to vector<8x32xf32>
    %379 = arith.addf %378, %377 : vector<8x32xf32>
    %380 = arith.divf %378, %379 : vector<8x32xf32>
    %381 = vector.extract_strided_slice %360 {offsets = [0, 64], sizes = [8, 32], strides = [1, 1]} : vector<8x128xf32> to vector<8x32xf32>
    %382 = math.tanh %381 : vector<8x32xf32>
    %383 = vector.extract_strided_slice %360 {offsets = [0, 96], sizes = [8, 32], strides = [1, 1]} : vector<8x128xf32> to vector<8x32xf32>
    %384 = arith.negf %383 : vector<8x32xf32>
    %385 = math.exp %384 : vector<8x32xf32>
    %cst_142 = arith.constant 1.000000e+00 : f32
    %386 = vector.broadcast %cst_142 : f32 to vector<8x32xf32>
    %387 = arith.addf %386, %385 : vector<8x32xf32>
    %388 = arith.divf %386, %387 : vector<8x32xf32>
    %389 = arith.mulf %380, %368 : vector<8x32xf32>
    %390 = arith.mulf %374, %382 : vector<8x32xf32>
    %391 = arith.addf %389, %390 : vector<8x32xf32>
    %392 = math.tanh %391 : vector<8x32xf32>
    %393 = arith.mulf %388, %392 : vector<8x32xf32>
    %394 = vector.extract_strided_slice %367 {offsets = [0, 32], sizes = [8, 32], strides = [1, 1]} : vector<8x64xf32> to vector<8x32xf32>
    %395 = vector.extract_strided_slice %366 {offsets = [0, 0], sizes = [8, 32], strides = [1, 1]} : vector<8x128xf32> to vector<8x32xf32>
    %396 = arith.negf %395 : vector<8x32xf32>
    %397 = math.exp %396 : vector<8x32xf32>
    %cst_143 = arith.constant 1.000000e+00 : f32
    %398 = vector.broadcast %cst_143 : f32 to vector<8x32xf32>
    %399 = arith.addf %398, %397 : vector<8x32xf32>
    %400 = arith.divf %398, %399 : vector<8x32xf32>
    %401 = vector.extract_strided_slice %366 {offsets = [0, 32], sizes = [8, 32], strides = [1, 1]} : vector<8x128xf32> to vector<8x32xf32>
    %402 = arith.negf %401 : vector<8x32xf32>
    %403 = math.exp %402 : vector<8x32xf32>
    %cst_144 = arith.constant 1.000000e+00 : f32
    %404 = vector.broadcast %cst_144 : f32 to vector<8x32xf32>
    %405 = arith.addf %404, %403 : vector<8x32xf32>
    %406 = arith.divf %404, %405 : vector<8x32xf32>
    %407 = vector.extract_strided_slice %366 {offsets = [0, 64], sizes = [8, 32], strides = [1, 1]} : vector<8x128xf32> to vector<8x32xf32>
    %408 = math.tanh %407 : vector<8x32xf32>
    %409 = vector.extract_strided_slice %366 {offsets = [0, 96], sizes = [8, 32], strides = [1, 1]} : vector<8x128xf32> to vector<8x32xf32>
    %410 = arith.negf %409 : vector<8x32xf32>
    %411 = math.exp %410 : vector<8x32xf32>
    %cst_145 = arith.constant 1.000000e+00 : f32
    %412 = vector.broadcast %cst_145 : f32 to vector<8x32xf32>
    %413 = arith.addf %412, %411 : vector<8x32xf32>
    %414 = arith.divf %412, %413 : vector<8x32xf32>
    %415 = arith.mulf %406, %394 : vector<8x32xf32>
    %416 = arith.mulf %400, %408 : vector<8x32xf32>
    %417 = arith.addf %415, %416 : vector<8x32xf32>
    %418 = math.tanh %417 : vector<8x32xf32>
    %419 = arith.mulf %414, %418 : vector<8x32xf32>
    %c0_146 = arith.constant 0 : index
    %c0_147 = arith.constant 0 : index
    %420 = vector.load %arg8[%c0_146, %c0_147] : memref<8x64xf32, #tpu.memory_space<vmem>>, vector<8x32xf32>
    tpu.vector_store %arg8[%c0_146, %c0_147], %393 {strides = array<i32>} : memref<8x64xf32, #tpu.memory_space<vmem>>, vector<8x32xf32>,
    %c0_148 = arith.constant 0 : index
    %c32_149 = arith.constant 32 : index
    %421 = vector.load %arg8[%c0_148, %c32_149] : memref<8x64xf32, #tpu.memory_space<vmem>>, vector<8x32xf32>
    tpu.vector_store %arg8[%c0_148, %c32_149], %419 {strides = array<i32>} : memref<8x64xf32, #tpu.memory_space<vmem>>, vector<8x32xf32>,
    %c0_150 = arith.constant 0 : index
    %c0_151 = arith.constant 0 : index
    %422 = vector.load %arg9[%c0_150, %c0_151] : memref<8x64xf32, #tpu.memory_space<vmem>>, vector<8x32xf32>
    tpu.vector_store %arg9[%c0_150, %c0_151], %391 {strides = array<i32>} : memref<8x64xf32, #tpu.memory_space<vmem>>, vector<8x32xf32>,
    %c0_152 = arith.constant 0 : index
    %c32_153 = arith.constant 32 : index
    %423 = vector.load %arg9[%c0_152, %c32_153] : memref<8x64xf32, #tpu.memory_space<vmem>>, vector<8x32xf32>
    tpu.vector_store %arg9[%c0_152, %c32_153], %417 {strides = array<i32>} : memref<8x64xf32, #tpu.memory_space<vmem>>, vector<8x32xf32>,
    %424 = arith.truncf %393 : vector<8x32xf32> to vector<8x32xbf16>
    %425 = arith.index_cast %c4_i32 : i32 to index
    %c0_154 = arith.constant 0 : index
    %c0_155 = arith.constant 0 : index
    %426 = vector.load %arg5[%425, %c0_154, %c0_155] : memref<8x8x64xbf16, #tpu.memory_space<vmem>>, vector<1x8x32xbf16>
    %427 = vector.shape_cast %426 : vector<1x8x32xbf16> to vector<8x32xbf16>
    %428 = vector.shape_cast %424 : vector<8x32xbf16> to vector<1x8x32xbf16>
    tpu.vector_store %arg5[%425, %c0_154, %c0_155], %428 {strides = array<i32>} : memref<8x8x64xbf16, #tpu.memory_space<vmem>>, vector<1x8x32xbf16>,
    %429 = arith.truncf %419 : vector<8x32xf32> to vector<8x32xbf16>
    %c7_i32_156 = arith.constant 7 : i32
    %430 = arith.subi %c7_i32_156, %c4_i32 : i32
    %431 = arith.index_cast %430 : i32 to index
    %c0_157 = arith.constant 0 : index
    %c32_158 = arith.constant 32 : index
    %432 = vector.load %arg5[%431, %c0_157, %c32_158] : memref<8x8x64xbf16, #tpu.memory_space<vmem>>, vector<1x8x32xbf16>
    %433 = vector.shape_cast %432 : vector<1x8x32xbf16> to vector<8x32xbf16>
    %434 = vector.shape_cast %429 : vector<8x32xbf16> to vector<1x8x32xbf16>
    tpu.vector_store %arg5[%431, %c0_157, %c32_158], %434 {strides = array<i32>} : memref<8x8x64xbf16, #tpu.memory_space<vmem>>, vector<1x8x32xbf16>,
    %c5_i32 = arith.constant 5 : i32
    %c0_159 = arith.constant 0 : index
    %c0_160 = arith.constant 0 : index
    %435 = vector.load %arg8[%c0_159, %c0_160] : memref<8x64xf32, #tpu.memory_space<vmem>>, vector<8x64xf32>
    %436 = arith.truncf %435 : vector<8x64xf32> to vector<8x64xbf16>
    %cst_161 = arith.constant dense<0.000000e+00> : vector<8x256xf32>
    %437 = tpu.matmul %436, %14, %cst_161 {dimension_numbers = #tpu.dot_dimension_numbers<[1], [0], [0], [1], [0, 0, 1, 1], [], []>} : vector<8x64xbf16>, vector<64x256xbf16>, vector<8x256xf32> -> vector<8x256xf32>
    %438 = vector.extract_strided_slice %437 {offsets = [0, 0], sizes = [8, 128], strides = [1, 1]} : vector<8x256xf32> to vector<8x128xf32>
    %439 = vector.extract_strided_slice %437 {offsets = [0, 128], sizes = [8, 128], strides = [1, 1]} : vector<8x256xf32> to vector<8x128xf32>
    %440 = arith.index_cast %c5_i32 : i32 to index
    %c0_162 = arith.constant 0 : index
    %c0_163 = arith.constant 0 : index
    %441 = vector.load %arg7[%440, %c0_162, %c0_163] : memref<8x8x256xbf16, #tpu.memory_space<vmem>>, vector<1x8x128xbf16>
    %442 = vector.shape_cast %441 : vector<1x8x128xbf16> to vector<8x128xbf16>
    %443 = arith.extf %442 : vector<8x128xbf16> to vector<8x128xf32>
    %444 = arith.addf %438, %443 : vector<8x128xf32>
    %c7_i32_164 = arith.constant 7 : i32
    %445 = arith.subi %c7_i32_164, %c5_i32 : i32
    %446 = arith.index_cast %445 : i32 to index
    %c0_165 = arith.constant 0 : index
    %c128_166 = arith.constant 128 : index
    %447 = vector.load %arg7[%446, %c0_165, %c128_166] : memref<8x8x256xbf16, #tpu.memory_space<vmem>>, vector<1x8x128xbf16>
    %448 = vector.shape_cast %447 : vector<1x8x128xbf16> to vector<8x128xbf16>
    %449 = arith.extf %448 : vector<8x128xbf16> to vector<8x128xf32>
    %450 = arith.addf %439, %449 : vector<8x128xf32>
    %c0_167 = arith.constant 0 : index
    %c0_168 = arith.constant 0 : index
    %451 = vector.load %arg9[%c0_167, %c0_168] : memref<8x64xf32, #tpu.memory_space<vmem>>, vector<8x64xf32>
    %452 = vector.extract_strided_slice %451 {offsets = [0, 0], sizes = [8, 32], strides = [1, 1]} : vector<8x64xf32> to vector<8x32xf32>
    %453 = vector.extract_strided_slice %444 {offsets = [0, 0], sizes = [8, 32], strides = [1, 1]} : vector<8x128xf32> to vector<8x32xf32>
    %454 = arith.negf %453 : vector<8x32xf32>
    %455 = math.exp %454 : vector<8x32xf32>
    %cst_169 = arith.constant 1.000000e+00 : f32
    %456 = vector.broadcast %cst_169 : f32 to vector<8x32xf32>
    %457 = arith.addf %456, %455 : vector<8x32xf32>
    %458 = arith.divf %456, %457 : vector<8x32xf32>
    %459 = vector.extract_strided_slice %444 {offsets = [0, 32], sizes = [8, 32], strides = [1, 1]} : vector<8x128xf32> to vector<8x32xf32>
    %460 = arith.negf %459 : vector<8x32xf32>
    %461 = math.exp %460 : vector<8x32xf32>
    %cst_170 = arith.constant 1.000000e+00 : f32
    %462 = vector.broadcast %cst_170 : f32 to vector<8x32xf32>
    %463 = arith.addf %462, %461 : vector<8x32xf32>
    %464 = arith.divf %462, %463 : vector<8x32xf32>
    %465 = vector.extract_strided_slice %444 {offsets = [0, 64], sizes = [8, 32], strides = [1, 1]} : vector<8x128xf32> to vector<8x32xf32>
    %466 = math.tanh %465 : vector<8x32xf32>
    %467 = vector.extract_strided_slice %444 {offsets = [0, 96], sizes = [8, 32], strides = [1, 1]} : vector<8x128xf32> to vector<8x32xf32>
    %468 = arith.negf %467 : vector<8x32xf32>
    %469 = math.exp %468 : vector<8x32xf32>
    %cst_171 = arith.constant 1.000000e+00 : f32
    %470 = vector.broadcast %cst_171 : f32 to vector<8x32xf32>
    %471 = arith.addf %470, %469 : vector<8x32xf32>
    %472 = arith.divf %470, %471 : vector<8x32xf32>
    %473 = arith.mulf %464, %452 : vector<8x32xf32>
    %474 = arith.mulf %458, %466 : vector<8x32xf32>
    %475 = arith.addf %473, %474 : vector<8x32xf32>
    %476 = math.tanh %475 : vector<8x32xf32>
    %477 = arith.mulf %472, %476 : vector<8x32xf32>
    %478 = vector.extract_strided_slice %451 {offsets = [0, 32], sizes = [8, 32], strides = [1, 1]} : vector<8x64xf32> to vector<8x32xf32>
    %479 = vector.extract_strided_slice %450 {offsets = [0, 0], sizes = [8, 32], strides = [1, 1]} : vector<8x128xf32> to vector<8x32xf32>
    %480 = arith.negf %479 : vector<8x32xf32>
    %481 = math.exp %480 : vector<8x32xf32>
    %cst_172 = arith.constant 1.000000e+00 : f32
    %482 = vector.broadcast %cst_172 : f32 to vector<8x32xf32>
    %483 = arith.addf %482, %481 : vector<8x32xf32>
    %484 = arith.divf %482, %483 : vector<8x32xf32>
    %485 = vector.extract_strided_slice %450 {offsets = [0, 32], sizes = [8, 32], strides = [1, 1]} : vector<8x128xf32> to vector<8x32xf32>
    %486 = arith.negf %485 : vector<8x32xf32>
    %487 = math.exp %486 : vector<8x32xf32>
    %cst_173 = arith.constant 1.000000e+00 : f32
    %488 = vector.broadcast %cst_173 : f32 to vector<8x32xf32>
    %489 = arith.addf %488, %487 : vector<8x32xf32>
    %490 = arith.divf %488, %489 : vector<8x32xf32>
    %491 = vector.extract_strided_slice %450 {offsets = [0, 64], sizes = [8, 32], strides = [1, 1]} : vector<8x128xf32> to vector<8x32xf32>
    %492 = math.tanh %491 : vector<8x32xf32>
    %493 = vector.extract_strided_slice %450 {offsets = [0, 96], sizes = [8, 32], strides = [1, 1]} : vector<8x128xf32> to vector<8x32xf32>
    %494 = arith.negf %493 : vector<8x32xf32>
    %495 = math.exp %494 : vector<8x32xf32>
    %cst_174 = arith.constant 1.000000e+00 : f32
    %496 = vector.broadcast %cst_174 : f32 to vector<8x32xf32>
    %497 = arith.addf %496, %495 : vector<8x32xf32>
    %498 = arith.divf %496, %497 : vector<8x32xf32>
    %499 = arith.mulf %490, %478 : vector<8x32xf32>
    %500 = arith.mulf %484, %492 : vector<8x32xf32>
    %501 = arith.addf %499, %500 : vector<8x32xf32>
    %502 = math.tanh %501 : vector<8x32xf32>
    %503 = arith.mulf %498, %502 : vector<8x32xf32>
    %c0_175 = arith.constant 0 : index
    %c0_176 = arith.constant 0 : index
    %504 = vector.load %arg8[%c0_175, %c0_176] : memref<8x64xf32, #tpu.memory_space<vmem>>, vector<8x32xf32>
    tpu.vector_store %arg8[%c0_175, %c0_176], %477 {strides = array<i32>} : memref<8x64xf32, #tpu.memory_space<vmem>>, vector<8x32xf32>,
    %c0_177 = arith.constant 0 : index
    %c32_178 = arith.constant 32 : index
    %505 = vector.load %arg8[%c0_177, %c32_178] : memref<8x64xf32, #tpu.memory_space<vmem>>, vector<8x32xf32>
    tpu.vector_store %arg8[%c0_177, %c32_178], %503 {strides = array<i32>} : memref<8x64xf32, #tpu.memory_space<vmem>>, vector<8x32xf32>,
    %c0_179 = arith.constant 0 : index
    %c0_180 = arith.constant 0 : index
    %506 = vector.load %arg9[%c0_179, %c0_180] : memref<8x64xf32, #tpu.memory_space<vmem>>, vector<8x32xf32>
    tpu.vector_store %arg9[%c0_179, %c0_180], %475 {strides = array<i32>} : memref<8x64xf32, #tpu.memory_space<vmem>>, vector<8x32xf32>,
    %c0_181 = arith.constant 0 : index
    %c32_182 = arith.constant 32 : index
    %507 = vector.load %arg9[%c0_181, %c32_182] : memref<8x64xf32, #tpu.memory_space<vmem>>, vector<8x32xf32>
    tpu.vector_store %arg9[%c0_181, %c32_182], %501 {strides = array<i32>} : memref<8x64xf32, #tpu.memory_space<vmem>>, vector<8x32xf32>,
    %508 = arith.truncf %477 : vector<8x32xf32> to vector<8x32xbf16>
    %509 = arith.index_cast %c5_i32 : i32 to index
    %c0_183 = arith.constant 0 : index
    %c0_184 = arith.constant 0 : index
    %510 = vector.load %arg5[%509, %c0_183, %c0_184] : memref<8x8x64xbf16, #tpu.memory_space<vmem>>, vector<1x8x32xbf16>
    %511 = vector.shape_cast %510 : vector<1x8x32xbf16> to vector<8x32xbf16>
    %512 = vector.shape_cast %508 : vector<8x32xbf16> to vector<1x8x32xbf16>
    tpu.vector_store %arg5[%509, %c0_183, %c0_184], %512 {strides = array<i32>} : memref<8x8x64xbf16, #tpu.memory_space<vmem>>, vector<1x8x32xbf16>,
    %513 = arith.truncf %503 : vector<8x32xf32> to vector<8x32xbf16>
    %c7_i32_185 = arith.constant 7 : i32
    %514 = arith.subi %c7_i32_185, %c5_i32 : i32
    %515 = arith.index_cast %514 : i32 to index
    %c0_186 = arith.constant 0 : index
    %c32_187 = arith.constant 32 : index
    %516 = vector.load %arg5[%515, %c0_186, %c32_187] : memref<8x8x64xbf16, #tpu.memory_space<vmem>>, vector<1x8x32xbf16>
    %517 = vector.shape_cast %516 : vector<1x8x32xbf16> to vector<8x32xbf16>
    %518 = vector.shape_cast %513 : vector<8x32xbf16> to vector<1x8x32xbf16>
    tpu.vector_store %arg5[%515, %c0_186, %c32_187], %518 {strides = array<i32>} : memref<8x8x64xbf16, #tpu.memory_space<vmem>>, vector<1x8x32xbf16>,
    %c6_i32 = arith.constant 6 : i32
    %c0_188 = arith.constant 0 : index
    %c0_189 = arith.constant 0 : index
    %519 = vector.load %arg8[%c0_188, %c0_189] : memref<8x64xf32, #tpu.memory_space<vmem>>, vector<8x64xf32>
    %520 = arith.truncf %519 : vector<8x64xf32> to vector<8x64xbf16>
    %cst_190 = arith.constant dense<0.000000e+00> : vector<8x256xf32>
    %521 = tpu.matmul %520, %14, %cst_190 {dimension_numbers = #tpu.dot_dimension_numbers<[1], [0], [0], [1], [0, 0, 1, 1], [], []>} : vector<8x64xbf16>, vector<64x256xbf16>, vector<8x256xf32> -> vector<8x256xf32>
    %522 = vector.extract_strided_slice %521 {offsets = [0, 0], sizes = [8, 128], strides = [1, 1]} : vector<8x256xf32> to vector<8x128xf32>
    %523 = vector.extract_strided_slice %521 {offsets = [0, 128], sizes = [8, 128], strides = [1, 1]} : vector<8x256xf32> to vector<8x128xf32>
    %524 = arith.index_cast %c6_i32 : i32 to index
    %c0_191 = arith.constant 0 : index
    %c0_192 = arith.constant 0 : index
    %525 = vector.load %arg7[%524, %c0_191, %c0_192] : memref<8x8x256xbf16, #tpu.memory_space<vmem>>, vector<1x8x128xbf16>
    %526 = vector.shape_cast %525 : vector<1x8x128xbf16> to vector<8x128xbf16>
    %527 = arith.extf %526 : vector<8x128xbf16> to vector<8x128xf32>
    %528 = arith.addf %522, %527 : vector<8x128xf32>
    %c7_i32_193 = arith.constant 7 : i32
    %529 = arith.subi %c7_i32_193, %c6_i32 : i32
    %530 = arith.index_cast %529 : i32 to index
    %c0_194 = arith.constant 0 : index
    %c128_195 = arith.constant 128 : index
    %531 = vector.load %arg7[%530, %c0_194, %c128_195] : memref<8x8x256xbf16, #tpu.memory_space<vmem>>, vector<1x8x128xbf16>
    %532 = vector.shape_cast %531 : vector<1x8x128xbf16> to vector<8x128xbf16>
    %533 = arith.extf %532 : vector<8x128xbf16> to vector<8x128xf32>
    %534 = arith.addf %523, %533 : vector<8x128xf32>
    %c0_196 = arith.constant 0 : index
    %c0_197 = arith.constant 0 : index
    %535 = vector.load %arg9[%c0_196, %c0_197] : memref<8x64xf32, #tpu.memory_space<vmem>>, vector<8x64xf32>
    %536 = vector.extract_strided_slice %535 {offsets = [0, 0], sizes = [8, 32], strides = [1, 1]} : vector<8x64xf32> to vector<8x32xf32>
    %537 = vector.extract_strided_slice %528 {offsets = [0, 0], sizes = [8, 32], strides = [1, 1]} : vector<8x128xf32> to vector<8x32xf32>
    %538 = arith.negf %537 : vector<8x32xf32>
    %539 = math.exp %538 : vector<8x32xf32>
    %cst_198 = arith.constant 1.000000e+00 : f32
    %540 = vector.broadcast %cst_198 : f32 to vector<8x32xf32>
    %541 = arith.addf %540, %539 : vector<8x32xf32>
    %542 = arith.divf %540, %541 : vector<8x32xf32>
    %543 = vector.extract_strided_slice %528 {offsets = [0, 32], sizes = [8, 32], strides = [1, 1]} : vector<8x128xf32> to vector<8x32xf32>
    %544 = arith.negf %543 : vector<8x32xf32>
    %545 = math.exp %544 : vector<8x32xf32>
    %cst_199 = arith.constant 1.000000e+00 : f32
    %546 = vector.broadcast %cst_199 : f32 to vector<8x32xf32>
    %547 = arith.addf %546, %545 : vector<8x32xf32>
    %548 = arith.divf %546, %547 : vector<8x32xf32>
    %549 = vector.extract_strided_slice %528 {offsets = [0, 64], sizes = [8, 32], strides = [1, 1]} : vector<8x128xf32> to vector<8x32xf32>
    %550 = math.tanh %549 : vector<8x32xf32>
    %551 = vector.extract_strided_slice %528 {offsets = [0, 96], sizes = [8, 32], strides = [1, 1]} : vector<8x128xf32> to vector<8x32xf32>
    %552 = arith.negf %551 : vector<8x32xf32>
    %553 = math.exp %552 : vector<8x32xf32>
    %cst_200 = arith.constant 1.000000e+00 : f32
    %554 = vector.broadcast %cst_200 : f32 to vector<8x32xf32>
    %555 = arith.addf %554, %553 : vector<8x32xf32>
    %556 = arith.divf %554, %555 : vector<8x32xf32>
    %557 = arith.mulf %548, %536 : vector<8x32xf32>
    %558 = arith.mulf %542, %550 : vector<8x32xf32>
    %559 = arith.addf %557, %558 : vector<8x32xf32>
    %560 = math.tanh %559 : vector<8x32xf32>
    %561 = arith.mulf %556, %560 : vector<8x32xf32>
    %562 = vector.extract_strided_slice %535 {offsets = [0, 32], sizes = [8, 32], strides = [1, 1]} : vector<8x64xf32> to vector<8x32xf32>
    %563 = vector.extract_strided_slice %534 {offsets = [0, 0], sizes = [8, 32], strides = [1, 1]} : vector<8x128xf32> to vector<8x32xf32>
    %564 = arith.negf %563 : vector<8x32xf32>
    %565 = math.exp %564 : vector<8x32xf32>
    %cst_201 = arith.constant 1.000000e+00 : f32
    %566 = vector.broadcast %cst_201 : f32 to vector<8x32xf32>
    %567 = arith.addf %566, %565 : vector<8x32xf32>
    %568 = arith.divf %566, %567 : vector<8x32xf32>
    %569 = vector.extract_strided_slice %534 {offsets = [0, 32], sizes = [8, 32], strides = [1, 1]} : vector<8x128xf32> to vector<8x32xf32>
    %570 = arith.negf %569 : vector<8x32xf32>
    %571 = math.exp %570 : vector<8x32xf32>
    %cst_202 = arith.constant 1.000000e+00 : f32
    %572 = vector.broadcast %cst_202 : f32 to vector<8x32xf32>
    %573 = arith.addf %572, %571 : vector<8x32xf32>
    %574 = arith.divf %572, %573 : vector<8x32xf32>
    %575 = vector.extract_strided_slice %534 {offsets = [0, 64], sizes = [8, 32], strides = [1, 1]} : vector<8x128xf32> to vector<8x32xf32>
    %576 = math.tanh %575 : vector<8x32xf32>
    %577 = vector.extract_strided_slice %534 {offsets = [0, 96], sizes = [8, 32], strides = [1, 1]} : vector<8x128xf32> to vector<8x32xf32>
    %578 = arith.negf %577 : vector<8x32xf32>
    %579 = math.exp %578 : vector<8x32xf32>
    %cst_203 = arith.constant 1.000000e+00 : f32
    %580 = vector.broadcast %cst_203 : f32 to vector<8x32xf32>
    %581 = arith.addf %580, %579 : vector<8x32xf32>
    %582 = arith.divf %580, %581 : vector<8x32xf32>
    %583 = arith.mulf %574, %562 : vector<8x32xf32>
    %584 = arith.mulf %568, %576 : vector<8x32xf32>
    %585 = arith.addf %583, %584 : vector<8x32xf32>
    %586 = math.tanh %585 : vector<8x32xf32>
    %587 = arith.mulf %582, %586 : vector<8x32xf32>
    %c0_204 = arith.constant 0 : index
    %c0_205 = arith.constant 0 : index
    %588 = vector.load %arg8[%c0_204, %c0_205] : memref<8x64xf32, #tpu.memory_space<vmem>>, vector<8x32xf32>
    tpu.vector_store %arg8[%c0_204, %c0_205], %561 {strides = array<i32>} : memref<8x64xf32, #tpu.memory_space<vmem>>, vector<8x32xf32>,
    %c0_206 = arith.constant 0 : index
    %c32_207 = arith.constant 32 : index
    %589 = vector.load %arg8[%c0_206, %c32_207] : memref<8x64xf32, #tpu.memory_space<vmem>>, vector<8x32xf32>
    tpu.vector_store %arg8[%c0_206, %c32_207], %587 {strides = array<i32>} : memref<8x64xf32, #tpu.memory_space<vmem>>, vector<8x32xf32>,
    %c0_208 = arith.constant 0 : index
    %c0_209 = arith.constant 0 : index
    %590 = vector.load %arg9[%c0_208, %c0_209] : memref<8x64xf32, #tpu.memory_space<vmem>>, vector<8x32xf32>
    tpu.vector_store %arg9[%c0_208, %c0_209], %559 {strides = array<i32>} : memref<8x64xf32, #tpu.memory_space<vmem>>, vector<8x32xf32>,
    %c0_210 = arith.constant 0 : index
    %c32_211 = arith.constant 32 : index
    %591 = vector.load %arg9[%c0_210, %c32_211] : memref<8x64xf32, #tpu.memory_space<vmem>>, vector<8x32xf32>
    tpu.vector_store %arg9[%c0_210, %c32_211], %585 {strides = array<i32>} : memref<8x64xf32, #tpu.memory_space<vmem>>, vector<8x32xf32>,
    %592 = arith.truncf %561 : vector<8x32xf32> to vector<8x32xbf16>
    %593 = arith.index_cast %c6_i32 : i32 to index
    %c0_212 = arith.constant 0 : index
    %c0_213 = arith.constant 0 : index
    %594 = vector.load %arg5[%593, %c0_212, %c0_213] : memref<8x8x64xbf16, #tpu.memory_space<vmem>>, vector<1x8x32xbf16>
    %595 = vector.shape_cast %594 : vector<1x8x32xbf16> to vector<8x32xbf16>
    %596 = vector.shape_cast %592 : vector<8x32xbf16> to vector<1x8x32xbf16>
    tpu.vector_store %arg5[%593, %c0_212, %c0_213], %596 {strides = array<i32>} : memref<8x8x64xbf16, #tpu.memory_space<vmem>>, vector<1x8x32xbf16>,
    %597 = arith.truncf %587 : vector<8x32xf32> to vector<8x32xbf16>
    %c7_i32_214 = arith.constant 7 : i32
    %598 = arith.subi %c7_i32_214, %c6_i32 : i32
    %599 = arith.index_cast %598 : i32 to index
    %c0_215 = arith.constant 0 : index
    %c32_216 = arith.constant 32 : index
    %600 = vector.load %arg5[%599, %c0_215, %c32_216] : memref<8x8x64xbf16, #tpu.memory_space<vmem>>, vector<1x8x32xbf16>
    %601 = vector.shape_cast %600 : vector<1x8x32xbf16> to vector<8x32xbf16>
    %602 = vector.shape_cast %597 : vector<8x32xbf16> to vector<1x8x32xbf16>
    tpu.vector_store %arg5[%599, %c0_215, %c32_216], %602 {strides = array<i32>} : memref<8x8x64xbf16, #tpu.memory_space<vmem>>, vector<1x8x32xbf16>,
    %c7_i32_217 = arith.constant 7 : i32
    %c0_218 = arith.constant 0 : index
    %c0_219 = arith.constant 0 : index
    %603 = vector.load %arg8[%c0_218, %c0_219] : memref<8x64xf32, #tpu.memory_space<vmem>>, vector<8x64xf32>
    %604 = arith.truncf %603 : vector<8x64xf32> to vector<8x64xbf16>
    %cst_220 = arith.constant dense<0.000000e+00> : vector<8x256xf32>
    %605 = tpu.matmul %604, %14, %cst_220 {dimension_numbers = #tpu.dot_dimension_numbers<[1], [0], [0], [1], [0, 0, 1, 1], [], []>} : vector<8x64xbf16>, vector<64x256xbf16>, vector<8x256xf32> -> vector<8x256xf32>
    %606 = vector.extract_strided_slice %605 {offsets = [0, 0], sizes = [8, 128], strides = [1, 1]} : vector<8x256xf32> to vector<8x128xf32>
    %607 = vector.extract_strided_slice %605 {offsets = [0, 128], sizes = [8, 128], strides = [1, 1]} : vector<8x256xf32> to vector<8x128xf32>
    %608 = arith.index_cast %c7_i32_217 : i32 to index
    %c0_221 = arith.constant 0 : index
    %c0_222 = arith.constant 0 : index
    %609 = vector.load %arg7[%608, %c0_221, %c0_222] : memref<8x8x256xbf16, #tpu.memory_space<vmem>>, vector<1x8x128xbf16>
    %610 = vector.shape_cast %609 : vector<1x8x128xbf16> to vector<8x128xbf16>
    %611 = arith.extf %610 : vector<8x128xbf16> to vector<8x128xf32>
    %612 = arith.addf %606, %611 : vector<8x128xf32>
    %c7_i32_223 = arith.constant 7 : i32
    %613 = arith.subi %c7_i32_223, %c7_i32_217 : i32
    %614 = arith.index_cast %613 : i32 to index
    %c0_224 = arith.constant 0 : index
    %c128_225 = arith.constant 128 : index
    %615 = vector.load %arg7[%614, %c0_224, %c128_225] : memref<8x8x256xbf16, #tpu.memory_space<vmem>>, vector<1x8x128xbf16>
    %616 = vector.shape_cast %615 : vector<1x8x128xbf16> to vector<8x128xbf16>
    %617 = arith.extf %616 : vector<8x128xbf16> to vector<8x128xf32>
    %618 = arith.addf %607, %617 : vector<8x128xf32>
    %c0_226 = arith.constant 0 : index
    %c0_227 = arith.constant 0 : index
    %619 = vector.load %arg9[%c0_226, %c0_227] : memref<8x64xf32, #tpu.memory_space<vmem>>, vector<8x64xf32>
    %620 = vector.extract_strided_slice %619 {offsets = [0, 0], sizes = [8, 32], strides = [1, 1]} : vector<8x64xf32> to vector<8x32xf32>
    %621 = vector.extract_strided_slice %612 {offsets = [0, 0], sizes = [8, 32], strides = [1, 1]} : vector<8x128xf32> to vector<8x32xf32>
    %622 = arith.negf %621 : vector<8x32xf32>
    %623 = math.exp %622 : vector<8x32xf32>
    %cst_228 = arith.constant 1.000000e+00 : f32
    %624 = vector.broadcast %cst_228 : f32 to vector<8x32xf32>
    %625 = arith.addf %624, %623 : vector<8x32xf32>
    %626 = arith.divf %624, %625 : vector<8x32xf32>
    %627 = vector.extract_strided_slice %612 {offsets = [0, 32], sizes = [8, 32], strides = [1, 1]} : vector<8x128xf32> to vector<8x32xf32>
    %628 = arith.negf %627 : vector<8x32xf32>
    %629 = math.exp %628 : vector<8x32xf32>
    %cst_229 = arith.constant 1.000000e+00 : f32
    %630 = vector.broadcast %cst_229 : f32 to vector<8x32xf32>
    %631 = arith.addf %630, %629 : vector<8x32xf32>
    %632 = arith.divf %630, %631 : vector<8x32xf32>
    %633 = vector.extract_strided_slice %612 {offsets = [0, 64], sizes = [8, 32], strides = [1, 1]} : vector<8x128xf32> to vector<8x32xf32>
    %634 = math.tanh %633 : vector<8x32xf32>
    %635 = vector.extract_strided_slice %612 {offsets = [0, 96], sizes = [8, 32], strides = [1, 1]} : vector<8x128xf32> to vector<8x32xf32>
    %636 = arith.negf %635 : vector<8x32xf32>
    %637 = math.exp %636 : vector<8x32xf32>
    %cst_230 = arith.constant 1.000000e+00 : f32
    %638 = vector.broadcast %cst_230 : f32 to vector<8x32xf32>
    %639 = arith.addf %638, %637 : vector<8x32xf32>
    %640 = arith.divf %638, %639 : vector<8x32xf32>
    %641 = arith.mulf %632, %620 : vector<8x32xf32>
    %642 = arith.mulf %626, %634 : vector<8x32xf32>
    %643 = arith.addf %641, %642 : vector<8x32xf32>
    %644 = math.tanh %643 : vector<8x32xf32>
    %645 = arith.mulf %640, %644 : vector<8x32xf32>
    %646 = vector.extract_strided_slice %619 {offsets = [0, 32], sizes = [8, 32], strides = [1, 1]} : vector<8x64xf32> to vector<8x32xf32>
    %647 = vector.extract_strided_slice %618 {offsets = [0, 0], sizes = [8, 32], strides = [1, 1]} : vector<8x128xf32> to vector<8x32xf32>
    %648 = arith.negf %647 : vector<8x32xf32>
    %649 = math.exp %648 : vector<8x32xf32>
    %cst_231 = arith.constant 1.000000e+00 : f32
    %650 = vector.broadcast %cst_231 : f32 to vector<8x32xf32>
    %651 = arith.addf %650, %649 : vector<8x32xf32>
    %652 = arith.divf %650, %651 : vector<8x32xf32>
    %653 = vector.extract_strided_slice %618 {offsets = [0, 32], sizes = [8, 32], strides = [1, 1]} : vector<8x128xf32> to vector<8x32xf32>
    %654 = arith.negf %653 : vector<8x32xf32>
    %655 = math.exp %654 : vector<8x32xf32>
    %cst_232 = arith.constant 1.000000e+00 : f32
    %656 = vector.broadcast %cst_232 : f32 to vector<8x32xf32>
    %657 = arith.addf %656, %655 : vector<8x32xf32>
    %658 = arith.divf %656, %657 : vector<8x32xf32>
    %659 = vector.extract_strided_slice %618 {offsets = [0, 64], sizes = [8, 32], strides = [1, 1]} : vector<8x128xf32> to vector<8x32xf32>
    %660 = math.tanh %659 : vector<8x32xf32>
    %661 = vector.extract_strided_slice %618 {offsets = [0, 96], sizes = [8, 32], strides = [1, 1]} : vector<8x128xf32> to vector<8x32xf32>
    %662 = arith.negf %661 : vector<8x32xf32>
    %663 = math.exp %662 : vector<8x32xf32>
    %cst_233 = arith.constant 1.000000e+00 : f32
    %664 = vector.broadcast %cst_233 : f32 to vector<8x32xf32>
    %665 = arith.addf %664, %663 : vector<8x32xf32>
    %666 = arith.divf %664, %665 : vector<8x32xf32>
    %667 = arith.mulf %658, %646 : vector<8x32xf32>
    %668 = arith.mulf %652, %660 : vector<8x32xf32>
    %669 = arith.addf %667, %668 : vector<8x32xf32>
    %670 = math.tanh %669 : vector<8x32xf32>
    %671 = arith.mulf %666, %670 : vector<8x32xf32>
    %c0_234 = arith.constant 0 : index
    %c0_235 = arith.constant 0 : index
    %672 = vector.load %arg8[%c0_234, %c0_235] : memref<8x64xf32, #tpu.memory_space<vmem>>, vector<8x32xf32>
    tpu.vector_store %arg8[%c0_234, %c0_235], %645 {strides = array<i32>} : memref<8x64xf32, #tpu.memory_space<vmem>>, vector<8x32xf32>,
    %c0_236 = arith.constant 0 : index
    %c32_237 = arith.constant 32 : index
    %673 = vector.load %arg8[%c0_236, %c32_237] : memref<8x64xf32, #tpu.memory_space<vmem>>, vector<8x32xf32>
    tpu.vector_store %arg8[%c0_236, %c32_237], %671 {strides = array<i32>} : memref<8x64xf32, #tpu.memory_space<vmem>>, vector<8x32xf32>,
    %c0_238 = arith.constant 0 : index
    %c0_239 = arith.constant 0 : index
    %674 = vector.load %arg9[%c0_238, %c0_239] : memref<8x64xf32, #tpu.memory_space<vmem>>, vector<8x32xf32>
    tpu.vector_store %arg9[%c0_238, %c0_239], %643 {strides = array<i32>} : memref<8x64xf32, #tpu.memory_space<vmem>>, vector<8x32xf32>,
    %c0_240 = arith.constant 0 : index
    %c32_241 = arith.constant 32 : index
    %675 = vector.load %arg9[%c0_240, %c32_241] : memref<8x64xf32, #tpu.memory_space<vmem>>, vector<8x32xf32>
    tpu.vector_store %arg9[%c0_240, %c32_241], %669 {strides = array<i32>} : memref<8x64xf32, #tpu.memory_space<vmem>>, vector<8x32xf32>,
    %676 = arith.truncf %645 : vector<8x32xf32> to vector<8x32xbf16>
    %677 = arith.index_cast %c7_i32_217 : i32 to index
    %c0_242 = arith.constant 0 : index
    %c0_243 = arith.constant 0 : index
    %678 = vector.load %arg5[%677, %c0_242, %c0_243] : memref<8x8x64xbf16, #tpu.memory_space<vmem>>, vector<1x8x32xbf16>
    %679 = vector.shape_cast %678 : vector<1x8x32xbf16> to vector<8x32xbf16>
    %680 = vector.shape_cast %676 : vector<8x32xbf16> to vector<1x8x32xbf16>
    tpu.vector_store %arg5[%677, %c0_242, %c0_243], %680 {strides = array<i32>} : memref<8x8x64xbf16, #tpu.memory_space<vmem>>, vector<1x8x32xbf16>,
    %681 = arith.truncf %671 : vector<8x32xf32> to vector<8x32xbf16>
    %c7_i32_244 = arith.constant 7 : i32
    %682 = arith.subi %c7_i32_244, %c7_i32_217 : i32
    %683 = arith.index_cast %682 : i32 to index
    %c0_245 = arith.constant 0 : index
    %c32_246 = arith.constant 32 : index
    %684 = vector.load %arg5[%683, %c0_245, %c32_246] : memref<8x8x64xbf16, #tpu.memory_space<vmem>>, vector<1x8x32xbf16>
    %685 = vector.shape_cast %684 : vector<1x8x32xbf16> to vector<8x32xbf16>
    %686 = vector.shape_cast %681 : vector<8x32xbf16> to vector<1x8x32xbf16>
    tpu.vector_store %arg5[%683, %c0_245, %c32_246], %686 {strides = array<i32>} : memref<8x8x64xbf16, #tpu.memory_space<vmem>>, vector<1x8x32xbf16>,
    %c8_i32 = arith.constant 8 : i32
    %c0_247 = arith.constant 0 : index
    %c0_248 = arith.constant 0 : index
    %687 = vector.load %arg8[%c0_247, %c0_248] : memref<8x64xf32, #tpu.memory_space<vmem>>, vector<8x64xf32>
    %c0_249 = arith.constant 0 : index
    %c0_250 = arith.constant 0 : index
    %688 = vector.load %arg6[%c0_249, %c0_250] : memref<8x64xf32, #tpu.memory_space<vmem>>, vector<8x64xf32>
    tpu.vector_store %arg6[%c0_249, %c0_250], %687 {strides = array<i32>} : memref<8x64xf32, #tpu.memory_space<vmem>>, vector<8x64xf32>,
    return
  }
  func.func @transform_0(%arg0: i32) -> (i32, i32, i32) {
    %c0_i32 = arith.constant 0 : i32
    %c0_i32_0 = arith.constant 0 : i32
    %c0_i32_1 = arith.constant 0 : i32
    return %c0_i32, %arg0, %c0_i32_0 : i32, i32, i32
  }
  func.func @transform_1(%arg0: i32) -> (i32, i32) {
    %c0_i32 = arith.constant 0 : i32
    %c0_i32_0 = arith.constant 0 : i32
    %c0_i32_1 = arith.constant 0 : i32
    return %c0_i32, %c0_i32_0 : i32, i32
  }
  func.func @transform_2(%arg0: i32) -> (i32, i32) {
    %c0_i32 = arith.constant 0 : i32
    %c0_i32_0 = arith.constant 0 : i32
    %c0_i32_1 = arith.constant 0 : i32
    return %c0_i32, %c0_i32_0 : i32, i32
  }
  func.func @transform_3(%arg0: i32) -> (i32, i32) {
    %c0_i32 = arith.constant 0 : i32
    %c0_i32_0 = arith.constant 0 : i32
    %c0_i32_1 = arith.constant 0 : i32
    return %c0_i32, %c0_i32_0 : i32, i32
  }
  func.func @transform_4(%arg0: i32) -> (i32, i32, i32) {
    %c0_i32 = arith.constant 0 : i32
    %c0_i32_0 = arith.constant 0 : i32
    %c0_i32_1 = arith.constant 0 : i32
    return %c0_i32, %arg0, %c0_i32_0 : i32, i32, i32
  }
  func.func @transform_5(%arg0: i32) -> (i32, i32) {
    %c0_i32 = arith.constant 0 : i32
    %c0_i32_0 = arith.constant 0 : i32
    return %arg0, %c0_i32 : i32, i32
  }
}

module attributes {stable_mosaic.version = 11 : i64} {
  func.func @bilstm_kernel(%arg0: i32, %arg1: memref<8x8x64xbf16, #tpu.memory_space<vmem>>, %arg2: memref<64x256xbf16, #tpu.memory_space<vmem>>, %arg3: memref<64x256xbf16, #tpu.memory_space<vmem>>, %arg4: memref<1x256xf32, #tpu.memory_space<vmem>>, %arg5: memref<64x4xbf16, #tpu.memory_space<vmem>>, %arg6: memref<1x4xf32, #tpu.memory_space<vmem>>, %arg7: memref<8x8x64xbf16, #tpu.memory_space<vmem>>, %arg8: memref<8x64xf32, #tpu.memory_space<vmem>>, %arg9: memref<8x4xf32, #tpu.memory_space<vmem>>, %arg10: memref<8x8x256xbf16, #tpu.memory_space<vmem>>, %arg11: memref<8x64xf32, #tpu.memory_space<vmem>>, %arg12: memref<8x64xf32, #tpu.memory_space<vmem>>) attributes {dimension_semantics = [#tpu.dimension_semantics<parallel>], iteration_bounds = array<i64: 1>, scalar_prefetch = 0 : i64, scratch_operands = 3 : i64, tpu.core_type = #tpu.core_type<tc>, window_params = [{transform_indices = @transform_0, window_bounds = array<i64: 8, 8, 64>}, {pipeline_mode = #tpu.pipeline_mode<synchronous>, transform_indices = @transform_1, window_bounds = array<i64: 64, 256>}, {pipeline_mode = #tpu.pipeline_mode<synchronous>, transform_indices = @transform_2, window_bounds = array<i64: 64, 256>}, {pipeline_mode = #tpu.pipeline_mode<synchronous>, transform_indices = @transform_3, window_bounds = array<i64: 1, 256>}, {pipeline_mode = #tpu.pipeline_mode<synchronous>, transform_indices = @transform_4, window_bounds = array<i64: 64, 4>}, {pipeline_mode = #tpu.pipeline_mode<synchronous>, transform_indices = @transform_5, window_bounds = array<i64: 1, 4>}, {transform_indices = @transform_6, window_bounds = array<i64: 8, 8, 64>}, {transform_indices = @transform_7, window_bounds = array<i64: 8, 64>}, {transform_indices = @transform_8, window_bounds = array<i64: 8, 4>}]} {
    %c0 = arith.constant 0 : index
    %c0_0 = arith.constant 0 : index
    %0 = vector.load %arg2[%c0, %c0_0] : memref<64x256xbf16, #tpu.memory_space<vmem>>, vector<64x256xbf16>
    %c0_1 = arith.constant 0 : index
    %c0_2 = arith.constant 0 : index
    %1 = vector.load %arg4[%c0_1, %c0_2] : memref<1x256xf32, #tpu.memory_space<vmem>>, vector<1x256xf32>
    %c0_3 = arith.constant 0 : index
    %c0_4 = arith.constant 0 : index
    %c0_5 = arith.constant 0 : index
    %2 = vector.load %arg1[%c0_3, %c0_4, %c0_5] : memref<8x8x64xbf16, #tpu.memory_space<vmem>>, vector<8x8x64xbf16>
    %3 = vector.shape_cast %2 : vector<8x8x64xbf16> to vector<64x64xbf16>
    %cst = arith.constant dense<0.000000e+00> : vector<64x256xf32>
    %4 = tpu.matmul %3, %0, %cst {dimension_numbers = #tpu.dot_dimension_numbers<[1], [0], [0], [1], [0, 0, 1, 1], [], []>} : vector<64x64xbf16>, vector<64x256xbf16>, vector<64x256xf32> -> vector<64x256xf32>
    %5 = vector.broadcast %1 : vector<1x256xf32> to vector<64x256xf32>
    %6 = arith.addf %4, %5 : vector<64x256xf32>
    %7 = vector.shape_cast %6 : vector<64x256xf32> to vector<8x8x256xf32>
    %8 = arith.truncf %7 : vector<8x8x256xf32> to vector<8x8x256xbf16>
    %c0_6 = arith.constant 0 : index
    %c0_7 = arith.constant 0 : index
    %c0_8 = arith.constant 0 : index
    %9 = vector.load %arg10[%c0_6, %c0_7, %c0_8] : memref<8x8x256xbf16, #tpu.memory_space<vmem>>, vector<8x8x256xbf16>
    tpu.vector_store %arg10[%c0_6, %c0_7, %c0_8], %8 {strides = array<i32>} : memref<8x8x256xbf16, #tpu.memory_space<vmem>>, vector<8x8x256xbf16>,
    %cst_9 = arith.constant 0.000000e+00 : f32
    %10 = vector.broadcast %cst_9 : f32 to vector<8x64xf32>
    %c0_10 = arith.constant 0 : index
    %c0_11 = arith.constant 0 : index
    %11 = vector.load %arg11[%c0_10, %c0_11] : memref<8x64xf32, #tpu.memory_space<vmem>>, vector<8x64xf32>
    tpu.vector_store %arg11[%c0_10, %c0_11], %10 {strides = array<i32>} : memref<8x64xf32, #tpu.memory_space<vmem>>, vector<8x64xf32>,
    %cst_12 = arith.constant 0.000000e+00 : f32
    %12 = vector.broadcast %cst_12 : f32 to vector<8x64xf32>
    %c0_13 = arith.constant 0 : index
    %c0_14 = arith.constant 0 : index
    %13 = vector.load %arg12[%c0_13, %c0_14] : memref<8x64xf32, #tpu.memory_space<vmem>>, vector<8x64xf32>
    tpu.vector_store %arg12[%c0_13, %c0_14], %12 {strides = array<i32>} : memref<8x64xf32, #tpu.memory_space<vmem>>, vector<8x64xf32>,
    %c0_15 = arith.constant 0 : index
    %c0_16 = arith.constant 0 : index
    %14 = vector.load %arg3[%c0_15, %c0_16] : memref<64x256xbf16, #tpu.memory_space<vmem>>, vector<64x256xbf16>
    %c0_i32 = arith.constant 0 : i32
    %c0_17 = arith.constant 0 : index
    %c0_18 = arith.constant 0 : index
    %15 = vector.load %arg11[%c0_17, %c0_18] : memref<8x64xf32, #tpu.memory_space<vmem>>, vector<8x64xf32>
    %16 = arith.truncf %15 : vector<8x64xf32> to vector<8x64xbf16>
    %cst_19 = arith.constant dense<0.000000e+00> : vector<8x256xf32>
    %17 = tpu.matmul %16, %14, %cst_19 {dimension_numbers = #tpu.dot_dimension_numbers<[1], [0], [0], [1], [0, 0, 1, 1], [], []>} : vector<8x64xbf16>, vector<64x256xbf16>, vector<8x256xf32> -> vector<8x256xf32>
    %18 = vector.extract_strided_slice %17 {offsets = [0, 0], sizes = [8, 128], strides = [1, 1]} : vector<8x256xf32> to vector<8x128xf32>
    %19 = vector.extract_strided_slice %17 {offsets = [0, 128], sizes = [8, 128], strides = [1, 1]} : vector<8x256xf32> to vector<8x128xf32>
    %20 = arith.index_cast %c0_i32 : i32 to index
    %c0_20 = arith.constant 0 : index
    %c0_21 = arith.constant 0 : index
    %21 = vector.load %arg10[%20, %c0_20, %c0_21] : memref<8x8x256xbf16, #tpu.memory_space<vmem>>, vector<1x8x128xbf16>
    %22 = vector.shape_cast %21 : vector<1x8x128xbf16> to vector<8x128xbf16>
    %23 = arith.extf %22 : vector<8x128xbf16> to vector<8x128xf32>
    %24 = arith.addf %18, %23 : vector<8x128xf32>
    %c7_i32 = arith.constant 7 : i32
    %25 = arith.subi %c7_i32, %c0_i32 : i32
    %26 = arith.index_cast %25 : i32 to index
    %c0_22 = arith.constant 0 : index
    %c128 = arith.constant 128 : index
    %27 = vector.load %arg10[%26, %c0_22, %c128] : memref<8x8x256xbf16, #tpu.memory_space<vmem>>, vector<1x8x128xbf16>
    %28 = vector.shape_cast %27 : vector<1x8x128xbf16> to vector<8x128xbf16>
    %29 = arith.extf %28 : vector<8x128xbf16> to vector<8x128xf32>
    %30 = arith.addf %19, %29 : vector<8x128xf32>
    %c0_23 = arith.constant 0 : index
    %c0_24 = arith.constant 0 : index
    %31 = vector.load %arg12[%c0_23, %c0_24] : memref<8x64xf32, #tpu.memory_space<vmem>>, vector<8x64xf32>
    %32 = vector.extract_strided_slice %31 {offsets = [0, 0], sizes = [8, 32], strides = [1, 1]} : vector<8x64xf32> to vector<8x32xf32>
    %33 = vector.extract_strided_slice %24 {offsets = [0, 0], sizes = [8, 32], strides = [1, 1]} : vector<8x128xf32> to vector<8x32xf32>
    %34 = arith.negf %33 : vector<8x32xf32>
    %35 = math.exp %34 : vector<8x32xf32>
    %cst_25 = arith.constant 1.000000e+00 : f32
    %36 = vector.broadcast %cst_25 : f32 to vector<8x32xf32>
    %37 = arith.addf %36, %35 : vector<8x32xf32>
    %38 = arith.divf %36, %37 : vector<8x32xf32>
    %39 = vector.extract_strided_slice %24 {offsets = [0, 32], sizes = [8, 32], strides = [1, 1]} : vector<8x128xf32> to vector<8x32xf32>
    %40 = arith.negf %39 : vector<8x32xf32>
    %41 = math.exp %40 : vector<8x32xf32>
    %cst_26 = arith.constant 1.000000e+00 : f32
    %42 = vector.broadcast %cst_26 : f32 to vector<8x32xf32>
    %43 = arith.addf %42, %41 : vector<8x32xf32>
    %44 = arith.divf %42, %43 : vector<8x32xf32>
    %45 = vector.extract_strided_slice %24 {offsets = [0, 64], sizes = [8, 32], strides = [1, 1]} : vector<8x128xf32> to vector<8x32xf32>
    %46 = math.tanh %45 : vector<8x32xf32>
    %47 = vector.extract_strided_slice %24 {offsets = [0, 96], sizes = [8, 32], strides = [1, 1]} : vector<8x128xf32> to vector<8x32xf32>
    %48 = arith.negf %47 : vector<8x32xf32>
    %49 = math.exp %48 : vector<8x32xf32>
    %cst_27 = arith.constant 1.000000e+00 : f32
    %50 = vector.broadcast %cst_27 : f32 to vector<8x32xf32>
    %51 = arith.addf %50, %49 : vector<8x32xf32>
    %52 = arith.divf %50, %51 : vector<8x32xf32>
    %53 = arith.mulf %44, %32 : vector<8x32xf32>
    %54 = arith.mulf %38, %46 : vector<8x32xf32>
    %55 = arith.addf %53, %54 : vector<8x32xf32>
    %56 = math.tanh %55 : vector<8x32xf32>
    %57 = arith.mulf %52, %56 : vector<8x32xf32>
    %58 = vector.extract_strided_slice %31 {offsets = [0, 32], sizes = [8, 32], strides = [1, 1]} : vector<8x64xf32> to vector<8x32xf32>
    %59 = vector.extract_strided_slice %30 {offsets = [0, 0], sizes = [8, 32], strides = [1, 1]} : vector<8x128xf32> to vector<8x32xf32>
    %60 = arith.negf %59 : vector<8x32xf32>
    %61 = math.exp %60 : vector<8x32xf32>
    %cst_28 = arith.constant 1.000000e+00 : f32
    %62 = vector.broadcast %cst_28 : f32 to vector<8x32xf32>
    %63 = arith.addf %62, %61 : vector<8x32xf32>
    %64 = arith.divf %62, %63 : vector<8x32xf32>
    %65 = vector.extract_strided_slice %30 {offsets = [0, 32], sizes = [8, 32], strides = [1, 1]} : vector<8x128xf32> to vector<8x32xf32>
    %66 = arith.negf %65 : vector<8x32xf32>
    %67 = math.exp %66 : vector<8x32xf32>
    %cst_29 = arith.constant 1.000000e+00 : f32
    %68 = vector.broadcast %cst_29 : f32 to vector<8x32xf32>
    %69 = arith.addf %68, %67 : vector<8x32xf32>
    %70 = arith.divf %68, %69 : vector<8x32xf32>
    %71 = vector.extract_strided_slice %30 {offsets = [0, 64], sizes = [8, 32], strides = [1, 1]} : vector<8x128xf32> to vector<8x32xf32>
    %72 = math.tanh %71 : vector<8x32xf32>
    %73 = vector.extract_strided_slice %30 {offsets = [0, 96], sizes = [8, 32], strides = [1, 1]} : vector<8x128xf32> to vector<8x32xf32>
    %74 = arith.negf %73 : vector<8x32xf32>
    %75 = math.exp %74 : vector<8x32xf32>
    %cst_30 = arith.constant 1.000000e+00 : f32
    %76 = vector.broadcast %cst_30 : f32 to vector<8x32xf32>
    %77 = arith.addf %76, %75 : vector<8x32xf32>
    %78 = arith.divf %76, %77 : vector<8x32xf32>
    %79 = arith.mulf %70, %58 : vector<8x32xf32>
    %80 = arith.mulf %64, %72 : vector<8x32xf32>
    %81 = arith.addf %79, %80 : vector<8x32xf32>
    %82 = math.tanh %81 : vector<8x32xf32>
    %83 = arith.mulf %78, %82 : vector<8x32xf32>
    %c0_31 = arith.constant 0 : index
    %c0_32 = arith.constant 0 : index
    %84 = vector.load %arg11[%c0_31, %c0_32] : memref<8x64xf32, #tpu.memory_space<vmem>>, vector<8x32xf32>
    tpu.vector_store %arg11[%c0_31, %c0_32], %57 {strides = array<i32>} : memref<8x64xf32, #tpu.memory_space<vmem>>, vector<8x32xf32>,
    %c0_33 = arith.constant 0 : index
    %c32 = arith.constant 32 : index
    %85 = vector.load %arg11[%c0_33, %c32] : memref<8x64xf32, #tpu.memory_space<vmem>>, vector<8x32xf32>
    tpu.vector_store %arg11[%c0_33, %c32], %83 {strides = array<i32>} : memref<8x64xf32, #tpu.memory_space<vmem>>, vector<8x32xf32>,
    %c0_34 = arith.constant 0 : index
    %c0_35 = arith.constant 0 : index
    %86 = vector.load %arg12[%c0_34, %c0_35] : memref<8x64xf32, #tpu.memory_space<vmem>>, vector<8x32xf32>
    tpu.vector_store %arg12[%c0_34, %c0_35], %55 {strides = array<i32>} : memref<8x64xf32, #tpu.memory_space<vmem>>, vector<8x32xf32>,
    %c0_36 = arith.constant 0 : index
    %c32_37 = arith.constant 32 : index
    %87 = vector.load %arg12[%c0_36, %c32_37] : memref<8x64xf32, #tpu.memory_space<vmem>>, vector<8x32xf32>
    tpu.vector_store %arg12[%c0_36, %c32_37], %81 {strides = array<i32>} : memref<8x64xf32, #tpu.memory_space<vmem>>, vector<8x32xf32>,
    %88 = arith.truncf %57 : vector<8x32xf32> to vector<8x32xbf16>
    %89 = arith.index_cast %c0_i32 : i32 to index
    %c0_38 = arith.constant 0 : index
    %c0_39 = arith.constant 0 : index
    %90 = vector.load %arg7[%89, %c0_38, %c0_39] : memref<8x8x64xbf16, #tpu.memory_space<vmem>>, vector<1x8x32xbf16>
    %91 = vector.shape_cast %90 : vector<1x8x32xbf16> to vector<8x32xbf16>
    %92 = vector.shape_cast %88 : vector<8x32xbf16> to vector<1x8x32xbf16>
    tpu.vector_store %arg7[%89, %c0_38, %c0_39], %92 {strides = array<i32>} : memref<8x8x64xbf16, #tpu.memory_space<vmem>>, vector<1x8x32xbf16>,
    %93 = arith.truncf %83 : vector<8x32xf32> to vector<8x32xbf16>
    %c7_i32_40 = arith.constant 7 : i32
    %94 = arith.subi %c7_i32_40, %c0_i32 : i32
    %95 = arith.index_cast %94 : i32 to index
    %c0_41 = arith.constant 0 : index
    %c32_42 = arith.constant 32 : index
    %96 = vector.load %arg7[%95, %c0_41, %c32_42] : memref<8x8x64xbf16, #tpu.memory_space<vmem>>, vector<1x8x32xbf16>
    %97 = vector.shape_cast %96 : vector<1x8x32xbf16> to vector<8x32xbf16>
    %98 = vector.shape_cast %93 : vector<8x32xbf16> to vector<1x8x32xbf16>
    tpu.vector_store %arg7[%95, %c0_41, %c32_42], %98 {strides = array<i32>} : memref<8x8x64xbf16, #tpu.memory_space<vmem>>, vector<1x8x32xbf16>,
    %c1_i32 = arith.constant 1 : i32
    %c0_43 = arith.constant 0 : index
    %c0_44 = arith.constant 0 : index
    %99 = vector.load %arg11[%c0_43, %c0_44] : memref<8x64xf32, #tpu.memory_space<vmem>>, vector<8x64xf32>
    %100 = arith.truncf %99 : vector<8x64xf32> to vector<8x64xbf16>
    %cst_45 = arith.constant dense<0.000000e+00> : vector<8x256xf32>
    %101 = tpu.matmul %100, %14, %cst_45 {dimension_numbers = #tpu.dot_dimension_numbers<[1], [0], [0], [1], [0, 0, 1, 1], [], []>} : vector<8x64xbf16>, vector<64x256xbf16>, vector<8x256xf32> -> vector<8x256xf32>
    %102 = vector.extract_strided_slice %101 {offsets = [0, 0], sizes = [8, 128], strides = [1, 1]} : vector<8x256xf32> to vector<8x128xf32>
    %103 = vector.extract_strided_slice %101 {offsets = [0, 128], sizes = [8, 128], strides = [1, 1]} : vector<8x256xf32> to vector<8x128xf32>
    %104 = arith.index_cast %c1_i32 : i32 to index
    %c0_46 = arith.constant 0 : index
    %c0_47 = arith.constant 0 : index
    %105 = vector.load %arg10[%104, %c0_46, %c0_47] : memref<8x8x256xbf16, #tpu.memory_space<vmem>>, vector<1x8x128xbf16>
    %106 = vector.shape_cast %105 : vector<1x8x128xbf16> to vector<8x128xbf16>
    %107 = arith.extf %106 : vector<8x128xbf16> to vector<8x128xf32>
    %108 = arith.addf %102, %107 : vector<8x128xf32>
    %c7_i32_48 = arith.constant 7 : i32
    %109 = arith.subi %c7_i32_48, %c1_i32 : i32
    %110 = arith.index_cast %109 : i32 to index
    %c0_49 = arith.constant 0 : index
    %c128_50 = arith.constant 128 : index
    %111 = vector.load %arg10[%110, %c0_49, %c128_50] : memref<8x8x256xbf16, #tpu.memory_space<vmem>>, vector<1x8x128xbf16>
    %112 = vector.shape_cast %111 : vector<1x8x128xbf16> to vector<8x128xbf16>
    %113 = arith.extf %112 : vector<8x128xbf16> to vector<8x128xf32>
    %114 = arith.addf %103, %113 : vector<8x128xf32>
    %c0_51 = arith.constant 0 : index
    %c0_52 = arith.constant 0 : index
    %115 = vector.load %arg12[%c0_51, %c0_52] : memref<8x64xf32, #tpu.memory_space<vmem>>, vector<8x64xf32>
    %116 = vector.extract_strided_slice %115 {offsets = [0, 0], sizes = [8, 32], strides = [1, 1]} : vector<8x64xf32> to vector<8x32xf32>
    %117 = vector.extract_strided_slice %108 {offsets = [0, 0], sizes = [8, 32], strides = [1, 1]} : vector<8x128xf32> to vector<8x32xf32>
    %118 = arith.negf %117 : vector<8x32xf32>
    %119 = math.exp %118 : vector<8x32xf32>
    %cst_53 = arith.constant 1.000000e+00 : f32
    %120 = vector.broadcast %cst_53 : f32 to vector<8x32xf32>
    %121 = arith.addf %120, %119 : vector<8x32xf32>
    %122 = arith.divf %120, %121 : vector<8x32xf32>
    %123 = vector.extract_strided_slice %108 {offsets = [0, 32], sizes = [8, 32], strides = [1, 1]} : vector<8x128xf32> to vector<8x32xf32>
    %124 = arith.negf %123 : vector<8x32xf32>
    %125 = math.exp %124 : vector<8x32xf32>
    %cst_54 = arith.constant 1.000000e+00 : f32
    %126 = vector.broadcast %cst_54 : f32 to vector<8x32xf32>
    %127 = arith.addf %126, %125 : vector<8x32xf32>
    %128 = arith.divf %126, %127 : vector<8x32xf32>
    %129 = vector.extract_strided_slice %108 {offsets = [0, 64], sizes = [8, 32], strides = [1, 1]} : vector<8x128xf32> to vector<8x32xf32>
    %130 = math.tanh %129 : vector<8x32xf32>
    %131 = vector.extract_strided_slice %108 {offsets = [0, 96], sizes = [8, 32], strides = [1, 1]} : vector<8x128xf32> to vector<8x32xf32>
    %132 = arith.negf %131 : vector<8x32xf32>
    %133 = math.exp %132 : vector<8x32xf32>
    %cst_55 = arith.constant 1.000000e+00 : f32
    %134 = vector.broadcast %cst_55 : f32 to vector<8x32xf32>
    %135 = arith.addf %134, %133 : vector<8x32xf32>
    %136 = arith.divf %134, %135 : vector<8x32xf32>
    %137 = arith.mulf %128, %116 : vector<8x32xf32>
    %138 = arith.mulf %122, %130 : vector<8x32xf32>
    %139 = arith.addf %137, %138 : vector<8x32xf32>
    %140 = math.tanh %139 : vector<8x32xf32>
    %141 = arith.mulf %136, %140 : vector<8x32xf32>
    %142 = vector.extract_strided_slice %115 {offsets = [0, 32], sizes = [8, 32], strides = [1, 1]} : vector<8x64xf32> to vector<8x32xf32>
    %143 = vector.extract_strided_slice %114 {offsets = [0, 0], sizes = [8, 32], strides = [1, 1]} : vector<8x128xf32> to vector<8x32xf32>
    %144 = arith.negf %143 : vector<8x32xf32>
    %145 = math.exp %144 : vector<8x32xf32>
    %cst_56 = arith.constant 1.000000e+00 : f32
    %146 = vector.broadcast %cst_56 : f32 to vector<8x32xf32>
    %147 = arith.addf %146, %145 : vector<8x32xf32>
    %148 = arith.divf %146, %147 : vector<8x32xf32>
    %149 = vector.extract_strided_slice %114 {offsets = [0, 32], sizes = [8, 32], strides = [1, 1]} : vector<8x128xf32> to vector<8x32xf32>
    %150 = arith.negf %149 : vector<8x32xf32>
    %151 = math.exp %150 : vector<8x32xf32>
    %cst_57 = arith.constant 1.000000e+00 : f32
    %152 = vector.broadcast %cst_57 : f32 to vector<8x32xf32>
    %153 = arith.addf %152, %151 : vector<8x32xf32>
    %154 = arith.divf %152, %153 : vector<8x32xf32>
    %155 = vector.extract_strided_slice %114 {offsets = [0, 64], sizes = [8, 32], strides = [1, 1]} : vector<8x128xf32> to vector<8x32xf32>
    %156 = math.tanh %155 : vector<8x32xf32>
    %157 = vector.extract_strided_slice %114 {offsets = [0, 96], sizes = [8, 32], strides = [1, 1]} : vector<8x128xf32> to vector<8x32xf32>
    %158 = arith.negf %157 : vector<8x32xf32>
    %159 = math.exp %158 : vector<8x32xf32>
    %cst_58 = arith.constant 1.000000e+00 : f32
    %160 = vector.broadcast %cst_58 : f32 to vector<8x32xf32>
    %161 = arith.addf %160, %159 : vector<8x32xf32>
    %162 = arith.divf %160, %161 : vector<8x32xf32>
    %163 = arith.mulf %154, %142 : vector<8x32xf32>
    %164 = arith.mulf %148, %156 : vector<8x32xf32>
    %165 = arith.addf %163, %164 : vector<8x32xf32>
    %166 = math.tanh %165 : vector<8x32xf32>
    %167 = arith.mulf %162, %166 : vector<8x32xf32>
    %c0_59 = arith.constant 0 : index
    %c0_60 = arith.constant 0 : index
    %168 = vector.load %arg11[%c0_59, %c0_60] : memref<8x64xf32, #tpu.memory_space<vmem>>, vector<8x32xf32>
    tpu.vector_store %arg11[%c0_59, %c0_60], %141 {strides = array<i32>} : memref<8x64xf32, #tpu.memory_space<vmem>>, vector<8x32xf32>,
    %c0_61 = arith.constant 0 : index
    %c32_62 = arith.constant 32 : index
    %169 = vector.load %arg11[%c0_61, %c32_62] : memref<8x64xf32, #tpu.memory_space<vmem>>, vector<8x32xf32>
    tpu.vector_store %arg11[%c0_61, %c32_62], %167 {strides = array<i32>} : memref<8x64xf32, #tpu.memory_space<vmem>>, vector<8x32xf32>,
    %c0_63 = arith.constant 0 : index
    %c0_64 = arith.constant 0 : index
    %170 = vector.load %arg12[%c0_63, %c0_64] : memref<8x64xf32, #tpu.memory_space<vmem>>, vector<8x32xf32>
    tpu.vector_store %arg12[%c0_63, %c0_64], %139 {strides = array<i32>} : memref<8x64xf32, #tpu.memory_space<vmem>>, vector<8x32xf32>,
    %c0_65 = arith.constant 0 : index
    %c32_66 = arith.constant 32 : index
    %171 = vector.load %arg12[%c0_65, %c32_66] : memref<8x64xf32, #tpu.memory_space<vmem>>, vector<8x32xf32>
    tpu.vector_store %arg12[%c0_65, %c32_66], %165 {strides = array<i32>} : memref<8x64xf32, #tpu.memory_space<vmem>>, vector<8x32xf32>,
    %172 = arith.truncf %141 : vector<8x32xf32> to vector<8x32xbf16>
    %173 = arith.index_cast %c1_i32 : i32 to index
    %c0_67 = arith.constant 0 : index
    %c0_68 = arith.constant 0 : index
    %174 = vector.load %arg7[%173, %c0_67, %c0_68] : memref<8x8x64xbf16, #tpu.memory_space<vmem>>, vector<1x8x32xbf16>
    %175 = vector.shape_cast %174 : vector<1x8x32xbf16> to vector<8x32xbf16>
    %176 = vector.shape_cast %172 : vector<8x32xbf16> to vector<1x8x32xbf16>
    tpu.vector_store %arg7[%173, %c0_67, %c0_68], %176 {strides = array<i32>} : memref<8x8x64xbf16, #tpu.memory_space<vmem>>, vector<1x8x32xbf16>,
    %177 = arith.truncf %167 : vector<8x32xf32> to vector<8x32xbf16>
    %c7_i32_69 = arith.constant 7 : i32
    %178 = arith.subi %c7_i32_69, %c1_i32 : i32
    %179 = arith.index_cast %178 : i32 to index
    %c0_70 = arith.constant 0 : index
    %c32_71 = arith.constant 32 : index
    %180 = vector.load %arg7[%179, %c0_70, %c32_71] : memref<8x8x64xbf16, #tpu.memory_space<vmem>>, vector<1x8x32xbf16>
    %181 = vector.shape_cast %180 : vector<1x8x32xbf16> to vector<8x32xbf16>
    %182 = vector.shape_cast %177 : vector<8x32xbf16> to vector<1x8x32xbf16>
    tpu.vector_store %arg7[%179, %c0_70, %c32_71], %182 {strides = array<i32>} : memref<8x8x64xbf16, #tpu.memory_space<vmem>>, vector<1x8x32xbf16>,
    %c2_i32 = arith.constant 2 : i32
    %c0_72 = arith.constant 0 : index
    %c0_73 = arith.constant 0 : index
    %183 = vector.load %arg11[%c0_72, %c0_73] : memref<8x64xf32, #tpu.memory_space<vmem>>, vector<8x64xf32>
    %184 = arith.truncf %183 : vector<8x64xf32> to vector<8x64xbf16>
    %cst_74 = arith.constant dense<0.000000e+00> : vector<8x256xf32>
    %185 = tpu.matmul %184, %14, %cst_74 {dimension_numbers = #tpu.dot_dimension_numbers<[1], [0], [0], [1], [0, 0, 1, 1], [], []>} : vector<8x64xbf16>, vector<64x256xbf16>, vector<8x256xf32> -> vector<8x256xf32>
    %186 = vector.extract_strided_slice %185 {offsets = [0, 0], sizes = [8, 128], strides = [1, 1]} : vector<8x256xf32> to vector<8x128xf32>
    %187 = vector.extract_strided_slice %185 {offsets = [0, 128], sizes = [8, 128], strides = [1, 1]} : vector<8x256xf32> to vector<8x128xf32>
    %188 = arith.index_cast %c2_i32 : i32 to index
    %c0_75 = arith.constant 0 : index
    %c0_76 = arith.constant 0 : index
    %189 = vector.load %arg10[%188, %c0_75, %c0_76] : memref<8x8x256xbf16, #tpu.memory_space<vmem>>, vector<1x8x128xbf16>
    %190 = vector.shape_cast %189 : vector<1x8x128xbf16> to vector<8x128xbf16>
    %191 = arith.extf %190 : vector<8x128xbf16> to vector<8x128xf32>
    %192 = arith.addf %186, %191 : vector<8x128xf32>
    %c7_i32_77 = arith.constant 7 : i32
    %193 = arith.subi %c7_i32_77, %c2_i32 : i32
    %194 = arith.index_cast %193 : i32 to index
    %c0_78 = arith.constant 0 : index
    %c128_79 = arith.constant 128 : index
    %195 = vector.load %arg10[%194, %c0_78, %c128_79] : memref<8x8x256xbf16, #tpu.memory_space<vmem>>, vector<1x8x128xbf16>
    %196 = vector.shape_cast %195 : vector<1x8x128xbf16> to vector<8x128xbf16>
    %197 = arith.extf %196 : vector<8x128xbf16> to vector<8x128xf32>
    %198 = arith.addf %187, %197 : vector<8x128xf32>
    %c0_80 = arith.constant 0 : index
    %c0_81 = arith.constant 0 : index
    %199 = vector.load %arg12[%c0_80, %c0_81] : memref<8x64xf32, #tpu.memory_space<vmem>>, vector<8x64xf32>
    %200 = vector.extract_strided_slice %199 {offsets = [0, 0], sizes = [8, 32], strides = [1, 1]} : vector<8x64xf32> to vector<8x32xf32>
    %201 = vector.extract_strided_slice %192 {offsets = [0, 0], sizes = [8, 32], strides = [1, 1]} : vector<8x128xf32> to vector<8x32xf32>
    %202 = arith.negf %201 : vector<8x32xf32>
    %203 = math.exp %202 : vector<8x32xf32>
    %cst_82 = arith.constant 1.000000e+00 : f32
    %204 = vector.broadcast %cst_82 : f32 to vector<8x32xf32>
    %205 = arith.addf %204, %203 : vector<8x32xf32>
    %206 = arith.divf %204, %205 : vector<8x32xf32>
    %207 = vector.extract_strided_slice %192 {offsets = [0, 32], sizes = [8, 32], strides = [1, 1]} : vector<8x128xf32> to vector<8x32xf32>
    %208 = arith.negf %207 : vector<8x32xf32>
    %209 = math.exp %208 : vector<8x32xf32>
    %cst_83 = arith.constant 1.000000e+00 : f32
    %210 = vector.broadcast %cst_83 : f32 to vector<8x32xf32>
    %211 = arith.addf %210, %209 : vector<8x32xf32>
    %212 = arith.divf %210, %211 : vector<8x32xf32>
    %213 = vector.extract_strided_slice %192 {offsets = [0, 64], sizes = [8, 32], strides = [1, 1]} : vector<8x128xf32> to vector<8x32xf32>
    %214 = math.tanh %213 : vector<8x32xf32>
    %215 = vector.extract_strided_slice %192 {offsets = [0, 96], sizes = [8, 32], strides = [1, 1]} : vector<8x128xf32> to vector<8x32xf32>
    %216 = arith.negf %215 : vector<8x32xf32>
    %217 = math.exp %216 : vector<8x32xf32>
    %cst_84 = arith.constant 1.000000e+00 : f32
    %218 = vector.broadcast %cst_84 : f32 to vector<8x32xf32>
    %219 = arith.addf %218, %217 : vector<8x32xf32>
    %220 = arith.divf %218, %219 : vector<8x32xf32>
    %221 = arith.mulf %212, %200 : vector<8x32xf32>
    %222 = arith.mulf %206, %214 : vector<8x32xf32>
    %223 = arith.addf %221, %222 : vector<8x32xf32>
    %224 = math.tanh %223 : vector<8x32xf32>
    %225 = arith.mulf %220, %224 : vector<8x32xf32>
    %226 = vector.extract_strided_slice %199 {offsets = [0, 32], sizes = [8, 32], strides = [1, 1]} : vector<8x64xf32> to vector<8x32xf32>
    %227 = vector.extract_strided_slice %198 {offsets = [0, 0], sizes = [8, 32], strides = [1, 1]} : vector<8x128xf32> to vector<8x32xf32>
    %228 = arith.negf %227 : vector<8x32xf32>
    %229 = math.exp %228 : vector<8x32xf32>
    %cst_85 = arith.constant 1.000000e+00 : f32
    %230 = vector.broadcast %cst_85 : f32 to vector<8x32xf32>
    %231 = arith.addf %230, %229 : vector<8x32xf32>
    %232 = arith.divf %230, %231 : vector<8x32xf32>
    %233 = vector.extract_strided_slice %198 {offsets = [0, 32], sizes = [8, 32], strides = [1, 1]} : vector<8x128xf32> to vector<8x32xf32>
    %234 = arith.negf %233 : vector<8x32xf32>
    %235 = math.exp %234 : vector<8x32xf32>
    %cst_86 = arith.constant 1.000000e+00 : f32
    %236 = vector.broadcast %cst_86 : f32 to vector<8x32xf32>
    %237 = arith.addf %236, %235 : vector<8x32xf32>
    %238 = arith.divf %236, %237 : vector<8x32xf32>
    %239 = vector.extract_strided_slice %198 {offsets = [0, 64], sizes = [8, 32], strides = [1, 1]} : vector<8x128xf32> to vector<8x32xf32>
    %240 = math.tanh %239 : vector<8x32xf32>
    %241 = vector.extract_strided_slice %198 {offsets = [0, 96], sizes = [8, 32], strides = [1, 1]} : vector<8x128xf32> to vector<8x32xf32>
    %242 = arith.negf %241 : vector<8x32xf32>
    %243 = math.exp %242 : vector<8x32xf32>
    %cst_87 = arith.constant 1.000000e+00 : f32
    %244 = vector.broadcast %cst_87 : f32 to vector<8x32xf32>
    %245 = arith.addf %244, %243 : vector<8x32xf32>
    %246 = arith.divf %244, %245 : vector<8x32xf32>
    %247 = arith.mulf %238, %226 : vector<8x32xf32>
    %248 = arith.mulf %232, %240 : vector<8x32xf32>
    %249 = arith.addf %247, %248 : vector<8x32xf32>
    %250 = math.tanh %249 : vector<8x32xf32>
    %251 = arith.mulf %246, %250 : vector<8x32xf32>
    %c0_88 = arith.constant 0 : index
    %c0_89 = arith.constant 0 : index
    %252 = vector.load %arg11[%c0_88, %c0_89] : memref<8x64xf32, #tpu.memory_space<vmem>>, vector<8x32xf32>
    tpu.vector_store %arg11[%c0_88, %c0_89], %225 {strides = array<i32>} : memref<8x64xf32, #tpu.memory_space<vmem>>, vector<8x32xf32>,
    %c0_90 = arith.constant 0 : index
    %c32_91 = arith.constant 32 : index
    %253 = vector.load %arg11[%c0_90, %c32_91] : memref<8x64xf32, #tpu.memory_space<vmem>>, vector<8x32xf32>
    tpu.vector_store %arg11[%c0_90, %c32_91], %251 {strides = array<i32>} : memref<8x64xf32, #tpu.memory_space<vmem>>, vector<8x32xf32>,
    %c0_92 = arith.constant 0 : index
    %c0_93 = arith.constant 0 : index
    %254 = vector.load %arg12[%c0_92, %c0_93] : memref<8x64xf32, #tpu.memory_space<vmem>>, vector<8x32xf32>
    tpu.vector_store %arg12[%c0_92, %c0_93], %223 {strides = array<i32>} : memref<8x64xf32, #tpu.memory_space<vmem>>, vector<8x32xf32>,
    %c0_94 = arith.constant 0 : index
    %c32_95 = arith.constant 32 : index
    %255 = vector.load %arg12[%c0_94, %c32_95] : memref<8x64xf32, #tpu.memory_space<vmem>>, vector<8x32xf32>
    tpu.vector_store %arg12[%c0_94, %c32_95], %249 {strides = array<i32>} : memref<8x64xf32, #tpu.memory_space<vmem>>, vector<8x32xf32>,
    %256 = arith.truncf %225 : vector<8x32xf32> to vector<8x32xbf16>
    %257 = arith.index_cast %c2_i32 : i32 to index
    %c0_96 = arith.constant 0 : index
    %c0_97 = arith.constant 0 : index
    %258 = vector.load %arg7[%257, %c0_96, %c0_97] : memref<8x8x64xbf16, #tpu.memory_space<vmem>>, vector<1x8x32xbf16>
    %259 = vector.shape_cast %258 : vector<1x8x32xbf16> to vector<8x32xbf16>
    %260 = vector.shape_cast %256 : vector<8x32xbf16> to vector<1x8x32xbf16>
    tpu.vector_store %arg7[%257, %c0_96, %c0_97], %260 {strides = array<i32>} : memref<8x8x64xbf16, #tpu.memory_space<vmem>>, vector<1x8x32xbf16>,
    %261 = arith.truncf %251 : vector<8x32xf32> to vector<8x32xbf16>
    %c7_i32_98 = arith.constant 7 : i32
    %262 = arith.subi %c7_i32_98, %c2_i32 : i32
    %263 = arith.index_cast %262 : i32 to index
    %c0_99 = arith.constant 0 : index
    %c32_100 = arith.constant 32 : index
    %264 = vector.load %arg7[%263, %c0_99, %c32_100] : memref<8x8x64xbf16, #tpu.memory_space<vmem>>, vector<1x8x32xbf16>
    %265 = vector.shape_cast %264 : vector<1x8x32xbf16> to vector<8x32xbf16>
    %266 = vector.shape_cast %261 : vector<8x32xbf16> to vector<1x8x32xbf16>
    tpu.vector_store %arg7[%263, %c0_99, %c32_100], %266 {strides = array<i32>} : memref<8x8x64xbf16, #tpu.memory_space<vmem>>, vector<1x8x32xbf16>,
    %c3_i32 = arith.constant 3 : i32
    %c0_101 = arith.constant 0 : index
    %c0_102 = arith.constant 0 : index
    %267 = vector.load %arg11[%c0_101, %c0_102] : memref<8x64xf32, #tpu.memory_space<vmem>>, vector<8x64xf32>
    %268 = arith.truncf %267 : vector<8x64xf32> to vector<8x64xbf16>
    %cst_103 = arith.constant dense<0.000000e+00> : vector<8x256xf32>
    %269 = tpu.matmul %268, %14, %cst_103 {dimension_numbers = #tpu.dot_dimension_numbers<[1], [0], [0], [1], [0, 0, 1, 1], [], []>} : vector<8x64xbf16>, vector<64x256xbf16>, vector<8x256xf32> -> vector<8x256xf32>
    %270 = vector.extract_strided_slice %269 {offsets = [0, 0], sizes = [8, 128], strides = [1, 1]} : vector<8x256xf32> to vector<8x128xf32>
    %271 = vector.extract_strided_slice %269 {offsets = [0, 128], sizes = [8, 128], strides = [1, 1]} : vector<8x256xf32> to vector<8x128xf32>
    %272 = arith.index_cast %c3_i32 : i32 to index
    %c0_104 = arith.constant 0 : index
    %c0_105 = arith.constant 0 : index
    %273 = vector.load %arg10[%272, %c0_104, %c0_105] : memref<8x8x256xbf16, #tpu.memory_space<vmem>>, vector<1x8x128xbf16>
    %274 = vector.shape_cast %273 : vector<1x8x128xbf16> to vector<8x128xbf16>
    %275 = arith.extf %274 : vector<8x128xbf16> to vector<8x128xf32>
    %276 = arith.addf %270, %275 : vector<8x128xf32>
    %c7_i32_106 = arith.constant 7 : i32
    %277 = arith.subi %c7_i32_106, %c3_i32 : i32
    %278 = arith.index_cast %277 : i32 to index
    %c0_107 = arith.constant 0 : index
    %c128_108 = arith.constant 128 : index
    %279 = vector.load %arg10[%278, %c0_107, %c128_108] : memref<8x8x256xbf16, #tpu.memory_space<vmem>>, vector<1x8x128xbf16>
    %280 = vector.shape_cast %279 : vector<1x8x128xbf16> to vector<8x128xbf16>
    %281 = arith.extf %280 : vector<8x128xbf16> to vector<8x128xf32>
    %282 = arith.addf %271, %281 : vector<8x128xf32>
    %c0_109 = arith.constant 0 : index
    %c0_110 = arith.constant 0 : index
    %283 = vector.load %arg12[%c0_109, %c0_110] : memref<8x64xf32, #tpu.memory_space<vmem>>, vector<8x64xf32>
    %284 = vector.extract_strided_slice %283 {offsets = [0, 0], sizes = [8, 32], strides = [1, 1]} : vector<8x64xf32> to vector<8x32xf32>
    %285 = vector.extract_strided_slice %276 {offsets = [0, 0], sizes = [8, 32], strides = [1, 1]} : vector<8x128xf32> to vector<8x32xf32>
    %286 = arith.negf %285 : vector<8x32xf32>
    %287 = math.exp %286 : vector<8x32xf32>
    %cst_111 = arith.constant 1.000000e+00 : f32
    %288 = vector.broadcast %cst_111 : f32 to vector<8x32xf32>
    %289 = arith.addf %288, %287 : vector<8x32xf32>
    %290 = arith.divf %288, %289 : vector<8x32xf32>
    %291 = vector.extract_strided_slice %276 {offsets = [0, 32], sizes = [8, 32], strides = [1, 1]} : vector<8x128xf32> to vector<8x32xf32>
    %292 = arith.negf %291 : vector<8x32xf32>
    %293 = math.exp %292 : vector<8x32xf32>
    %cst_112 = arith.constant 1.000000e+00 : f32
    %294 = vector.broadcast %cst_112 : f32 to vector<8x32xf32>
    %295 = arith.addf %294, %293 : vector<8x32xf32>
    %296 = arith.divf %294, %295 : vector<8x32xf32>
    %297 = vector.extract_strided_slice %276 {offsets = [0, 64], sizes = [8, 32], strides = [1, 1]} : vector<8x128xf32> to vector<8x32xf32>
    %298 = math.tanh %297 : vector<8x32xf32>
    %299 = vector.extract_strided_slice %276 {offsets = [0, 96], sizes = [8, 32], strides = [1, 1]} : vector<8x128xf32> to vector<8x32xf32>
    %300 = arith.negf %299 : vector<8x32xf32>
    %301 = math.exp %300 : vector<8x32xf32>
    %cst_113 = arith.constant 1.000000e+00 : f32
    %302 = vector.broadcast %cst_113 : f32 to vector<8x32xf32>
    %303 = arith.addf %302, %301 : vector<8x32xf32>
    %304 = arith.divf %302, %303 : vector<8x32xf32>
    %305 = arith.mulf %296, %284 : vector<8x32xf32>
    %306 = arith.mulf %290, %298 : vector<8x32xf32>
    %307 = arith.addf %305, %306 : vector<8x32xf32>
    %308 = math.tanh %307 : vector<8x32xf32>
    %309 = arith.mulf %304, %308 : vector<8x32xf32>
    %310 = vector.extract_strided_slice %283 {offsets = [0, 32], sizes = [8, 32], strides = [1, 1]} : vector<8x64xf32> to vector<8x32xf32>
    %311 = vector.extract_strided_slice %282 {offsets = [0, 0], sizes = [8, 32], strides = [1, 1]} : vector<8x128xf32> to vector<8x32xf32>
    %312 = arith.negf %311 : vector<8x32xf32>
    %313 = math.exp %312 : vector<8x32xf32>
    %cst_114 = arith.constant 1.000000e+00 : f32
    %314 = vector.broadcast %cst_114 : f32 to vector<8x32xf32>
    %315 = arith.addf %314, %313 : vector<8x32xf32>
    %316 = arith.divf %314, %315 : vector<8x32xf32>
    %317 = vector.extract_strided_slice %282 {offsets = [0, 32], sizes = [8, 32], strides = [1, 1]} : vector<8x128xf32> to vector<8x32xf32>
    %318 = arith.negf %317 : vector<8x32xf32>
    %319 = math.exp %318 : vector<8x32xf32>
    %cst_115 = arith.constant 1.000000e+00 : f32
    %320 = vector.broadcast %cst_115 : f32 to vector<8x32xf32>
    %321 = arith.addf %320, %319 : vector<8x32xf32>
    %322 = arith.divf %320, %321 : vector<8x32xf32>
    %323 = vector.extract_strided_slice %282 {offsets = [0, 64], sizes = [8, 32], strides = [1, 1]} : vector<8x128xf32> to vector<8x32xf32>
    %324 = math.tanh %323 : vector<8x32xf32>
    %325 = vector.extract_strided_slice %282 {offsets = [0, 96], sizes = [8, 32], strides = [1, 1]} : vector<8x128xf32> to vector<8x32xf32>
    %326 = arith.negf %325 : vector<8x32xf32>
    %327 = math.exp %326 : vector<8x32xf32>
    %cst_116 = arith.constant 1.000000e+00 : f32
    %328 = vector.broadcast %cst_116 : f32 to vector<8x32xf32>
    %329 = arith.addf %328, %327 : vector<8x32xf32>
    %330 = arith.divf %328, %329 : vector<8x32xf32>
    %331 = arith.mulf %322, %310 : vector<8x32xf32>
    %332 = arith.mulf %316, %324 : vector<8x32xf32>
    %333 = arith.addf %331, %332 : vector<8x32xf32>
    %334 = math.tanh %333 : vector<8x32xf32>
    %335 = arith.mulf %330, %334 : vector<8x32xf32>
    %c0_117 = arith.constant 0 : index
    %c0_118 = arith.constant 0 : index
    %336 = vector.load %arg11[%c0_117, %c0_118] : memref<8x64xf32, #tpu.memory_space<vmem>>, vector<8x32xf32>
    tpu.vector_store %arg11[%c0_117, %c0_118], %309 {strides = array<i32>} : memref<8x64xf32, #tpu.memory_space<vmem>>, vector<8x32xf32>,
    %c0_119 = arith.constant 0 : index
    %c32_120 = arith.constant 32 : index
    %337 = vector.load %arg11[%c0_119, %c32_120] : memref<8x64xf32, #tpu.memory_space<vmem>>, vector<8x32xf32>
    tpu.vector_store %arg11[%c0_119, %c32_120], %335 {strides = array<i32>} : memref<8x64xf32, #tpu.memory_space<vmem>>, vector<8x32xf32>,
    %c0_121 = arith.constant 0 : index
    %c0_122 = arith.constant 0 : index
    %338 = vector.load %arg12[%c0_121, %c0_122] : memref<8x64xf32, #tpu.memory_space<vmem>>, vector<8x32xf32>
    tpu.vector_store %arg12[%c0_121, %c0_122], %307 {strides = array<i32>} : memref<8x64xf32, #tpu.memory_space<vmem>>, vector<8x32xf32>,
    %c0_123 = arith.constant 0 : index
    %c32_124 = arith.constant 32 : index
    %339 = vector.load %arg12[%c0_123, %c32_124] : memref<8x64xf32, #tpu.memory_space<vmem>>, vector<8x32xf32>
    tpu.vector_store %arg12[%c0_123, %c32_124], %333 {strides = array<i32>} : memref<8x64xf32, #tpu.memory_space<vmem>>, vector<8x32xf32>,
    %340 = arith.truncf %309 : vector<8x32xf32> to vector<8x32xbf16>
    %341 = arith.index_cast %c3_i32 : i32 to index
    %c0_125 = arith.constant 0 : index
    %c0_126 = arith.constant 0 : index
    %342 = vector.load %arg7[%341, %c0_125, %c0_126] : memref<8x8x64xbf16, #tpu.memory_space<vmem>>, vector<1x8x32xbf16>
    %343 = vector.shape_cast %342 : vector<1x8x32xbf16> to vector<8x32xbf16>
    %344 = vector.shape_cast %340 : vector<8x32xbf16> to vector<1x8x32xbf16>
    tpu.vector_store %arg7[%341, %c0_125, %c0_126], %344 {strides = array<i32>} : memref<8x8x64xbf16, #tpu.memory_space<vmem>>, vector<1x8x32xbf16>,
    %345 = arith.truncf %335 : vector<8x32xf32> to vector<8x32xbf16>
    %c7_i32_127 = arith.constant 7 : i32
    %346 = arith.subi %c7_i32_127, %c3_i32 : i32
    %347 = arith.index_cast %346 : i32 to index
    %c0_128 = arith.constant 0 : index
    %c32_129 = arith.constant 32 : index
    %348 = vector.load %arg7[%347, %c0_128, %c32_129] : memref<8x8x64xbf16, #tpu.memory_space<vmem>>, vector<1x8x32xbf16>
    %349 = vector.shape_cast %348 : vector<1x8x32xbf16> to vector<8x32xbf16>
    %350 = vector.shape_cast %345 : vector<8x32xbf16> to vector<1x8x32xbf16>
    tpu.vector_store %arg7[%347, %c0_128, %c32_129], %350 {strides = array<i32>} : memref<8x8x64xbf16, #tpu.memory_space<vmem>>, vector<1x8x32xbf16>,
    %c4_i32 = arith.constant 4 : i32
    %c0_130 = arith.constant 0 : index
    %c0_131 = arith.constant 0 : index
    %351 = vector.load %arg11[%c0_130, %c0_131] : memref<8x64xf32, #tpu.memory_space<vmem>>, vector<8x64xf32>
    %352 = arith.truncf %351 : vector<8x64xf32> to vector<8x64xbf16>
    %cst_132 = arith.constant dense<0.000000e+00> : vector<8x256xf32>
    %353 = tpu.matmul %352, %14, %cst_132 {dimension_numbers = #tpu.dot_dimension_numbers<[1], [0], [0], [1], [0, 0, 1, 1], [], []>} : vector<8x64xbf16>, vector<64x256xbf16>, vector<8x256xf32> -> vector<8x256xf32>
    %354 = vector.extract_strided_slice %353 {offsets = [0, 0], sizes = [8, 128], strides = [1, 1]} : vector<8x256xf32> to vector<8x128xf32>
    %355 = vector.extract_strided_slice %353 {offsets = [0, 128], sizes = [8, 128], strides = [1, 1]} : vector<8x256xf32> to vector<8x128xf32>
    %356 = arith.index_cast %c4_i32 : i32 to index
    %c0_133 = arith.constant 0 : index
    %c0_134 = arith.constant 0 : index
    %357 = vector.load %arg10[%356, %c0_133, %c0_134] : memref<8x8x256xbf16, #tpu.memory_space<vmem>>, vector<1x8x128xbf16>
    %358 = vector.shape_cast %357 : vector<1x8x128xbf16> to vector<8x128xbf16>
    %359 = arith.extf %358 : vector<8x128xbf16> to vector<8x128xf32>
    %360 = arith.addf %354, %359 : vector<8x128xf32>
    %c7_i32_135 = arith.constant 7 : i32
    %361 = arith.subi %c7_i32_135, %c4_i32 : i32
    %362 = arith.index_cast %361 : i32 to index
    %c0_136 = arith.constant 0 : index
    %c128_137 = arith.constant 128 : index
    %363 = vector.load %arg10[%362, %c0_136, %c128_137] : memref<8x8x256xbf16, #tpu.memory_space<vmem>>, vector<1x8x128xbf16>
    %364 = vector.shape_cast %363 : vector<1x8x128xbf16> to vector<8x128xbf16>
    %365 = arith.extf %364 : vector<8x128xbf16> to vector<8x128xf32>
    %366 = arith.addf %355, %365 : vector<8x128xf32>
    %c0_138 = arith.constant 0 : index
    %c0_139 = arith.constant 0 : index
    %367 = vector.load %arg12[%c0_138, %c0_139] : memref<8x64xf32, #tpu.memory_space<vmem>>, vector<8x64xf32>
    %368 = vector.extract_strided_slice %367 {offsets = [0, 0], sizes = [8, 32], strides = [1, 1]} : vector<8x64xf32> to vector<8x32xf32>
    %369 = vector.extract_strided_slice %360 {offsets = [0, 0], sizes = [8, 32], strides = [1, 1]} : vector<8x128xf32> to vector<8x32xf32>
    %370 = arith.negf %369 : vector<8x32xf32>
    %371 = math.exp %370 : vector<8x32xf32>
    %cst_140 = arith.constant 1.000000e+00 : f32
    %372 = vector.broadcast %cst_140 : f32 to vector<8x32xf32>
    %373 = arith.addf %372, %371 : vector<8x32xf32>
    %374 = arith.divf %372, %373 : vector<8x32xf32>
    %375 = vector.extract_strided_slice %360 {offsets = [0, 32], sizes = [8, 32], strides = [1, 1]} : vector<8x128xf32> to vector<8x32xf32>
    %376 = arith.negf %375 : vector<8x32xf32>
    %377 = math.exp %376 : vector<8x32xf32>
    %cst_141 = arith.constant 1.000000e+00 : f32
    %378 = vector.broadcast %cst_141 : f32 to vector<8x32xf32>
    %379 = arith.addf %378, %377 : vector<8x32xf32>
    %380 = arith.divf %378, %379 : vector<8x32xf32>
    %381 = vector.extract_strided_slice %360 {offsets = [0, 64], sizes = [8, 32], strides = [1, 1]} : vector<8x128xf32> to vector<8x32xf32>
    %382 = math.tanh %381 : vector<8x32xf32>
    %383 = vector.extract_strided_slice %360 {offsets = [0, 96], sizes = [8, 32], strides = [1, 1]} : vector<8x128xf32> to vector<8x32xf32>
    %384 = arith.negf %383 : vector<8x32xf32>
    %385 = math.exp %384 : vector<8x32xf32>
    %cst_142 = arith.constant 1.000000e+00 : f32
    %386 = vector.broadcast %cst_142 : f32 to vector<8x32xf32>
    %387 = arith.addf %386, %385 : vector<8x32xf32>
    %388 = arith.divf %386, %387 : vector<8x32xf32>
    %389 = arith.mulf %380, %368 : vector<8x32xf32>
    %390 = arith.mulf %374, %382 : vector<8x32xf32>
    %391 = arith.addf %389, %390 : vector<8x32xf32>
    %392 = math.tanh %391 : vector<8x32xf32>
    %393 = arith.mulf %388, %392 : vector<8x32xf32>
    %394 = vector.extract_strided_slice %367 {offsets = [0, 32], sizes = [8, 32], strides = [1, 1]} : vector<8x64xf32> to vector<8x32xf32>
    %395 = vector.extract_strided_slice %366 {offsets = [0, 0], sizes = [8, 32], strides = [1, 1]} : vector<8x128xf32> to vector<8x32xf32>
    %396 = arith.negf %395 : vector<8x32xf32>
    %397 = math.exp %396 : vector<8x32xf32>
    %cst_143 = arith.constant 1.000000e+00 : f32
    %398 = vector.broadcast %cst_143 : f32 to vector<8x32xf32>
    %399 = arith.addf %398, %397 : vector<8x32xf32>
    %400 = arith.divf %398, %399 : vector<8x32xf32>
    %401 = vector.extract_strided_slice %366 {offsets = [0, 32], sizes = [8, 32], strides = [1, 1]} : vector<8x128xf32> to vector<8x32xf32>
    %402 = arith.negf %401 : vector<8x32xf32>
    %403 = math.exp %402 : vector<8x32xf32>
    %cst_144 = arith.constant 1.000000e+00 : f32
    %404 = vector.broadcast %cst_144 : f32 to vector<8x32xf32>
    %405 = arith.addf %404, %403 : vector<8x32xf32>
    %406 = arith.divf %404, %405 : vector<8x32xf32>
    %407 = vector.extract_strided_slice %366 {offsets = [0, 64], sizes = [8, 32], strides = [1, 1]} : vector<8x128xf32> to vector<8x32xf32>
    %408 = math.tanh %407 : vector<8x32xf32>
    %409 = vector.extract_strided_slice %366 {offsets = [0, 96], sizes = [8, 32], strides = [1, 1]} : vector<8x128xf32> to vector<8x32xf32>
    %410 = arith.negf %409 : vector<8x32xf32>
    %411 = math.exp %410 : vector<8x32xf32>
    %cst_145 = arith.constant 1.000000e+00 : f32
    %412 = vector.broadcast %cst_145 : f32 to vector<8x32xf32>
    %413 = arith.addf %412, %411 : vector<8x32xf32>
    %414 = arith.divf %412, %413 : vector<8x32xf32>
    %415 = arith.mulf %406, %394 : vector<8x32xf32>
    %416 = arith.mulf %400, %408 : vector<8x32xf32>
    %417 = arith.addf %415, %416 : vector<8x32xf32>
    %418 = math.tanh %417 : vector<8x32xf32>
    %419 = arith.mulf %414, %418 : vector<8x32xf32>
    %c0_146 = arith.constant 0 : index
    %c0_147 = arith.constant 0 : index
    %420 = vector.load %arg11[%c0_146, %c0_147] : memref<8x64xf32, #tpu.memory_space<vmem>>, vector<8x32xf32>
    tpu.vector_store %arg11[%c0_146, %c0_147], %393 {strides = array<i32>} : memref<8x64xf32, #tpu.memory_space<vmem>>, vector<8x32xf32>,
    %c0_148 = arith.constant 0 : index
    %c32_149 = arith.constant 32 : index
    %421 = vector.load %arg11[%c0_148, %c32_149] : memref<8x64xf32, #tpu.memory_space<vmem>>, vector<8x32xf32>
    tpu.vector_store %arg11[%c0_148, %c32_149], %419 {strides = array<i32>} : memref<8x64xf32, #tpu.memory_space<vmem>>, vector<8x32xf32>,
    %c0_150 = arith.constant 0 : index
    %c0_151 = arith.constant 0 : index
    %422 = vector.load %arg12[%c0_150, %c0_151] : memref<8x64xf32, #tpu.memory_space<vmem>>, vector<8x32xf32>
    tpu.vector_store %arg12[%c0_150, %c0_151], %391 {strides = array<i32>} : memref<8x64xf32, #tpu.memory_space<vmem>>, vector<8x32xf32>,
    %c0_152 = arith.constant 0 : index
    %c32_153 = arith.constant 32 : index
    %423 = vector.load %arg12[%c0_152, %c32_153] : memref<8x64xf32, #tpu.memory_space<vmem>>, vector<8x32xf32>
    tpu.vector_store %arg12[%c0_152, %c32_153], %417 {strides = array<i32>} : memref<8x64xf32, #tpu.memory_space<vmem>>, vector<8x32xf32>,
    %424 = arith.truncf %393 : vector<8x32xf32> to vector<8x32xbf16>
    %425 = arith.index_cast %c4_i32 : i32 to index
    %c0_154 = arith.constant 0 : index
    %c0_155 = arith.constant 0 : index
    %426 = vector.load %arg7[%425, %c0_154, %c0_155] : memref<8x8x64xbf16, #tpu.memory_space<vmem>>, vector<1x8x32xbf16>
    %427 = vector.shape_cast %426 : vector<1x8x32xbf16> to vector<8x32xbf16>
    %428 = vector.shape_cast %424 : vector<8x32xbf16> to vector<1x8x32xbf16>
    tpu.vector_store %arg7[%425, %c0_154, %c0_155], %428 {strides = array<i32>} : memref<8x8x64xbf16, #tpu.memory_space<vmem>>, vector<1x8x32xbf16>,
    %429 = arith.truncf %419 : vector<8x32xf32> to vector<8x32xbf16>
    %c7_i32_156 = arith.constant 7 : i32
    %430 = arith.subi %c7_i32_156, %c4_i32 : i32
    %431 = arith.index_cast %430 : i32 to index
    %c0_157 = arith.constant 0 : index
    %c32_158 = arith.constant 32 : index
    %432 = vector.load %arg7[%431, %c0_157, %c32_158] : memref<8x8x64xbf16, #tpu.memory_space<vmem>>, vector<1x8x32xbf16>
    %433 = vector.shape_cast %432 : vector<1x8x32xbf16> to vector<8x32xbf16>
    %434 = vector.shape_cast %429 : vector<8x32xbf16> to vector<1x8x32xbf16>
    tpu.vector_store %arg7[%431, %c0_157, %c32_158], %434 {strides = array<i32>} : memref<8x8x64xbf16, #tpu.memory_space<vmem>>, vector<1x8x32xbf16>,
    %c5_i32 = arith.constant 5 : i32
    %c0_159 = arith.constant 0 : index
    %c0_160 = arith.constant 0 : index
    %435 = vector.load %arg11[%c0_159, %c0_160] : memref<8x64xf32, #tpu.memory_space<vmem>>, vector<8x64xf32>
    %436 = arith.truncf %435 : vector<8x64xf32> to vector<8x64xbf16>
    %cst_161 = arith.constant dense<0.000000e+00> : vector<8x256xf32>
    %437 = tpu.matmul %436, %14, %cst_161 {dimension_numbers = #tpu.dot_dimension_numbers<[1], [0], [0], [1], [0, 0, 1, 1], [], []>} : vector<8x64xbf16>, vector<64x256xbf16>, vector<8x256xf32> -> vector<8x256xf32>
    %438 = vector.extract_strided_slice %437 {offsets = [0, 0], sizes = [8, 128], strides = [1, 1]} : vector<8x256xf32> to vector<8x128xf32>
    %439 = vector.extract_strided_slice %437 {offsets = [0, 128], sizes = [8, 128], strides = [1, 1]} : vector<8x256xf32> to vector<8x128xf32>
    %440 = arith.index_cast %c5_i32 : i32 to index
    %c0_162 = arith.constant 0 : index
    %c0_163 = arith.constant 0 : index
    %441 = vector.load %arg10[%440, %c0_162, %c0_163] : memref<8x8x256xbf16, #tpu.memory_space<vmem>>, vector<1x8x128xbf16>
    %442 = vector.shape_cast %441 : vector<1x8x128xbf16> to vector<8x128xbf16>
    %443 = arith.extf %442 : vector<8x128xbf16> to vector<8x128xf32>
    %444 = arith.addf %438, %443 : vector<8x128xf32>
    %c7_i32_164 = arith.constant 7 : i32
    %445 = arith.subi %c7_i32_164, %c5_i32 : i32
    %446 = arith.index_cast %445 : i32 to index
    %c0_165 = arith.constant 0 : index
    %c128_166 = arith.constant 128 : index
    %447 = vector.load %arg10[%446, %c0_165, %c128_166] : memref<8x8x256xbf16, #tpu.memory_space<vmem>>, vector<1x8x128xbf16>
    %448 = vector.shape_cast %447 : vector<1x8x128xbf16> to vector<8x128xbf16>
    %449 = arith.extf %448 : vector<8x128xbf16> to vector<8x128xf32>
    %450 = arith.addf %439, %449 : vector<8x128xf32>
    %c0_167 = arith.constant 0 : index
    %c0_168 = arith.constant 0 : index
    %451 = vector.load %arg12[%c0_167, %c0_168] : memref<8x64xf32, #tpu.memory_space<vmem>>, vector<8x64xf32>
    %452 = vector.extract_strided_slice %451 {offsets = [0, 0], sizes = [8, 32], strides = [1, 1]} : vector<8x64xf32> to vector<8x32xf32>
    %453 = vector.extract_strided_slice %444 {offsets = [0, 0], sizes = [8, 32], strides = [1, 1]} : vector<8x128xf32> to vector<8x32xf32>
    %454 = arith.negf %453 : vector<8x32xf32>
    %455 = math.exp %454 : vector<8x32xf32>
    %cst_169 = arith.constant 1.000000e+00 : f32
    %456 = vector.broadcast %cst_169 : f32 to vector<8x32xf32>
    %457 = arith.addf %456, %455 : vector<8x32xf32>
    %458 = arith.divf %456, %457 : vector<8x32xf32>
    %459 = vector.extract_strided_slice %444 {offsets = [0, 32], sizes = [8, 32], strides = [1, 1]} : vector<8x128xf32> to vector<8x32xf32>
    %460 = arith.negf %459 : vector<8x32xf32>
    %461 = math.exp %460 : vector<8x32xf32>
    %cst_170 = arith.constant 1.000000e+00 : f32
    %462 = vector.broadcast %cst_170 : f32 to vector<8x32xf32>
    %463 = arith.addf %462, %461 : vector<8x32xf32>
    %464 = arith.divf %462, %463 : vector<8x32xf32>
    %465 = vector.extract_strided_slice %444 {offsets = [0, 64], sizes = [8, 32], strides = [1, 1]} : vector<8x128xf32> to vector<8x32xf32>
    %466 = math.tanh %465 : vector<8x32xf32>
    %467 = vector.extract_strided_slice %444 {offsets = [0, 96], sizes = [8, 32], strides = [1, 1]} : vector<8x128xf32> to vector<8x32xf32>
    %468 = arith.negf %467 : vector<8x32xf32>
    %469 = math.exp %468 : vector<8x32xf32>
    %cst_171 = arith.constant 1.000000e+00 : f32
    %470 = vector.broadcast %cst_171 : f32 to vector<8x32xf32>
    %471 = arith.addf %470, %469 : vector<8x32xf32>
    %472 = arith.divf %470, %471 : vector<8x32xf32>
    %473 = arith.mulf %464, %452 : vector<8x32xf32>
    %474 = arith.mulf %458, %466 : vector<8x32xf32>
    %475 = arith.addf %473, %474 : vector<8x32xf32>
    %476 = math.tanh %475 : vector<8x32xf32>
    %477 = arith.mulf %472, %476 : vector<8x32xf32>
    %478 = vector.extract_strided_slice %451 {offsets = [0, 32], sizes = [8, 32], strides = [1, 1]} : vector<8x64xf32> to vector<8x32xf32>
    %479 = vector.extract_strided_slice %450 {offsets = [0, 0], sizes = [8, 32], strides = [1, 1]} : vector<8x128xf32> to vector<8x32xf32>
    %480 = arith.negf %479 : vector<8x32xf32>
    %481 = math.exp %480 : vector<8x32xf32>
    %cst_172 = arith.constant 1.000000e+00 : f32
    %482 = vector.broadcast %cst_172 : f32 to vector<8x32xf32>
    %483 = arith.addf %482, %481 : vector<8x32xf32>
    %484 = arith.divf %482, %483 : vector<8x32xf32>
    %485 = vector.extract_strided_slice %450 {offsets = [0, 32], sizes = [8, 32], strides = [1, 1]} : vector<8x128xf32> to vector<8x32xf32>
    %486 = arith.negf %485 : vector<8x32xf32>
    %487 = math.exp %486 : vector<8x32xf32>
    %cst_173 = arith.constant 1.000000e+00 : f32
    %488 = vector.broadcast %cst_173 : f32 to vector<8x32xf32>
    %489 = arith.addf %488, %487 : vector<8x32xf32>
    %490 = arith.divf %488, %489 : vector<8x32xf32>
    %491 = vector.extract_strided_slice %450 {offsets = [0, 64], sizes = [8, 32], strides = [1, 1]} : vector<8x128xf32> to vector<8x32xf32>
    %492 = math.tanh %491 : vector<8x32xf32>
    %493 = vector.extract_strided_slice %450 {offsets = [0, 96], sizes = [8, 32], strides = [1, 1]} : vector<8x128xf32> to vector<8x32xf32>
    %494 = arith.negf %493 : vector<8x32xf32>
    %495 = math.exp %494 : vector<8x32xf32>
    %cst_174 = arith.constant 1.000000e+00 : f32
    %496 = vector.broadcast %cst_174 : f32 to vector<8x32xf32>
    %497 = arith.addf %496, %495 : vector<8x32xf32>
    %498 = arith.divf %496, %497 : vector<8x32xf32>
    %499 = arith.mulf %490, %478 : vector<8x32xf32>
    %500 = arith.mulf %484, %492 : vector<8x32xf32>
    %501 = arith.addf %499, %500 : vector<8x32xf32>
    %502 = math.tanh %501 : vector<8x32xf32>
    %503 = arith.mulf %498, %502 : vector<8x32xf32>
    %c0_175 = arith.constant 0 : index
    %c0_176 = arith.constant 0 : index
    %504 = vector.load %arg11[%c0_175, %c0_176] : memref<8x64xf32, #tpu.memory_space<vmem>>, vector<8x32xf32>
    tpu.vector_store %arg11[%c0_175, %c0_176], %477 {strides = array<i32>} : memref<8x64xf32, #tpu.memory_space<vmem>>, vector<8x32xf32>,
    %c0_177 = arith.constant 0 : index
    %c32_178 = arith.constant 32 : index
    %505 = vector.load %arg11[%c0_177, %c32_178] : memref<8x64xf32, #tpu.memory_space<vmem>>, vector<8x32xf32>
    tpu.vector_store %arg11[%c0_177, %c32_178], %503 {strides = array<i32>} : memref<8x64xf32, #tpu.memory_space<vmem>>, vector<8x32xf32>,
    %c0_179 = arith.constant 0 : index
    %c0_180 = arith.constant 0 : index
    %506 = vector.load %arg12[%c0_179, %c0_180] : memref<8x64xf32, #tpu.memory_space<vmem>>, vector<8x32xf32>
    tpu.vector_store %arg12[%c0_179, %c0_180], %475 {strides = array<i32>} : memref<8x64xf32, #tpu.memory_space<vmem>>, vector<8x32xf32>,
    %c0_181 = arith.constant 0 : index
    %c32_182 = arith.constant 32 : index
    %507 = vector.load %arg12[%c0_181, %c32_182] : memref<8x64xf32, #tpu.memory_space<vmem>>, vector<8x32xf32>
    tpu.vector_store %arg12[%c0_181, %c32_182], %501 {strides = array<i32>} : memref<8x64xf32, #tpu.memory_space<vmem>>, vector<8x32xf32>,
    %508 = arith.truncf %477 : vector<8x32xf32> to vector<8x32xbf16>
    %509 = arith.index_cast %c5_i32 : i32 to index
    %c0_183 = arith.constant 0 : index
    %c0_184 = arith.constant 0 : index
    %510 = vector.load %arg7[%509, %c0_183, %c0_184] : memref<8x8x64xbf16, #tpu.memory_space<vmem>>, vector<1x8x32xbf16>
    %511 = vector.shape_cast %510 : vector<1x8x32xbf16> to vector<8x32xbf16>
    %512 = vector.shape_cast %508 : vector<8x32xbf16> to vector<1x8x32xbf16>
    tpu.vector_store %arg7[%509, %c0_183, %c0_184], %512 {strides = array<i32>} : memref<8x8x64xbf16, #tpu.memory_space<vmem>>, vector<1x8x32xbf16>,
    %513 = arith.truncf %503 : vector<8x32xf32> to vector<8x32xbf16>
    %c7_i32_185 = arith.constant 7 : i32
    %514 = arith.subi %c7_i32_185, %c5_i32 : i32
    %515 = arith.index_cast %514 : i32 to index
    %c0_186 = arith.constant 0 : index
    %c32_187 = arith.constant 32 : index
    %516 = vector.load %arg7[%515, %c0_186, %c32_187] : memref<8x8x64xbf16, #tpu.memory_space<vmem>>, vector<1x8x32xbf16>
    %517 = vector.shape_cast %516 : vector<1x8x32xbf16> to vector<8x32xbf16>
    %518 = vector.shape_cast %513 : vector<8x32xbf16> to vector<1x8x32xbf16>
    tpu.vector_store %arg7[%515, %c0_186, %c32_187], %518 {strides = array<i32>} : memref<8x8x64xbf16, #tpu.memory_space<vmem>>, vector<1x8x32xbf16>,
    %c6_i32 = arith.constant 6 : i32
    %c0_188 = arith.constant 0 : index
    %c0_189 = arith.constant 0 : index
    %519 = vector.load %arg11[%c0_188, %c0_189] : memref<8x64xf32, #tpu.memory_space<vmem>>, vector<8x64xf32>
    %520 = arith.truncf %519 : vector<8x64xf32> to vector<8x64xbf16>
    %cst_190 = arith.constant dense<0.000000e+00> : vector<8x256xf32>
    %521 = tpu.matmul %520, %14, %cst_190 {dimension_numbers = #tpu.dot_dimension_numbers<[1], [0], [0], [1], [0, 0, 1, 1], [], []>} : vector<8x64xbf16>, vector<64x256xbf16>, vector<8x256xf32> -> vector<8x256xf32>
    %522 = vector.extract_strided_slice %521 {offsets = [0, 0], sizes = [8, 128], strides = [1, 1]} : vector<8x256xf32> to vector<8x128xf32>
    %523 = vector.extract_strided_slice %521 {offsets = [0, 128], sizes = [8, 128], strides = [1, 1]} : vector<8x256xf32> to vector<8x128xf32>
    %524 = arith.index_cast %c6_i32 : i32 to index
    %c0_191 = arith.constant 0 : index
    %c0_192 = arith.constant 0 : index
    %525 = vector.load %arg10[%524, %c0_191, %c0_192] : memref<8x8x256xbf16, #tpu.memory_space<vmem>>, vector<1x8x128xbf16>
    %526 = vector.shape_cast %525 : vector<1x8x128xbf16> to vector<8x128xbf16>
    %527 = arith.extf %526 : vector<8x128xbf16> to vector<8x128xf32>
    %528 = arith.addf %522, %527 : vector<8x128xf32>
    %c7_i32_193 = arith.constant 7 : i32
    %529 = arith.subi %c7_i32_193, %c6_i32 : i32
    %530 = arith.index_cast %529 : i32 to index
    %c0_194 = arith.constant 0 : index
    %c128_195 = arith.constant 128 : index
    %531 = vector.load %arg10[%530, %c0_194, %c128_195] : memref<8x8x256xbf16, #tpu.memory_space<vmem>>, vector<1x8x128xbf16>
    %532 = vector.shape_cast %531 : vector<1x8x128xbf16> to vector<8x128xbf16>
    %533 = arith.extf %532 : vector<8x128xbf16> to vector<8x128xf32>
    %534 = arith.addf %523, %533 : vector<8x128xf32>
    %c0_196 = arith.constant 0 : index
    %c0_197 = arith.constant 0 : index
    %535 = vector.load %arg12[%c0_196, %c0_197] : memref<8x64xf32, #tpu.memory_space<vmem>>, vector<8x64xf32>
    %536 = vector.extract_strided_slice %535 {offsets = [0, 0], sizes = [8, 32], strides = [1, 1]} : vector<8x64xf32> to vector<8x32xf32>
    %537 = vector.extract_strided_slice %528 {offsets = [0, 0], sizes = [8, 32], strides = [1, 1]} : vector<8x128xf32> to vector<8x32xf32>
    %538 = arith.negf %537 : vector<8x32xf32>
    %539 = math.exp %538 : vector<8x32xf32>
    %cst_198 = arith.constant 1.000000e+00 : f32
    %540 = vector.broadcast %cst_198 : f32 to vector<8x32xf32>
    %541 = arith.addf %540, %539 : vector<8x32xf32>
    %542 = arith.divf %540, %541 : vector<8x32xf32>
    %543 = vector.extract_strided_slice %528 {offsets = [0, 32], sizes = [8, 32], strides = [1, 1]} : vector<8x128xf32> to vector<8x32xf32>
    %544 = arith.negf %543 : vector<8x32xf32>
    %545 = math.exp %544 : vector<8x32xf32>
    %cst_199 = arith.constant 1.000000e+00 : f32
    %546 = vector.broadcast %cst_199 : f32 to vector<8x32xf32>
    %547 = arith.addf %546, %545 : vector<8x32xf32>
    %548 = arith.divf %546, %547 : vector<8x32xf32>
    %549 = vector.extract_strided_slice %528 {offsets = [0, 64], sizes = [8, 32], strides = [1, 1]} : vector<8x128xf32> to vector<8x32xf32>
    %550 = math.tanh %549 : vector<8x32xf32>
    %551 = vector.extract_strided_slice %528 {offsets = [0, 96], sizes = [8, 32], strides = [1, 1]} : vector<8x128xf32> to vector<8x32xf32>
    %552 = arith.negf %551 : vector<8x32xf32>
    %553 = math.exp %552 : vector<8x32xf32>
    %cst_200 = arith.constant 1.000000e+00 : f32
    %554 = vector.broadcast %cst_200 : f32 to vector<8x32xf32>
    %555 = arith.addf %554, %553 : vector<8x32xf32>
    %556 = arith.divf %554, %555 : vector<8x32xf32>
    %557 = arith.mulf %548, %536 : vector<8x32xf32>
    %558 = arith.mulf %542, %550 : vector<8x32xf32>
    %559 = arith.addf %557, %558 : vector<8x32xf32>
    %560 = math.tanh %559 : vector<8x32xf32>
    %561 = arith.mulf %556, %560 : vector<8x32xf32>
    %562 = vector.extract_strided_slice %535 {offsets = [0, 32], sizes = [8, 32], strides = [1, 1]} : vector<8x64xf32> to vector<8x32xf32>
    %563 = vector.extract_strided_slice %534 {offsets = [0, 0], sizes = [8, 32], strides = [1, 1]} : vector<8x128xf32> to vector<8x32xf32>
    %564 = arith.negf %563 : vector<8x32xf32>
    %565 = math.exp %564 : vector<8x32xf32>
    %cst_201 = arith.constant 1.000000e+00 : f32
    %566 = vector.broadcast %cst_201 : f32 to vector<8x32xf32>
    %567 = arith.addf %566, %565 : vector<8x32xf32>
    %568 = arith.divf %566, %567 : vector<8x32xf32>
    %569 = vector.extract_strided_slice %534 {offsets = [0, 32], sizes = [8, 32], strides = [1, 1]} : vector<8x128xf32> to vector<8x32xf32>
    %570 = arith.negf %569 : vector<8x32xf32>
    %571 = math.exp %570 : vector<8x32xf32>
    %cst_202 = arith.constant 1.000000e+00 : f32
    %572 = vector.broadcast %cst_202 : f32 to vector<8x32xf32>
    %573 = arith.addf %572, %571 : vector<8x32xf32>
    %574 = arith.divf %572, %573 : vector<8x32xf32>
    %575 = vector.extract_strided_slice %534 {offsets = [0, 64], sizes = [8, 32], strides = [1, 1]} : vector<8x128xf32> to vector<8x32xf32>
    %576 = math.tanh %575 : vector<8x32xf32>
    %577 = vector.extract_strided_slice %534 {offsets = [0, 96], sizes = [8, 32], strides = [1, 1]} : vector<8x128xf32> to vector<8x32xf32>
    %578 = arith.negf %577 : vector<8x32xf32>
    %579 = math.exp %578 : vector<8x32xf32>
    %cst_203 = arith.constant 1.000000e+00 : f32
    %580 = vector.broadcast %cst_203 : f32 to vector<8x32xf32>
    %581 = arith.addf %580, %579 : vector<8x32xf32>
    %582 = arith.divf %580, %581 : vector<8x32xf32>
    %583 = arith.mulf %574, %562 : vector<8x32xf32>
    %584 = arith.mulf %568, %576 : vector<8x32xf32>
    %585 = arith.addf %583, %584 : vector<8x32xf32>
    %586 = math.tanh %585 : vector<8x32xf32>
    %587 = arith.mulf %582, %586 : vector<8x32xf32>
    %c0_204 = arith.constant 0 : index
    %c0_205 = arith.constant 0 : index
    %588 = vector.load %arg11[%c0_204, %c0_205] : memref<8x64xf32, #tpu.memory_space<vmem>>, vector<8x32xf32>
    tpu.vector_store %arg11[%c0_204, %c0_205], %561 {strides = array<i32>} : memref<8x64xf32, #tpu.memory_space<vmem>>, vector<8x32xf32>,
    %c0_206 = arith.constant 0 : index
    %c32_207 = arith.constant 32 : index
    %589 = vector.load %arg11[%c0_206, %c32_207] : memref<8x64xf32, #tpu.memory_space<vmem>>, vector<8x32xf32>
    tpu.vector_store %arg11[%c0_206, %c32_207], %587 {strides = array<i32>} : memref<8x64xf32, #tpu.memory_space<vmem>>, vector<8x32xf32>,
    %c0_208 = arith.constant 0 : index
    %c0_209 = arith.constant 0 : index
    %590 = vector.load %arg12[%c0_208, %c0_209] : memref<8x64xf32, #tpu.memory_space<vmem>>, vector<8x32xf32>
    tpu.vector_store %arg12[%c0_208, %c0_209], %559 {strides = array<i32>} : memref<8x64xf32, #tpu.memory_space<vmem>>, vector<8x32xf32>,
    %c0_210 = arith.constant 0 : index
    %c32_211 = arith.constant 32 : index
    %591 = vector.load %arg12[%c0_210, %c32_211] : memref<8x64xf32, #tpu.memory_space<vmem>>, vector<8x32xf32>
    tpu.vector_store %arg12[%c0_210, %c32_211], %585 {strides = array<i32>} : memref<8x64xf32, #tpu.memory_space<vmem>>, vector<8x32xf32>,
    %592 = arith.truncf %561 : vector<8x32xf32> to vector<8x32xbf16>
    %593 = arith.index_cast %c6_i32 : i32 to index
    %c0_212 = arith.constant 0 : index
    %c0_213 = arith.constant 0 : index
    %594 = vector.load %arg7[%593, %c0_212, %c0_213] : memref<8x8x64xbf16, #tpu.memory_space<vmem>>, vector<1x8x32xbf16>
    %595 = vector.shape_cast %594 : vector<1x8x32xbf16> to vector<8x32xbf16>
    %596 = vector.shape_cast %592 : vector<8x32xbf16> to vector<1x8x32xbf16>
    tpu.vector_store %arg7[%593, %c0_212, %c0_213], %596 {strides = array<i32>} : memref<8x8x64xbf16, #tpu.memory_space<vmem>>, vector<1x8x32xbf16>,
    %597 = arith.truncf %587 : vector<8x32xf32> to vector<8x32xbf16>
    %c7_i32_214 = arith.constant 7 : i32
    %598 = arith.subi %c7_i32_214, %c6_i32 : i32
    %599 = arith.index_cast %598 : i32 to index
    %c0_215 = arith.constant 0 : index
    %c32_216 = arith.constant 32 : index
    %600 = vector.load %arg7[%599, %c0_215, %c32_216] : memref<8x8x64xbf16, #tpu.memory_space<vmem>>, vector<1x8x32xbf16>
    %601 = vector.shape_cast %600 : vector<1x8x32xbf16> to vector<8x32xbf16>
    %602 = vector.shape_cast %597 : vector<8x32xbf16> to vector<1x8x32xbf16>
    tpu.vector_store %arg7[%599, %c0_215, %c32_216], %602 {strides = array<i32>} : memref<8x8x64xbf16, #tpu.memory_space<vmem>>, vector<1x8x32xbf16>,
    %c7_i32_217 = arith.constant 7 : i32
    %c0_218 = arith.constant 0 : index
    %c0_219 = arith.constant 0 : index
    %603 = vector.load %arg11[%c0_218, %c0_219] : memref<8x64xf32, #tpu.memory_space<vmem>>, vector<8x64xf32>
    %604 = arith.truncf %603 : vector<8x64xf32> to vector<8x64xbf16>
    %cst_220 = arith.constant dense<0.000000e+00> : vector<8x256xf32>
    %605 = tpu.matmul %604, %14, %cst_220 {dimension_numbers = #tpu.dot_dimension_numbers<[1], [0], [0], [1], [0, 0, 1, 1], [], []>} : vector<8x64xbf16>, vector<64x256xbf16>, vector<8x256xf32> -> vector<8x256xf32>
    %606 = vector.extract_strided_slice %605 {offsets = [0, 0], sizes = [8, 128], strides = [1, 1]} : vector<8x256xf32> to vector<8x128xf32>
    %607 = vector.extract_strided_slice %605 {offsets = [0, 128], sizes = [8, 128], strides = [1, 1]} : vector<8x256xf32> to vector<8x128xf32>
    %608 = arith.index_cast %c7_i32_217 : i32 to index
    %c0_221 = arith.constant 0 : index
    %c0_222 = arith.constant 0 : index
    %609 = vector.load %arg10[%608, %c0_221, %c0_222] : memref<8x8x256xbf16, #tpu.memory_space<vmem>>, vector<1x8x128xbf16>
    %610 = vector.shape_cast %609 : vector<1x8x128xbf16> to vector<8x128xbf16>
    %611 = arith.extf %610 : vector<8x128xbf16> to vector<8x128xf32>
    %612 = arith.addf %606, %611 : vector<8x128xf32>
    %c7_i32_223 = arith.constant 7 : i32
    %613 = arith.subi %c7_i32_223, %c7_i32_217 : i32
    %614 = arith.index_cast %613 : i32 to index
    %c0_224 = arith.constant 0 : index
    %c128_225 = arith.constant 128 : index
    %615 = vector.load %arg10[%614, %c0_224, %c128_225] : memref<8x8x256xbf16, #tpu.memory_space<vmem>>, vector<1x8x128xbf16>
    %616 = vector.shape_cast %615 : vector<1x8x128xbf16> to vector<8x128xbf16>
    %617 = arith.extf %616 : vector<8x128xbf16> to vector<8x128xf32>
    %618 = arith.addf %607, %617 : vector<8x128xf32>
    %c0_226 = arith.constant 0 : index
    %c0_227 = arith.constant 0 : index
    %619 = vector.load %arg12[%c0_226, %c0_227] : memref<8x64xf32, #tpu.memory_space<vmem>>, vector<8x64xf32>
    %620 = vector.extract_strided_slice %619 {offsets = [0, 0], sizes = [8, 32], strides = [1, 1]} : vector<8x64xf32> to vector<8x32xf32>
    %621 = vector.extract_strided_slice %612 {offsets = [0, 0], sizes = [8, 32], strides = [1, 1]} : vector<8x128xf32> to vector<8x32xf32>
    %622 = arith.negf %621 : vector<8x32xf32>
    %623 = math.exp %622 : vector<8x32xf32>
    %cst_228 = arith.constant 1.000000e+00 : f32
    %624 = vector.broadcast %cst_228 : f32 to vector<8x32xf32>
    %625 = arith.addf %624, %623 : vector<8x32xf32>
    %626 = arith.divf %624, %625 : vector<8x32xf32>
    %627 = vector.extract_strided_slice %612 {offsets = [0, 32], sizes = [8, 32], strides = [1, 1]} : vector<8x128xf32> to vector<8x32xf32>
    %628 = arith.negf %627 : vector<8x32xf32>
    %629 = math.exp %628 : vector<8x32xf32>
    %cst_229 = arith.constant 1.000000e+00 : f32
    %630 = vector.broadcast %cst_229 : f32 to vector<8x32xf32>
    %631 = arith.addf %630, %629 : vector<8x32xf32>
    %632 = arith.divf %630, %631 : vector<8x32xf32>
    %633 = vector.extract_strided_slice %612 {offsets = [0, 64], sizes = [8, 32], strides = [1, 1]} : vector<8x128xf32> to vector<8x32xf32>
    %634 = math.tanh %633 : vector<8x32xf32>
    %635 = vector.extract_strided_slice %612 {offsets = [0, 96], sizes = [8, 32], strides = [1, 1]} : vector<8x128xf32> to vector<8x32xf32>
    %636 = arith.negf %635 : vector<8x32xf32>
    %637 = math.exp %636 : vector<8x32xf32>
    %cst_230 = arith.constant 1.000000e+00 : f32
    %638 = vector.broadcast %cst_230 : f32 to vector<8x32xf32>
    %639 = arith.addf %638, %637 : vector<8x32xf32>
    %640 = arith.divf %638, %639 : vector<8x32xf32>
    %641 = arith.mulf %632, %620 : vector<8x32xf32>
    %642 = arith.mulf %626, %634 : vector<8x32xf32>
    %643 = arith.addf %641, %642 : vector<8x32xf32>
    %644 = math.tanh %643 : vector<8x32xf32>
    %645 = arith.mulf %640, %644 : vector<8x32xf32>
    %646 = vector.extract_strided_slice %619 {offsets = [0, 32], sizes = [8, 32], strides = [1, 1]} : vector<8x64xf32> to vector<8x32xf32>
    %647 = vector.extract_strided_slice %618 {offsets = [0, 0], sizes = [8, 32], strides = [1, 1]} : vector<8x128xf32> to vector<8x32xf32>
    %648 = arith.negf %647 : vector<8x32xf32>
    %649 = math.exp %648 : vector<8x32xf32>
    %cst_231 = arith.constant 1.000000e+00 : f32
    %650 = vector.broadcast %cst_231 : f32 to vector<8x32xf32>
    %651 = arith.addf %650, %649 : vector<8x32xf32>
    %652 = arith.divf %650, %651 : vector<8x32xf32>
    %653 = vector.extract_strided_slice %618 {offsets = [0, 32], sizes = [8, 32], strides = [1, 1]} : vector<8x128xf32> to vector<8x32xf32>
    %654 = arith.negf %653 : vector<8x32xf32>
    %655 = math.exp %654 : vector<8x32xf32>
    %cst_232 = arith.constant 1.000000e+00 : f32
    %656 = vector.broadcast %cst_232 : f32 to vector<8x32xf32>
    %657 = arith.addf %656, %655 : vector<8x32xf32>
    %658 = arith.divf %656, %657 : vector<8x32xf32>
    %659 = vector.extract_strided_slice %618 {offsets = [0, 64], sizes = [8, 32], strides = [1, 1]} : vector<8x128xf32> to vector<8x32xf32>
    %660 = math.tanh %659 : vector<8x32xf32>
    %661 = vector.extract_strided_slice %618 {offsets = [0, 96], sizes = [8, 32], strides = [1, 1]} : vector<8x128xf32> to vector<8x32xf32>
    %662 = arith.negf %661 : vector<8x32xf32>
    %663 = math.exp %662 : vector<8x32xf32>
    %cst_233 = arith.constant 1.000000e+00 : f32
    %664 = vector.broadcast %cst_233 : f32 to vector<8x32xf32>
    %665 = arith.addf %664, %663 : vector<8x32xf32>
    %666 = arith.divf %664, %665 : vector<8x32xf32>
    %667 = arith.mulf %658, %646 : vector<8x32xf32>
    %668 = arith.mulf %652, %660 : vector<8x32xf32>
    %669 = arith.addf %667, %668 : vector<8x32xf32>
    %670 = math.tanh %669 : vector<8x32xf32>
    %671 = arith.mulf %666, %670 : vector<8x32xf32>
    %c0_234 = arith.constant 0 : index
    %c0_235 = arith.constant 0 : index
    %672 = vector.load %arg11[%c0_234, %c0_235] : memref<8x64xf32, #tpu.memory_space<vmem>>, vector<8x32xf32>
    tpu.vector_store %arg11[%c0_234, %c0_235], %645 {strides = array<i32>} : memref<8x64xf32, #tpu.memory_space<vmem>>, vector<8x32xf32>,
    %c0_236 = arith.constant 0 : index
    %c32_237 = arith.constant 32 : index
    %673 = vector.load %arg11[%c0_236, %c32_237] : memref<8x64xf32, #tpu.memory_space<vmem>>, vector<8x32xf32>
    tpu.vector_store %arg11[%c0_236, %c32_237], %671 {strides = array<i32>} : memref<8x64xf32, #tpu.memory_space<vmem>>, vector<8x32xf32>,
    %c0_238 = arith.constant 0 : index
    %c0_239 = arith.constant 0 : index
    %674 = vector.load %arg12[%c0_238, %c0_239] : memref<8x64xf32, #tpu.memory_space<vmem>>, vector<8x32xf32>
    tpu.vector_store %arg12[%c0_238, %c0_239], %643 {strides = array<i32>} : memref<8x64xf32, #tpu.memory_space<vmem>>, vector<8x32xf32>,
    %c0_240 = arith.constant 0 : index
    %c32_241 = arith.constant 32 : index
    %675 = vector.load %arg12[%c0_240, %c32_241] : memref<8x64xf32, #tpu.memory_space<vmem>>, vector<8x32xf32>
    tpu.vector_store %arg12[%c0_240, %c32_241], %669 {strides = array<i32>} : memref<8x64xf32, #tpu.memory_space<vmem>>, vector<8x32xf32>,
    %676 = arith.truncf %645 : vector<8x32xf32> to vector<8x32xbf16>
    %677 = arith.index_cast %c7_i32_217 : i32 to index
    %c0_242 = arith.constant 0 : index
    %c0_243 = arith.constant 0 : index
    %678 = vector.load %arg7[%677, %c0_242, %c0_243] : memref<8x8x64xbf16, #tpu.memory_space<vmem>>, vector<1x8x32xbf16>
    %679 = vector.shape_cast %678 : vector<1x8x32xbf16> to vector<8x32xbf16>
    %680 = vector.shape_cast %676 : vector<8x32xbf16> to vector<1x8x32xbf16>
    tpu.vector_store %arg7[%677, %c0_242, %c0_243], %680 {strides = array<i32>} : memref<8x8x64xbf16, #tpu.memory_space<vmem>>, vector<1x8x32xbf16>,
    %681 = arith.truncf %671 : vector<8x32xf32> to vector<8x32xbf16>
    %c7_i32_244 = arith.constant 7 : i32
    %682 = arith.subi %c7_i32_244, %c7_i32_217 : i32
    %683 = arith.index_cast %682 : i32 to index
    %c0_245 = arith.constant 0 : index
    %c32_246 = arith.constant 32 : index
    %684 = vector.load %arg7[%683, %c0_245, %c32_246] : memref<8x8x64xbf16, #tpu.memory_space<vmem>>, vector<1x8x32xbf16>
    %685 = vector.shape_cast %684 : vector<1x8x32xbf16> to vector<8x32xbf16>
    %686 = vector.shape_cast %681 : vector<8x32xbf16> to vector<1x8x32xbf16>
    tpu.vector_store %arg7[%683, %c0_245, %c32_246], %686 {strides = array<i32>} : memref<8x8x64xbf16, #tpu.memory_space<vmem>>, vector<1x8x32xbf16>,
    %c8_i32 = arith.constant 8 : i32
    %c0_247 = arith.constant 0 : index
    %c0_248 = arith.constant 0 : index
    %687 = vector.load %arg11[%c0_247, %c0_248] : memref<8x64xf32, #tpu.memory_space<vmem>>, vector<8x64xf32>
    %c0_249 = arith.constant 0 : index
    %c0_250 = arith.constant 0 : index
    %688 = vector.load %arg8[%c0_249, %c0_250] : memref<8x64xf32, #tpu.memory_space<vmem>>, vector<8x64xf32>
    tpu.vector_store %arg8[%c0_249, %c0_250], %687 {strides = array<i32>} : memref<8x64xf32, #tpu.memory_space<vmem>>, vector<8x64xf32>,
    %c0_251 = arith.constant 0 : index
    %c0_252 = arith.constant 0 : index
    %689 = vector.load %arg11[%c0_251, %c0_252] : memref<8x64xf32, #tpu.memory_space<vmem>>, vector<8x64xf32>
    %690 = arith.truncf %689 : vector<8x64xf32> to vector<8x64xbf16>
    %c0_253 = arith.constant 0 : index
    %c0_254 = arith.constant 0 : index
    %691 = vector.load %arg5[%c0_253, %c0_254] : memref<64x4xbf16, #tpu.memory_space<vmem>>, vector<64x4xbf16>
    %cst_255 = arith.constant dense<0.000000e+00> : vector<8x4xf32>
    %692 = tpu.matmul %690, %691, %cst_255 {dimension_numbers = #tpu.dot_dimension_numbers<[1], [0], [0], [1], [0, 0, 1, 1], [], []>} : vector<8x64xbf16>, vector<64x4xbf16>, vector<8x4xf32> -> vector<8x4xf32>
    %c0_256 = arith.constant 0 : index
    %c0_257 = arith.constant 0 : index
    %693 = vector.load %arg6[%c0_256, %c0_257] : memref<1x4xf32, #tpu.memory_space<vmem>>, vector<1x4xf32>
    %694 = vector.broadcast %693 : vector<1x4xf32> to vector<8x4xf32>
    %695 = arith.addf %692, %694 : vector<8x4xf32>
    %c0_258 = arith.constant 0 : index
    %c0_259 = arith.constant 0 : index
    %696 = vector.load %arg9[%c0_258, %c0_259] : memref<8x4xf32, #tpu.memory_space<vmem>>, vector<8x4xf32>
    tpu.vector_store %arg9[%c0_258, %c0_259], %695 {strides = array<i32>} : memref<8x4xf32, #tpu.memory_space<vmem>>, vector<8x4xf32>,
    return
  }
  func.func @transform_0(%arg0: i32) -> (i32, i32, i32) {
    %c0_i32 = arith.constant 0 : i32
    %c0_i32_0 = arith.constant 0 : i32
    %c0_i32_1 = arith.constant 0 : i32
    return %c0_i32, %arg0, %c0_i32_0 : i32, i32, i32
  }
  func.func @transform_1(%arg0: i32) -> (i32, i32) {
    %c0_i32 = arith.constant 0 : i32
    %c0_i32_0 = arith.constant 0 : i32
    %c0_i32_1 = arith.constant 0 : i32
    return %c0_i32, %c0_i32_0 : i32, i32
  }
  func.func @transform_2(%arg0: i32) -> (i32, i32) {
    %c0_i32 = arith.constant 0 : i32
    %c0_i32_0 = arith.constant 0 : i32
    %c0_i32_1 = arith.constant 0 : i32
    return %c0_i32, %c0_i32_0 : i32, i32
  }
  func.func @transform_3(%arg0: i32) -> (i32, i32) {
    %c0_i32 = arith.constant 0 : i32
    %c0_i32_0 = arith.constant 0 : i32
    %c0_i32_1 = arith.constant 0 : i32
    return %c0_i32, %c0_i32_0 : i32, i32
  }
  func.func @transform_4(%arg0: i32) -> (i32, i32) {
    %c0_i32 = arith.constant 0 : i32
    %c0_i32_0 = arith.constant 0 : i32
    %c0_i32_1 = arith.constant 0 : i32
    return %c0_i32, %c0_i32_0 : i32, i32
  }
  func.func @transform_5(%arg0: i32) -> (i32, i32) {
    %c0_i32 = arith.constant 0 : i32
    %c0_i32_0 = arith.constant 0 : i32
    %c0_i32_1 = arith.constant 0 : i32
    return %c0_i32, %c0_i32_0 : i32, i32
  }
  func.func @transform_6(%arg0: i32) -> (i32, i32, i32) {
    %c0_i32 = arith.constant 0 : i32
    %c0_i32_0 = arith.constant 0 : i32
    %c0_i32_1 = arith.constant 0 : i32
    return %c0_i32, %arg0, %c0_i32_0 : i32, i32, i32
  }
  func.func @transform_7(%arg0: i32) -> (i32, i32) {
    %c0_i32 = arith.constant 0 : i32
    %c0_i32_0 = arith.constant 0 : i32
    return %arg0, %c0_i32 : i32, i32
  }
  func.func @transform_8(%arg0: i32) -> (i32, i32) {
    %c0_i32 = arith.constant 0 : i32
    %c0_i32_0 = arith.constant 0 : i32
    return %arg0, %c0_i32 : i32, i32
  }
}

</mosaic_0001>

<llo_original>
// kernel: lstm_forward.2
$region0: #{lstm_forward.2}
  #allocation0 [shape = 'u32[]', space=smem, size = 0x4, offset = 0x4, fixed_abs, tag = 'smem constant byte address 0x4 - core index']
  #allocation1 [shape = 'u32[144,128]{1,0:T(1,128)}', space=vmem, size = 0x12000, scoped, tag = 'internal scratch']
  #allocation2 [shape = 'bf16[8,8,256]{2,1,0:T(8,128)(2,1)}', space=vmem, size = 0x8000, scoped, tag = 'scratch operand']
  #allocation3 [shape = 'f32[8,64]{1,0:T(8,128)}', space=vmem, size = 0x1000, scoped, tag = 'scratch operand']
  #allocation4 [shape = 'f32[8,64]{1,0:T(8,128)}', space=vmem, size = 0x1000, scoped, tag = 'scratch operand']
  %s0 = inlined_call_operand.vmem [shape: bf16[8,8,32], index: 0, kind: input, shape index: {}]
  %s1 = inlined_call_operand.vmem [shape: bf16[32,256], index: 1, kind: input, shape index: {}]
  %s2 = inlined_call_operand.vmem [shape: bf16[64,256], index: 2, kind: input, shape index: {}]
  %s3 = inlined_call_operand.vmem [shape: f32[1,256], index: 3, kind: input, shape index: {}]
  %s4 = inlined_call_operand.vmem [shape: bf16[8,8,64], index: 4, kind: output, shape index: {0}]
  %s5 = inlined_call_operand.hbm [shape: f32[8,64], index: 5, kind: output, shape index: {1}]
  %6 = xla_tuple %s4, %s5
  %s7 = sld [smem:[#allocation0]]
  $region34: #{lstm_forward.2} parent=0
    _
  %s9 = ssub.s32 1, %s7
  %s10 = scalar_select 0, %s9, %s7
  $region1: #{lstm_forward.2} parent=0
    #allocation5 [shape = 'u8[4096]{0}', space=vmem, size = 0x1000, scoped, tag = 'output window, operand 1, single buffered']
    #allocation6 [shape = 's32[1]{0}', space=sflag, size = 0x4, scoped, tag = 'scoped memory for lstm_forward.2']
    %11 = vsyncpa [#allocation6], 0
    // Predicated region
    $region2: #{lstm_forward.2} parent=1 // pred_check
      _
    $region3: #{lstm_forward.2} parent=1 // pred_check_branch
      %13 = sbr.rel (0) target = $region5
    $region4: #{lstm_forward.2} parent=1 // pred_region
      _
    $region5: #{lstm_forward.2} parent=1 // pred_fallthru
      _
    // Predicated region
    $region6: #{lstm_forward.2} parent=1 // pred_check
      _
    $region7: #{lstm_forward.2} parent=1 // pred_check_branch
      %15 = sbr.rel (0) target = $region9
    $region8: #{lstm_forward.2} parent=1 // pred_region
      _
    $region9: #{lstm_forward.2} parent=1 // pred_fallthru
      _
    // Predicated region
    $region10: #{lstm_forward.2} parent=1 // pred_check
      _
    $region11: #{lstm_forward.2} parent=1 // pred_check_branch
      %17 = sbr.rel (0) target = $region13
    $region12: #{lstm_forward.2} parent=1 // pred_region
      _
    $region13: #{lstm_forward.2} parent=1 // pred_fallthru
      _
    // Predicated region
    $region14: #{lstm_forward.2} parent=1 // pred_check
      _
    $region15: #{lstm_forward.2} parent=1 // pred_check_branch
      %19 = sbr.rel (0) target = $region17
    $region16: #{lstm_forward.2} parent=1 // pred_region
      _
    $region17: #{lstm_forward.2} parent=1 // pred_fallthru
      _
    %v21 = vld [vmem:[%s1] sm:$0xff]
    %v22 = vld [vmem:[%s1 + $0x8] sm:$0xff]
    %v23 = vld [vmem:[%s1 + $0x10] sm:$0xff]
    %v24 = vld [vmem:[%s1 + $0x18] sm:$0xff]
    %v25 = vld [vmem:[%s3] sm:$0x3]
    %v26 = vld [vmem:[%s0] sm:$0xf]
    %v27 = vld [vmem:[%s0 + $0x4] sm:$0xf]
    %v28 = vld [vmem:[%s0 + $0x8] sm:$0xf]
    %v29 = vld [vmem:[%s0 + $0xc] sm:$0xf]
    %v30 = vld [vmem:[%s0 + $0x10] sm:$0xf]
    %v31 = vld [vmem:[%s0 + $0x14] sm:$0xf]
    %v32 = vld [vmem:[%s0 + $0x18] sm:$0xf]
    %v33 = vld [vmem:[%s0 + $0x1c] sm:$0xf]
    %v35 = vlaneseq
    %v36 = vshrl.u32 %v35, 7
    %v37 = vsub.s32 0, %v36
    %v38 = vrot.slane %v25, %v37
    %v39 = vlaneseq
    %v40 = vshrl.u32 %v39, 7
    %v41 = vsub.s32 1, %v40
    %v42 = vrot.slane %v25, %v41
    %v53 = vunpack.c.l.b16 %v26
    %v54 = vunpack.c.l.b16 %v27
    %v55 = vunpack.c.l.b16 %v28
    %v56 = vunpack.c.l.b16 %v29
    %v57 = vunpack.c.l.b16 %v30
    %v58 = vunpack.c.l.b16 %v31
    %v59 = vunpack.c.l.b16 %v32
    %v60 = vunpack.c.l.b16 %v33
    %v61 = vpack.c.b16 %v54, %v53
    %v62 = vpack.c.b16 %v56, %v55
    %v63 = vpack.c.b16 %v58, %v57
    %v64 = vpack.c.b16 %v60, %v59
    %v69 = vunpack.c.l.b16 %v21
    %v70 = vunpack.c.h.b16 %v21
    %v71 = vunpack.c.l.b16 %v22
    %v72 = vunpack.c.h.b16 %v22
    %v73 = vunpack.c.l.b16 %v23
    %v74 = vunpack.c.h.b16 %v23
    %v75 = vunpack.c.l.b16 %v24
    %v76 = vunpack.c.h.b16 %v24
    %v77 = vpack.c.b16 %v71, %v69
    %v78 = vpack.c.b16 %v72, %v70
    %v79 = vpack.c.b16 %v75, %v73
    %v80 = vpack.c.b16 %v76, %v74
    %vm85 = vcmask 261120
    %v87 = vsel %vm85, %v61, 0
    %v90 = vsel %vm85, %v62, 0
    %v93 = vsel %vm85, %v63, 0
    %v96 = vsel %vm85, %v64, 0
    %98 = vmatprep.subr.bf16.mxu0 %v78
    %99 = vmatpush1.bf16.msra.mxu0 %v77
    %100 = vmatprep.subr.bf16.mxu0 %v80
    %101 = vmatpush1.bf16.msra.mxu0 %v79
    %102 = vmatprep.subr.bf16.mxu0 0
    %103 = vmatpush1.bf16.msra.mxu0 0
    %104 = vmatprep.subr.bf16.mxu0 0
    %105 = vmatpush1.bf16.msra.mxu0 0
    %106 = vmatprep.subr.bf16.mxu0 0
    %107 = vmatpush1.bf16.msra.mxu0 0
    %108 = vmatprep.subr.bf16.mxu0 0
    %109 = vmatpush1.bf16.msra.mxu0 0
    %110 = vmatprep.subr.bf16.mxu0 0
    %111 = vmatpush1.bf16.msra.mxu0 0
    %112 = vmatprep.subr.bf16.mxu0 0
    %113 = vmatpush1.bf16.msra.mxu0 0
    %114 = vmatprep.subr.bf16.mxu0 0
    %115 = vmatpush1.bf16.msra.mxu0 0
    %116 = vmatprep.subr.bf16.mxu0 0
    %117 = vmatpush1.bf16.msra.mxu0 0
    %118 = vmatprep.subr.bf16.mxu0 0
    %119 = vmatpush1.bf16.msra.mxu0 0
    %120 = vmatprep.subr.bf16.mxu0 0
    %121 = vmatpush1.bf16.msra.mxu0 0
    %122 = vmatprep.subr.bf16.mxu0 0
    %123 = vmatpush1.bf16.msra.mxu0 0
    %124 = vmatprep.subr.bf16.mxu0 0
    %125 = vmatpush1.bf16.msra.mxu0 0
    %126 = vmatprep.subr.bf16.mxu0 0
    %127 = vmatpush1.bf16.msra.mxu0 0
    %128 = vmatprep.subr.bf16.mxu0 0
    %129 = vmatpush1.bf16.msra.mxu0 0
    %130 = vmatprep.mubr.bf16.mxu0 0
    %131 = vmatmul.mubr.bf16.gmra.mrb[0].mxu0 %v87
    %v132 = vpop.f32.mrb[0].mxu0
    %v133 = vadd.f32 %v38, %v132
    %v134 = vpop.f32.mrb[0].mxu0
    %v135 = vadd.f32 %v42, %v134
    %v136 = vpop.f32.mrb[0].mxu0
    %v137 = vadd.f32 %v38, %v136
    %v138 = vpop.f32.mrb[0].mxu0
    %v139 = vadd.f32 %v42, %v138
    %140 = vmatprep.mubr.bf16.mxu0 0
    %141 = vmatmul.mubr.bf16.gmra.mrb[0].mxu0 %v90
    %v142 = vpop.f32.mrb[0].mxu0
    %v143 = vadd.f32 %v38, %v142
    %v144 = vpop.f32.mrb[0].mxu0
    %v145 = vadd.f32 %v42, %v144
    %v146 = vpop.f32.mrb[0].mxu0
    %v147 = vadd.f32 %v38, %v146
    %v148 = vpop.f32.mrb[0].mxu0
    %v149 = vadd.f32 %v42, %v148
    %150 = vmatprep.mubr.bf16.mxu0 0
    %151 = vmatmul.mubr.bf16.gmra.mrb[0].mxu0 %v93
    %v152 = vpop.f32.mrb[0].mxu0
    %v153 = vadd.f32 %v38, %v152
    %v154 = vpop.f32.mrb[0].mxu0
    %v155 = vadd.f32 %v42, %v154
    %v156 = vpop.f32.mrb[0].mxu0
    %v157 = vadd.f32 %v38, %v156
    %v158 = vpop.f32.mrb[0].mxu0
    %v159 = vadd.f32 %v42, %v158
    %160 = vmatprep.mubr.bf16.mxu0 0
    %161 = vmatmul.mubr.bf16.gmra.mrb[0].mxu0 %v96
    %v162 = vpop.f32.mrb[0].mxu0
    %v163 = vadd.f32 %v38, %v162
    %v164 = vpop.f32.mrb[0].mxu0
    %v165 = vadd.f32 %v42, %v164
    %v166 = vpop.f32.mrb[0].mxu0
    %v167 = vadd.f32 %v38, %v166
    %v168 = vpop.f32.mrb[0].mxu0
    %v169 = vadd.f32 %v42, %v168
    %170 = vdwg.mxu0
    %v171 = vpack.c.bf16 %v133, %v133
    %v172 = vpack.c.bf16 %v135, %v135
    %v173 = vpack.c.bf16 %v137, %v137
    %v174 = vpack.c.bf16 %v139, %v139
    %v175 = vpack.c.bf16 %v143, %v143
    %v176 = vpack.c.bf16 %v145, %v145
    %v177 = vpack.c.bf16 %v147, %v147
    %v178 = vpack.c.bf16 %v149, %v149
    %v179 = vpack.c.bf16 %v153, %v153
    %v180 = vpack.c.bf16 %v155, %v155
    %v181 = vpack.c.bf16 %v157, %v157
    %v182 = vpack.c.bf16 %v159, %v159
    %v183 = vpack.c.bf16 %v163, %v163
    %v184 = vpack.c.bf16 %v165, %v165
    %v185 = vpack.c.bf16 %v167, %v167
    %v186 = vpack.c.bf16 %v169, %v169
    %v203 = vunpack.c.l.b16 %v171
    %v204 = vunpack.c.l.b16 %v172
    %v205 = vunpack.c.l.b16 %v173
    %v206 = vunpack.c.l.b16 %v174
    %v207 = vunpack.c.l.b16 %v175
    %v208 = vunpack.c.l.b16 %v176
    %v209 = vunpack.c.l.b16 %v177
    %v210 = vunpack.c.l.b16 %v178
    %v211 = vunpack.c.l.b16 %v179
    %v212 = vunpack.c.l.b16 %v180
    %v213 = vunpack.c.l.b16 %v181
    %v214 = vunpack.c.l.b16 %v182
    %v215 = vunpack.c.l.b16 %v183
    %v216 = vunpack.c.l.b16 %v184
    %v217 = vunpack.c.l.b16 %v185
    %v218 = vunpack.c.l.b16 %v186
    %v219 = vpack.c.b16 %v204, %v203
    %v220 = vpack.c.b16 %v206, %v205
    %v221 = vpack.c.b16 %v208, %v207
    %v222 = vpack.c.b16 %v210, %v209
    %v223 = vpack.c.b16 %v212, %v211
    %v224 = vpack.c.b16 %v214, %v213
    %v225 = vpack.c.b16 %v216, %v215
    %v226 = vpack.c.b16 %v218, %v217
    %235 = vst [vmem:[#allocation2] sm:$0xff] %v219
    %236 = vst [vmem:[#allocation2 + $0x8] sm:$0xff] %v220
    %237 = vst [vmem:[#allocation2 + $0x10] sm:$0xff] %v221
    %238 = vst [vmem:[#allocation2 + $0x18] sm:$0xff] %v222
    %239 = vst [vmem:[#allocation2 + $0x20] sm:$0xff] %v223
    %240 = vst [vmem:[#allocation2 + $0x28] sm:$0xff] %v224
    %241 = vst [vmem:[#allocation2 + $0x30] sm:$0xff] %v225
    %242 = vst [vmem:[#allocation2 + $0x38] sm:$0xff] %v226
    %vm243 = vcmask 523264
    %244 = vst.msk [vmem:[#allocation3] sm:$0xff] %vm243, 0.0
    %245 = vst.msk [vmem:[#allocation4] sm:$0xff] %vm243, 0.0
    %v246 = vld [vmem:[%s2] sm:$0xff]
    %v247 = vld [vmem:[%s2 + $0x8] sm:$0xff]
    %v248 = vld [vmem:[%s2 + $0x10] sm:$0xff]
    %v249 = vld [vmem:[%s2 + $0x18] sm:$0xff]
    %v250 = vld [vmem:[%s2 + $0x20] sm:$0xff]
    %v251 = vld [vmem:[%s2 + $0x28] sm:$0xff]
    %v252 = vld [vmem:[%s2 + $0x30] sm:$0xff]
    %v253 = vld [vmem:[%s2 + $0x38] sm:$0xff]
    %v254 = vld [vmem:[#allocation3] sm:$0xff]
    %v255 = vpack.c.bf16 %v254, %v254
    %v264 = vunpack.c.l.b16 %v246
    %v265 = vunpack.c.h.b16 %v246
    %v266 = vunpack.c.l.b16 %v247
    %v267 = vunpack.c.h.b16 %v247
    %v268 = vunpack.c.l.b16 %v248
    %v269 = vunpack.c.h.b16 %v248
    %v270 = vunpack.c.l.b16 %v249
    %v271 = vunpack.c.h.b16 %v249
    %v272 = vunpack.c.l.b16 %v250
    %v273 = vunpack.c.h.b16 %v250
    %v274 = vunpack.c.l.b16 %v251
    %v275 = vunpack.c.h.b16 %v251
    %v276 = vunpack.c.l.b16 %v252
    %v277 = vunpack.c.h.b16 %v252
    %v278 = vunpack.c.l.b16 %v253
    %v279 = vunpack.c.h.b16 %v253
    %v280 = vpack.c.b16 %v266, %v264
    %v281 = vpack.c.b16 %v267, %v265
    %v282 = vpack.c.b16 %v270, %v268
    %v283 = vpack.c.b16 %v271, %v269
    %v284 = vpack.c.b16 %v274, %v272
    %v285 = vpack.c.b16 %v275, %v273
    %v286 = vpack.c.b16 %v278, %v276
    %v287 = vpack.c.b16 %v279, %v277
    %v297 = vsel %vm243, %v255, 0
    %299 = vmatprep.subr.bf16.mxu0 %v281
    %300 = vmatpush1.bf16.msra.mxu0 %v280
    %301 = vmatprep.subr.bf16.mxu0 %v283
    %302 = vmatpush1.bf16.msra.mxu0 %v282
    %303 = vmatprep.subr.bf16.mxu0 %v285
    %304 = vmatpush1.bf16.msra.mxu0 %v284
    %305 = vmatprep.subr.bf16.mxu0 %v287
    %306 = vmatpush1.bf16.msra.mxu0 %v286
    %307 = vmatprep.subr.bf16.mxu0 0
    %308 = vmatpush1.bf16.msra.mxu0 0
    %309 = vmatprep.subr.bf16.mxu0 0
    %310 = vmatpush1.bf16.msra.mxu0 0
    %311 = vmatprep.subr.bf16.mxu0 0
    %312 = vmatpush1.bf16.msra.mxu0 0
    %313 = vmatprep.subr.bf16.mxu0 0
    %314 = vmatpush1.bf16.msra.mxu0 0
    %315 = vmatprep.subr.bf16.mxu0 0
    %316 = vmatpush1.bf16.msra.mxu0 0
    %317 = vmatprep.subr.bf16.mxu0 0
    %318 = vmatpush1.bf16.msra.mxu0 0
    %319 = vmatprep.subr.bf16.mxu0 0
    %320 = vmatpush1.bf16.msra.mxu0 0
    %321 = vmatprep.subr.bf16.mxu0 0
    %322 = vmatpush1.bf16.msra.mxu0 0
    %323 = vmatprep.subr.bf16.mxu0 0
    %324 = vmatpush1.bf16.msra.mxu0 0
    %325 = vmatprep.subr.bf16.mxu0 0
    %326 = vmatpush1.bf16.msra.mxu0 0
    %327 = vmatprep.subr.bf16.mxu0 0
    %328 = vmatpush1.bf16.msra.mxu0 0
    %329 = vmatprep.subr.bf16.mxu0 0
    %330 = vmatpush1.bf16.msra.mxu0 0
    %331 = vmatprep.mubr.bf16.mxu0 0
    %332 = vmatmul.mubr.bf16.gmra.mrb[0].mxu0 %v297
    %v333 = vpop.f32.mrb[0].mxu0
    %v334 = vadd.f32 0.0, %v333
    %v335 = vpop.f32.mrb[0].mxu0
    %v336 = vadd.f32 0.0, %v335
    %v337 = vpop.f32.mrb[0].mxu0
    %v338 = vpop.f32.mrb[0].mxu0
    %339 = vdwg.mxu0
    %v340 = vld [vmem:[#allocation2] sm:$0xf]
    %v341 = vunpack.c.l.bf16 %v340
    %v342 = vadd.f32 %v334, %v341
    %s343 = scalar_lea.vmem [#allocation2], 56
    %v344 = vld [vmem:[%s343 + $0x4] sm:$0xf]
    %v345 = vunpack.c.l.bf16 %v344
    %v346 = vadd.f32 %v336, %v345
    %v347 = vld [vmem:[#allocation4] sm:$0xff]
    %v348 = vxor.u32 %v342, 2147483648
    %v349 = vmul.f32 %v348, 1.442695
    %v350 = vpow.pop %v349
    %v351 = vadd.f32 %v350, 1.0
    %v352 = vrcp.pop %v351
    %v353 = vmul.f32 1.0, %v352
    %v354 = vtanh.pop %v342
    %356 = vrot.lane.b32.xlu0 %v347, 32
    %v357 = vpop.permute.xlu0 %356
    %v359 = vmul.f32 %v353, %v357
    %361 = vrot.lane.b32.xlu0 %v354, 64
    %v362 = vpop.permute.xlu0 %361
    %v364 = vmul.f32 %v353, %v362
    %366 = vrot.lane.b32.xlu0 %v364, 32
    %v367 = vpop.permute.xlu0 %366
    %v369 = vadd.f32 %v359, %v367
    %v370 = vtanh.pop %v369
    %372 = vrot.lane.b32.xlu0 %v370, 64
    %v373 = vpop.permute.xlu0 %372
    %v375 = vmul.f32 %v353, %v373
    %v376 = vxor.u32 %v346, 2147483648
    %v377 = vmul.f32 %v376, 1.442695
    %v378 = vpow.pop %v377
    %v379 = vadd.f32 %v378, 1.0
    %v380 = vrcp.pop %v379
    %v381 = vmul.f32 1.0, %v380
    %v382 = vtanh.pop %v346
    %v383 = vmul.f32 %v381, %v347
    %385 = vrot.lane.b32.xlu0 %v382, 64
    %v386 = vpop.permute.xlu0 %385
    %v388 = vmul.f32 %v381, %v386
    %390 = vrot.lane.b32.xlu0 %v388, 32
    %v391 = vpop.permute.xlu0 %390
    %v393 = vadd.f32 %v383, %v391
    %v394 = vtanh.pop %v393
    %396 = vrot.lane.b32.xlu0 %v394, 64
    %v397 = vpop.permute.xlu0 %396
    %v399 = vmul.f32 %v381, %v397
    %401 = vrot.lane.b32.xlu0 %v375, 32
    %v402 = vpop.permute.xlu0 %401
    %404 = vst.msk [vmem:[#allocation3] sm:$0xff] %vm85, %v402
    %406 = vrot.lane.b32.xlu0 %v399, 64
    %v407 = vpop.permute.xlu0 %406
    %vm409 = vcmask 523520
    %410 = vst.msk [vmem:[#allocation3] sm:$0xff] %vm409, %v407
    %412 = vrot.lane.b32.xlu0 %v369, 96
    %v413 = vpop.permute.xlu0 %412
    %415 = vst.msk [vmem:[#allocation4] sm:$0xff] %vm85, %v413
    %416 = vst.msk [vmem:[#allocation4] sm:$0xff] %vm409, %v393
    %v417 = vpack.c.bf16 %v375, %v375
    %v419 = vunpack.c.l.b16 %v417
    %v420 = vpack.c.b16 %v419, %v419
    %421 = vrot.lane.b32.xlu0 %v420, 32
    %v422 = vpop.permute.xlu0 %421
    %vm424 = vcmask 257024
    %425 = vst.msk [vmem:[%s4] sm:$0xf] %vm424, %v422
    %v426 = vpack.c.bf16 %v399, %v399
    %v428 = vunpack.c.l.b16 %v426
    %v429 = vpack.c.b16 %v428, %v428
    %430 = vrot.lane.b32.xlu0 %v429, 64
    %v431 = vpop.permute.xlu0 %430
    %s433 = scalar_lea.vmem %s4, 28
    %vm434 = vcmask 519424
    %435 = vst.msk [vmem:[%s433] sm:$0xf] %vm434, %v431
    %v436 = vld [vmem:[#allocation3] sm:$0xff]
    %v437 = vpack.c.bf16 %v436, %v436
    %v439 = vsel %vm243, %v437, 0
    %441 = vmatprep.subr.bf16.mxu0 %v281
    %442 = vmatpush1.bf16.msra.mxu0 %v280
    %443 = vmatprep.subr.bf16.mxu0 %v283
    %444 = vmatpush1.bf16.msra.mxu0 %v282
    %445 = vmatprep.subr.bf16.mxu0 %v285
    %446 = vmatpush1.bf16.msra.mxu0 %v284
    %447 = vmatprep.subr.bf16.mxu0 %v287
    %448 = vmatpush1.bf16.msra.mxu0 %v286
    %449 = vmatprep.subr.bf16.mxu0 0
    %450 = vmatpush1.bf16.msra.mxu0 0
    %451 = vmatprep.subr.bf16.mxu0 0
    %452 = vmatpush1.bf16.msra.mxu0 0
    %453 = vmatprep.subr.bf16.mxu0 0
    %454 = vmatpush1.bf16.msra.mxu0 0
    %455 = vmatprep.subr.bf16.mxu0 0
    %456 = vmatpush1.bf16.msra.mxu0 0
    %457 = vmatprep.subr.bf16.mxu0 0
    %458 = vmatpush1.bf16.msra.mxu0 0
    %459 = vmatprep.subr.bf16.mxu0 0
    %460 = vmatpush1.bf16.msra.mxu0 0
    %461 = vmatprep.subr.bf16.mxu0 0
    %462 = vmatpush1.bf16.msra.mxu0 0
    %463 = vmatprep.subr.bf16.mxu0 0
    %464 = vmatpush1.bf16.msra.mxu0 0
    %465 = vmatprep.subr.bf16.mxu0 0
    %466 = vmatpush1.bf16.msra.mxu0 0
    %467 = vmatprep.subr.bf16.mxu0 0
    %468 = vmatpush1.bf16.msra.mxu0 0
    %469 = vmatprep.subr.bf16.mxu0 0
    %470 = vmatpush1.bf16.msra.mxu0 0
    %471 = vmatprep.subr.bf16.mxu0 0
    %472 = vmatpush1.bf16.msra.mxu0 0
    %473 = vmatprep.mubr.bf16.mxu0 0
    %474 = vmatmul.mubr.bf16.gmra.mrb[0].mxu0 %v439
    %v475 = vpop.f32.mrb[0].mxu0
    %v476 = vadd.f32 0.0, %v475
    %v477 = vpop.f32.mrb[0].mxu0
    %v478 = vadd.f32 0.0, %v477
    %v479 = vpop.f32.mrb[0].mxu0
    %v480 = vpop.f32.mrb[0].mxu0
    %481 = vdwg.mxu0
    %s482 = scalar_lea.vmem [#allocation2], 8
    %v483 = vld [vmem:[%s482] sm:$0xf]
    %v484 = vunpack.c.l.bf16 %v483
    %v485 = vadd.f32 %v476, %v484
    %s486 = scalar_lea.vmem [#allocation2], 48
    %v487 = vld [vmem:[%s486 + $0x4] sm:$0xf]
    %v488 = vunpack.c.l.bf16 %v487
    %v489 = vadd.f32 %v478, %v488
    %v490 = vld [vmem:[#allocation4] sm:$0xff]
    %v491 = vxor.u32 %v485, 2147483648
    %v492 = vmul.f32 %v491, 1.442695
    %v493 = vpow.pop %v492
    %v494 = vadd.f32 %v493, 1.0
    %v495 = vrcp.pop %v494
    %v496 = vmul.f32 1.0, %v495
    %v497 = vtanh.pop %v485
    %499 = vrot.lane.b32.xlu0 %v490, 32
    %v500 = vpop.permute.xlu0 %499
    %v502 = vmul.f32 %v496, %v500
    %504 = vrot.lane.b32.xlu0 %v497, 64
    %v505 = vpop.permute.xlu0 %504
    %v507 = vmul.f32 %v496, %v505
    %509 = vrot.lane.b32.xlu0 %v507, 32
    %v510 = vpop.permute.xlu0 %509
    %v512 = vadd.f32 %v502, %v510
    %v513 = vtanh.pop %v512
    %515 = vrot.lane.b32.xlu0 %v513, 64
    %v516 = vpop.permute.xlu0 %515
    %v518 = vmul.f32 %v496, %v516
    %v519 = vxor.u32 %v489, 2147483648
    %v520 = vmul.f32 %v519, 1.442695
    %v521 = vpow.pop %v520
    %v522 = vadd.f32 %v521, 1.0
    %v523 = vrcp.pop %v522
    %v524 = vmul.f32 1.0, %v523
    %v525 = vtanh.pop %v489
    %v526 = vmul.f32 %v524, %v490
    %528 = vrot.lane.b32.xlu0 %v525, 64
    %v529 = vpop.permute.xlu0 %528
    %v531 = vmul.f32 %v524, %v529
    %533 = vrot.lane.b32.xlu0 %v531, 32
    %v534 = vpop.permute.xlu0 %533
    %v536 = vadd.f32 %v526, %v534
    %v537 = vtanh.pop %v536
    %539 = vrot.lane.b32.xlu0 %v537, 64
    %v540 = vpop.permute.xlu0 %539
    %v542 = vmul.f32 %v524, %v540
    %544 = vrot.lane.b32.xlu0 %v518, 32
    %v545 = vpop.permute.xlu0 %544
    %547 = vst.msk [vmem:[#allocation3] sm:$0xff] %vm85, %v545
    %549 = vrot.lane.b32.xlu0 %v542, 64
    %v550 = vpop.permute.xlu0 %549
    %552 = vst.msk [vmem:[#allocation3] sm:$0xff] %vm409, %v550
    %554 = vrot.lane.b32.xlu0 %v512, 96
    %v555 = vpop.permute.xlu0 %554
    %557 = vst.msk [vmem:[#allocation4] sm:$0xff] %vm85, %v555
    %558 = vst.msk [vmem:[#allocation4] sm:$0xff] %vm409, %v536
    %v559 = vpack.c.bf16 %v518, %v518
    %v561 = vunpack.c.l.b16 %v559
    %v562 = vpack.c.b16 %v561, %v561
    %563 = vrot.lane.b32.xlu0 %v562, 32
    %v564 = vpop.permute.xlu0 %563
    %s566 = scalar_lea.vmem %s4, 4
    %567 = vst.msk [vmem:[%s566] sm:$0xf] %vm424, %v564
    %v568 = vpack.c.bf16 %v542, %v542
    %v570 = vunpack.c.l.b16 %v568
    %v571 = vpack.c.b16 %v570, %v570
    %572 = vrot.lane.b32.xlu0 %v571, 64
    %v573 = vpop.permute.xlu0 %572
    %s575 = scalar_lea.vmem %s4, 24
    %576 = vst.msk [vmem:[%s575] sm:$0xf] %vm434, %v573
    %v577 = vld [vmem:[#allocation3] sm:$0xff]
    %v578 = vpack.c.bf16 %v577, %v577
    %v580 = vsel %vm243, %v578, 0
    %582 = vmatprep.subr.bf16.mxu0 %v281
    %583 = vmatpush1.bf16.msra.mxu0 %v280
    %584 = vmatprep.subr.bf16.mxu0 %v283
    %585 = vmatpush1.bf16.msra.mxu0 %v282
    %586 = vmatprep.subr.bf16.mxu0 %v285
    %587 = vmatpush1.bf16.msra.mxu0 %v284
    %588 = vmatprep.subr.bf16.mxu0 %v287
    %589 = vmatpush1.bf16.msra.mxu0 %v286
    %590 = vmatprep.subr.bf16.mxu0 0
    %591 = vmatpush1.bf16.msra.mxu0 0
    %592 = vmatprep.subr.bf16.mxu0 0
    %593 = vmatpush1.bf16.msra.mxu0 0
    %594 = vmatprep.subr.bf16.mxu0 0
    %595 = vmatpush1.bf16.msra.mxu0 0
    %596 = vmatprep.subr.bf16.mxu0 0
    %597 = vmatpush1.bf16.msra.mxu0 0
    %598 = vmatprep.subr.bf16.mxu0 0
    %599 = vmatpush1.bf16.msra.mxu0 0
    %600 = vmatprep.subr.bf16.mxu0 0
    %601 = vmatpush1.bf16.msra.mxu0 0
    %602 = vmatprep.subr.bf16.mxu0 0
    %603 = vmatpush1.bf16.msra.mxu0 0
    %604 = vmatprep.subr.bf16.mxu0 0
    %605 = vmatpush1.bf16.msra.mxu0 0
    %606 = vmatprep.subr.bf16.mxu0 0
    %607 = vmatpush1.bf16.msra.mxu0 0
    %608 = vmatprep.subr.bf16.mxu0 0
    %609 = vmatpush1.bf16.msra.mxu0 0
    %610 = vmatprep.subr.bf16.mxu0 0
    %611 = vmatpush1.bf16.msra.mxu0 0
    %612 = vmatprep.subr.bf16.mxu0 0
    %613 = vmatpush1.bf16.msra.mxu0 0
    %614 = vmatprep.mubr.bf16.mxu0 0
    %615 = vmatmul.mubr.bf16.gmra.mrb[0].mxu0 %v580
    %v616 = vpop.f32.mrb[0].mxu0
    %v617 = vadd.f32 0.0, %v616
    %v618 = vpop.f32.mrb[0].mxu0
    %v619 = vadd.f32 0.0, %v618
    %v620 = vpop.f32.mrb[0].mxu0
    %v621 = vpop.f32.mrb[0].mxu0
    %622 = vdwg.mxu0
    %s623 = scalar_lea.vmem [#allocation2], 16
    %v624 = vld [vmem:[%s623] sm:$0xf]
    %v625 = vunpack.c.l.bf16 %v624
    %v626 = vadd.f32 %v617, %v625
    %s627 = scalar_lea.vmem [#allocation2], 40
    %v628 = vld [vmem:[%s627 + $0x4] sm:$0xf]
    %v629 = vunpack.c.l.bf16 %v628
    %v630 = vadd.f32 %v619, %v629
    %v631 = vld [vmem:[#allocation4] sm:$0xff]
    %v632 = vxor.u32 %v626, 2147483648
    %v633 = vmul.f32 %v632, 1.442695
    %v634 = vpow.pop %v633
    %v635 = vadd.f32 %v634, 1.0
    %v636 = vrcp.pop %v635
    %v637 = vmul.f32 1.0, %v636
    %v638 = vtanh.pop %v626
    %640 = vrot.lane.b32.xlu0 %v631, 32
    %v641 = vpop.permute.xlu0 %640
    %v643 = vmul.f32 %v637, %v641
    %645 = vrot.lane.b32.xlu0 %v638, 64
    %v646 = vpop.permute.xlu0 %645
    %v648 = vmul.f32 %v637, %v646
    %650 = vrot.lane.b32.xlu0 %v648, 32
    %v651 = vpop.permute.xlu0 %650
    %v653 = vadd.f32 %v643, %v651
    %v654 = vtanh.pop %v653
    %656 = vrot.lane.b32.xlu0 %v654, 64
    %v657 = vpop.permute.xlu0 %656
    %v659 = vmul.f32 %v637, %v657
    %v660 = vxor.u32 %v630, 2147483648
    %v661 = vmul.f32 %v660, 1.442695
    %v662 = vpow.pop %v661
    %v663 = vadd.f32 %v662, 1.0
    %v664 = vrcp.pop %v663
    %v665 = vmul.f32 1.0, %v664
    %v666 = vtanh.pop %v630
    %v667 = vmul.f32 %v665, %v631
    %669 = vrot.lane.b32.xlu0 %v666, 64
    %v670 = vpop.permute.xlu0 %669
    %v672 = vmul.f32 %v665, %v670
    %674 = vrot.lane.b32.xlu0 %v672, 32
    %v675 = vpop.permute.xlu0 %674
    %v677 = vadd.f32 %v667, %v675
    %v678 = vtanh.pop %v677
    %680 = vrot.lane.b32.xlu0 %v678, 64
    %v681 = vpop.permute.xlu0 %680
    %v683 = vmul.f32 %v665, %v681
    %685 = vrot.lane.b32.xlu0 %v659, 32
    %v686 = vpop.permute.xlu0 %685
    %688 = vst.msk [vmem:[#allocation3] sm:$0xff] %vm85, %v686
    %690 = vrot.lane.b32.xlu0 %v683, 64
    %v691 = vpop.permute.xlu0 %690
    %693 = vst.msk [vmem:[#allocation3] sm:$0xff] %vm409, %v691
    %695 = vrot.lane.b32.xlu0 %v653, 96
    %v696 = vpop.permute.xlu0 %695
    %698 = vst.msk [vmem:[#allocation4] sm:$0xff] %vm85, %v696
    %699 = vst.msk [vmem:[#allocation4] sm:$0xff] %vm409, %v677
    %v700 = vpack.c.bf16 %v659, %v659
    %v702 = vunpack.c.l.b16 %v700
    %v703 = vpack.c.b16 %v702, %v702
    %704 = vrot.lane.b32.xlu0 %v703, 32
    %v705 = vpop.permute.xlu0 %704
    %s707 = scalar_lea.vmem %s4, 8
    %708 = vst.msk [vmem:[%s707] sm:$0xf] %vm424, %v705
    %v709 = vpack.c.bf16 %v683, %v683
    %v711 = vunpack.c.l.b16 %v709
    %v712 = vpack.c.b16 %v711, %v711
    %713 = vrot.lane.b32.xlu0 %v712, 64
    %v714 = vpop.permute.xlu0 %713
    %s716 = scalar_lea.vmem %s4, 20
    %717 = vst.msk [vmem:[%s716] sm:$0xf] %vm434, %v714
    %v718 = vld [vmem:[#allocation3] sm:$0xff]
    %v719 = vpack.c.bf16 %v718, %v718
    %v721 = vsel %vm243, %v719, 0
    %723 = vmatprep.subr.bf16.mxu0 %v281
    %724 = vmatpush1.bf16.msra.mxu0 %v280
    %725 = vmatprep.subr.bf16.mxu0 %v283
    %726 = vmatpush1.bf16.msra.mxu0 %v282
    %727 = vmatprep.subr.bf16.mxu0 %v285
    %728 = vmatpush1.bf16.msra.mxu0 %v284
    %729 = vmatprep.subr.bf16.mxu0 %v287
    %730 = vmatpush1.bf16.msra.mxu0 %v286
    %731 = vmatprep.subr.bf16.mxu0 0
    %732 = vmatpush1.bf16.msra.mxu0 0
    %733 = vmatprep.subr.bf16.mxu0 0
    %734 = vmatpush1.bf16.msra.mxu0 0
    %735 = vmatprep.subr.bf16.mxu0 0
    %736 = vmatpush1.bf16.msra.mxu0 0
    %737 = vmatprep.subr.bf16.mxu0 0
    %738 = vmatpush1.bf16.msra.mxu0 0
    %739 = vmatprep.subr.bf16.mxu0 0
    %740 = vmatpush1.bf16.msra.mxu0 0
    %741 = vmatprep.subr.bf16.mxu0 0
    %742 = vmatpush1.bf16.msra.mxu0 0
    %743 = vmatprep.subr.bf16.mxu0 0
    %744 = vmatpush1.bf16.msra.mxu0 0
    %745 = vmatprep.subr.bf16.mxu0 0
    %746 = vmatpush1.bf16.msra.mxu0 0
    %747 = vmatprep.subr.bf16.mxu0 0
    %748 = vmatpush1.bf16.msra.mxu0 0
    %749 = vmatprep.subr.bf16.mxu0 0
    %750 = vmatpush1.bf16.msra.mxu0 0
    %751 = vmatprep.subr.bf16.mxu0 0
    %752 = vmatpush1.bf16.msra.mxu0 0
    %753 = vmatprep.subr.bf16.mxu0 0
    %754 = vmatpush1.bf16.msra.mxu0 0
    %755 = vmatprep.mubr.bf16.mxu0 0
    %756 = vmatmul.mubr.bf16.gmra.mrb[0].mxu0 %v721
    %v757 = vpop.f32.mrb[0].mxu0
    %v758 = vadd.f32 0.0, %v757
    %v759 = vpop.f32.mrb[0].mxu0
    %v760 = vadd.f32 0.0, %v759
    %v761 = vpop.f32.mrb[0].mxu0
    %v762 = vpop.f32.mrb[0].mxu0
    %763 = vdwg.mxu0
    %s764 = scalar_lea.vmem [#allocation2], 24
    %v765 = vld [vmem:[%s764] sm:$0xf]
    %v766 = vunpack.c.l.bf16 %v765
    %v767 = vadd.f32 %v758, %v766
    %s768 = scalar_lea.vmem [#allocation2], 32
    %v769 = vld [vmem:[%s768 + $0x4] sm:$0xf]
    %v770 = vunpack.c.l.bf16 %v769
    %v771 = vadd.f32 %v760, %v770
    %v772 = vld [vmem:[#allocation4] sm:$0xff]
    %v773 = vxor.u32 %v767, 2147483648
    %v774 = vmul.f32 %v773, 1.442695
    %v775 = vpow.pop %v774
    %v776 = vadd.f32 %v775, 1.0
    %v777 = vrcp.pop %v776
    %v778 = vmul.f32 1.0, %v777
    %v779 = vtanh.pop %v767
    %781 = vrot.lane.b32.xlu0 %v772, 32
    %v782 = vpop.permute.xlu0 %781
    %v784 = vmul.f32 %v778, %v782
    %786 = vrot.lane.b32.xlu0 %v779, 64
    %v787 = vpop.permute.xlu0 %786
    %v789 = vmul.f32 %v778, %v787
    %791 = vrot.lane.b32.xlu0 %v789, 32
    %v792 = vpop.permute.xlu0 %791
    %v794 = vadd.f32 %v784, %v792
    %v795 = vtanh.pop %v794
    %797 = vrot.lane.b32.xlu0 %v795, 64
    %v798 = vpop.permute.xlu0 %797
    %v800 = vmul.f32 %v778, %v798
    %v801 = vxor.u32 %v771, 2147483648
    %v802 = vmul.f32 %v801, 1.442695
    %v803 = vpow.pop %v802
    %v804 = vadd.f32 %v803, 1.0
    %v805 = vrcp.pop %v804
    %v806 = vmul.f32 1.0, %v805
    %v807 = vtanh.pop %v771
    %v808 = vmul.f32 %v806, %v772
    %810 = vrot.lane.b32.xlu0 %v807, 64
    %v811 = vpop.permute.xlu0 %810
    %v813 = vmul.f32 %v806, %v811
    %815 = vrot.lane.b32.xlu0 %v813, 32
    %v816 = vpop.permute.xlu0 %815
    %v818 = vadd.f32 %v808, %v816
    %v819 = vtanh.pop %v818
    %821 = vrot.lane.b32.xlu0 %v819, 64
    %v822 = vpop.permute.xlu0 %821
    %v824 = vmul.f32 %v806, %v822
    %826 = vrot.lane.b32.xlu0 %v800, 32
    %v827 = vpop.permute.xlu0 %826
    %829 = vst.msk [vmem:[#allocation3] sm:$0xff] %vm85, %v827
    %831 = vrot.lane.b32.xlu0 %v824, 64
    %v832 = vpop.permute.xlu0 %831
    %834 = vst.msk [vmem:[#allocation3] sm:$0xff] %vm409, %v832
    %836 = vrot.lane.b32.xlu0 %v794, 96
    %v837 = vpop.permute.xlu0 %836
    %839 = vst.msk [vmem:[#allocation4] sm:$0xff] %vm85, %v837
    %840 = vst.msk [vmem:[#allocation4] sm:$0xff] %vm409, %v818
    %v841 = vpack.c.bf16 %v800, %v800
    %v843 = vunpack.c.l.b16 %v841
    %v844 = vpack.c.b16 %v843, %v843
    %845 = vrot.lane.b32.xlu0 %v844, 32
    %v846 = vpop.permute.xlu0 %845
    %s848 = scalar_lea.vmem %s4, 12
    %849 = vst.msk [vmem:[%s848] sm:$0xf] %vm424, %v846
    %v850 = vpack.c.bf16 %v824, %v824
    %v852 = vunpack.c.l.b16 %v850
    %v853 = vpack.c.b16 %v852, %v852
    %854 = vrot.lane.b32.xlu0 %v853, 64
    %v855 = vpop.permute.xlu0 %854
    %s857 = scalar_lea.vmem %s4, 16
    %858 = vst.msk [vmem:[%s857] sm:$0xf] %vm434, %v855
    %v859 = vld [vmem:[#allocation3] sm:$0xff]
    %v860 = vpack.c.bf16 %v859, %v859
    %v862 = vsel %vm243, %v860, 0
    %864 = vmatprep.subr.bf16.mxu0 %v281
    %865 = vmatpush1.bf16.msra.mxu0 %v280
    %866 = vmatprep.subr.bf16.mxu0 %v283
    %867 = vmatpush1.bf16.msra.mxu0 %v282
    %868 = vmatprep.subr.bf16.mxu0 %v285
    %869 = vmatpush1.bf16.msra.mxu0 %v284
    %870 = vmatprep.subr.bf16.mxu0 %v287
    %871 = vmatpush1.bf16.msra.mxu0 %v286
    %872 = vmatprep.subr.bf16.mxu0 0
    %873 = vmatpush1.bf16.msra.mxu0 0
    %874 = vmatprep.subr.bf16.mxu0 0
    %875 = vmatpush1.bf16.msra.mxu0 0
    %876 = vmatprep.subr.bf16.mxu0 0
    %877 = vmatpush1.bf16.msra.mxu0 0
    %878 = vmatprep.subr.bf16.mxu0 0
    %879 = vmatpush1.bf16.msra.mxu0 0
    %880 = vmatprep.subr.bf16.mxu0 0
    %881 = vmatpush1.bf16.msra.mxu0 0
    %882 = vmatprep.subr.bf16.mxu0 0
    %883 = vmatpush1.bf16.msra.mxu0 0
    %884 = vmatprep.subr.bf16.mxu0 0
    %885 = vmatpush1.bf16.msra.mxu0 0
    %886 = vmatprep.subr.bf16.mxu0 0
    %887 = vmatpush1.bf16.msra.mxu0 0
    %888 = vmatprep.subr.bf16.mxu0 0
    %889 = vmatpush1.bf16.msra.mxu0 0
    %890 = vmatprep.subr.bf16.mxu0 0
    %891 = vmatpush1.bf16.msra.mxu0 0
    %892 = vmatprep.subr.bf16.mxu0 0
    %893 = vmatpush1.bf16.msra.mxu0 0
    %894 = vmatprep.subr.bf16.mxu0 0
    %895 = vmatpush1.bf16.msra.mxu0 0
    %896 = vmatprep.mubr.bf16.mxu0 0
    %897 = vmatmul.mubr.bf16.gmra.mrb[0].mxu0 %v862
    %v898 = vpop.f32.mrb[0].mxu0
    %v899 = vadd.f32 0.0, %v898
    %v900 = vpop.f32.mrb[0].mxu0
    %v901 = vadd.f32 0.0, %v900
    %v902 = vpop.f32.mrb[0].mxu0
    %v903 = vpop.f32.mrb[0].mxu0
    %904 = vdwg.mxu0
    %v905 = vld [vmem:[%s768] sm:$0xf]
    %v906 = vunpack.c.l.bf16 %v905
    %v907 = vadd.f32 %v899, %v906
    %v908 = vld [vmem:[%s764 + $0x4] sm:$0xf]
    %v909 = vunpack.c.l.bf16 %v908
    %v910 = vadd.f32 %v901, %v909
    %v911 = vld [vmem:[#allocation4] sm:$0xff]
    %v912 = vxor.u32 %v907, 2147483648
    %v913 = vmul.f32 %v912, 1.442695
    %v914 = vpow.pop %v913
    %v915 = vadd.f32 %v914, 1.0
    %v916 = vrcp.pop %v915
    %v917 = vmul.f32 1.0, %v916
    %v918 = vtanh.pop %v907
    %920 = vrot.lane.b32.xlu0 %v911, 32
    %v921 = vpop.permute.xlu0 %920
    %v923 = vmul.f32 %v917, %v921
    %925 = vrot.lane.b32.xlu0 %v918, 64
    %v926 = vpop.permute.xlu0 %925
    %v928 = vmul.f32 %v917, %v926
    %930 = vrot.lane.b32.xlu0 %v928, 32
    %v931 = vpop.permute.xlu0 %930
    %v933 = vadd.f32 %v923, %v931
    %v934 = vtanh.pop %v933
    %936 = vrot.lane.b32.xlu0 %v934, 64
    %v937 = vpop.permute.xlu0 %936
    %v939 = vmul.f32 %v917, %v937
    %v940 = vxor.u32 %v910, 2147483648
    %v941 = vmul.f32 %v940, 1.442695
    %v942 = vpow.pop %v941
    %v943 = vadd.f32 %v942, 1.0
    %v944 = vrcp.pop %v943
    %v945 = vmul.f32 1.0, %v944
    %v946 = vtanh.pop %v910
    %v947 = vmul.f32 %v945, %v911
    %949 = vrot.lane.b32.xlu0 %v946, 64
    %v950 = vpop.permute.xlu0 %949
    %v952 = vmul.f32 %v945, %v950
    %954 = vrot.lane.b32.xlu0 %v952, 32
    %v955 = vpop.permute.xlu0 %954
    %v957 = vadd.f32 %v947, %v955
    %v958 = vtanh.pop %v957
    %960 = vrot.lane.b32.xlu0 %v958, 64
    %v961 = vpop.permute.xlu0 %960
    %v963 = vmul.f32 %v945, %v961
    %965 = vrot.lane.b32.xlu0 %v939, 32
    %v966 = vpop.permute.xlu0 %965
    %968 = vst.msk [vmem:[#allocation3] sm:$0xff] %vm85, %v966
    %970 = vrot.lane.b32.xlu0 %v963, 64
    %v971 = vpop.permute.xlu0 %970
    %973 = vst.msk [vmem:[#allocation3] sm:$0xff] %vm409, %v971
    %975 = vrot.lane.b32.xlu0 %v933, 96
    %v976 = vpop.permute.xlu0 %975
    %978 = vst.msk [vmem:[#allocation4] sm:$0xff] %vm85, %v976
    %979 = vst.msk [vmem:[#allocation4] sm:$0xff] %vm409, %v957
    %v980 = vpack.c.bf16 %v939, %v939
    %v982 = vunpack.c.l.b16 %v980
    %v983 = vpack.c.b16 %v982, %v982
    %984 = vrot.lane.b32.xlu0 %v983, 32
    %v985 = vpop.permute.xlu0 %984
    %987 = vst.msk [vmem:[%s857] sm:$0xf] %vm424, %v985
    %v988 = vpack.c.bf16 %v963, %v963
    %v990 = vunpack.c.l.b16 %v988
    %v991 = vpack.c.b16 %v990, %v990
    %992 = vrot.lane.b32.xlu0 %v991, 64
    %v993 = vpop.permute.xlu0 %992
    %995 = vst.msk [vmem:[%s848] sm:$0xf] %vm434, %v993
    %v996 = vld [vmem:[#allocation3] sm:$0xff]
    %v997 = vpack.c.bf16 %v996, %v996
    %v999 = vsel %vm243, %v997, 0
    %1001 = vmatprep.subr.bf16.mxu0 %v281
    %1002 = vmatpush1.bf16.msra.mxu0 %v280
    %1003 = vmatprep.subr.bf16.mxu0 %v283
    %1004 = vmatpush1.bf16.msra.mxu0 %v282
    %1005 = vmatprep.subr.bf16.mxu0 %v285
    %1006 = vmatpush1.bf16.msra.mxu0 %v284
    %1007 = vmatprep.subr.bf16.mxu0 %v287
    %1008 = vmatpush1.bf16.msra.mxu0 %v286
    %1009 = vmatprep.subr.bf16.mxu0 0
    %1010 = vmatpush1.bf16.msra.mxu0 0
    %1011 = vmatprep.subr.bf16.mxu0 0
    %1012 = vmatpush1.bf16.msra.mxu0 0
    %1013 = vmatprep.subr.bf16.mxu0 0
    %1014 = vmatpush1.bf16.msra.mxu0 0
    %1015 = vmatprep.subr.bf16.mxu0 0
    %1016 = vmatpush1.bf16.msra.mxu0 0
    %1017 = vmatprep.subr.bf16.mxu0 0
    %1018 = vmatpush1.bf16.msra.mxu0 0
    %1019 = vmatprep.subr.bf16.mxu0 0
    %1020 = vmatpush1.bf16.msra.mxu0 0
    %1021 = vmatprep.subr.bf16.mxu0 0
    %1022 = vmatpush1.bf16.msra.mxu0 0
    %1023 = vmatprep.subr.bf16.mxu0 0
    %1024 = vmatpush1.bf16.msra.mxu0 0
    %1025 = vmatprep.subr.bf16.mxu0 0
    %1026 = vmatpush1.bf16.msra.mxu0 0
    %1027 = vmatprep.subr.bf16.mxu0 0
    %1028 = vmatpush1.bf16.msra.mxu0 0
    %1029 = vmatprep.subr.bf16.mxu0 0
    %1030 = vmatpush1.bf16.msra.mxu0 0
    %1031 = vmatprep.subr.bf16.mxu0 0
    %1032 = vmatpush1.bf16.msra.mxu0 0
    %1033 = vmatprep.mubr.bf16.mxu0 0
    %1034 = vmatmul.mubr.bf16.gmra.mrb[0].mxu0 %v999
    %v1035 = vpop.f32.mrb[0].mxu0
    %v1036 = vadd.f32 0.0, %v1035
    %v1037 = vpop.f32.mrb[0].mxu0
    %v1038 = vadd.f32 0.0, %v1037
    %v1039 = vpop.f32.mrb[0].mxu0
    %v1040 = vpop.f32.mrb[0].mxu0
    %1041 = vdwg.mxu0
    %v1042 = vld [vmem:[%s627] sm:$0xf]
    %v1043 = vunpack.c.l.bf16 %v1042
    %v1044 = vadd.f32 %v1036, %v1043
    %v1045 = vld [vmem:[%s623 + $0x4] sm:$0xf]
    %v1046 = vunpack.c.l.bf16 %v1045
    %v1047 = vadd.f32 %v1038, %v1046
    %v1048 = vld [vmem:[#allocation4] sm:$0xff]
    %v1049 = vxor.u32 %v1044, 2147483648
    %v1050 = vmul.f32 %v1049, 1.442695
    %v1051 = vpow.pop %v1050
    %v1052 = vadd.f32 %v1051, 1.0
    %v1053 = vrcp.pop %v1052
    %v1054 = vmul.f32 1.0, %v1053
    %v1055 = vtanh.pop %v1044
    %1057 = vrot.lane.b32.xlu0 %v1048, 32
    %v1058 = vpop.permute.xlu0 %1057
    %v1060 = vmul.f32 %v1054, %v1058
    %1062 = vrot.lane.b32.xlu0 %v1055, 64
    %v1063 = vpop.permute.xlu0 %1062
    %v1065 = vmul.f32 %v1054, %v1063
    %1067 = vrot.lane.b32.xlu0 %v1065, 32
    %v1068 = vpop.permute.xlu0 %1067
    %v1070 = vadd.f32 %v1060, %v1068
    %v1071 = vtanh.pop %v1070
    %1073 = vrot.lane.b32.xlu0 %v1071, 64
    %v1074 = vpop.permute.xlu0 %1073
    %v1076 = vmul.f32 %v1054, %v1074
    %v1077 = vxor.u32 %v1047, 2147483648
    %v1078 = vmul.f32 %v1077, 1.442695
    %v1079 = vpow.pop %v1078
    %v1080 = vadd.f32 %v1079, 1.0
    %v1081 = vrcp.pop %v1080
    %v1082 = vmul.f32 1.0, %v1081
    %v1083 = vtanh.pop %v1047
    %v1084 = vmul.f32 %v1082, %v1048
    %1086 = vrot.lane.b32.xlu0 %v1083, 64
    %v1087 = vpop.permute.xlu0 %1086
    %v1089 = vmul.f32 %v1082, %v1087
    %1091 = vrot.lane.b32.xlu0 %v1089, 32
    %v1092 = vpop.permute.xlu0 %1091
    %v1094 = vadd.f32 %v1084, %v1092
    %v1095 = vtanh.pop %v1094
    %1097 = vrot.lane.b32.xlu0 %v1095, 64
    %v1098 = vpop.permute.xlu0 %1097
    %v1100 = vmul.f32 %v1082, %v1098
    %1102 = vrot.lane.b32.xlu0 %v1076, 32
    %v1103 = vpop.permute.xlu0 %1102
    %1105 = vst.msk [vmem:[#allocation3] sm:$0xff] %vm85, %v1103
    %1107 = vrot.lane.b32.xlu0 %v1100, 64
    %v1108 = vpop.permute.xlu0 %1107
    %1110 = vst.msk [vmem:[#allocation3] sm:$0xff] %vm409, %v1108
    %1112 = vrot.lane.b32.xlu0 %v1070, 96
    %v1113 = vpop.permute.xlu0 %1112
    %1115 = vst.msk [vmem:[#allocation4] sm:$0xff] %vm85, %v1113
    %1116 = vst.msk [vmem:[#allocation4] sm:$0xff] %vm409, %v1094
    %v1117 = vpack.c.bf16 %v1076, %v1076
    %v1119 = vunpack.c.l.b16 %v1117
    %v1120 = vpack.c.b16 %v1119, %v1119
    %1121 = vrot.lane.b32.xlu0 %v1120, 32
    %v1122 = vpop.permute.xlu0 %1121
    %1124 = vst.msk [vmem:[%s716] sm:$0xf] %vm424, %v1122
    %v1125 = vpack.c.bf16 %v1100, %v1100
    %v1127 = vunpack.c.l.b16 %v1125
    %v1128 = vpack.c.b16 %v1127, %v1127
    %1129 = vrot.lane.b32.xlu0 %v1128, 64
    %v1130 = vpop.permute.xlu0 %1129
    %1132 = vst.msk [vmem:[%s707] sm:$0xf] %vm434, %v1130
    %v1133 = vld [vmem:[#allocation3] sm:$0xff]
    %v1134 = vpack.c.bf16 %v1133, %v1133
    %v1136 = vsel %vm243, %v1134, 0
    %1138 = vmatprep.subr.bf16.mxu0 %v281
    %1139 = vmatpush1.bf16.msra.mxu0 %v280
    %1140 = vmatprep.subr.bf16.mxu0 %v283
    %1141 = vmatpush1.bf16.msra.mxu0 %v282
    %1142 = vmatprep.subr.bf16.mxu0 %v285
    %1143 = vmatpush1.bf16.msra.mxu0 %v284
    %1144 = vmatprep.subr.bf16.mxu0 %v287
    %1145 = vmatpush1.bf16.msra.mxu0 %v286
    %1146 = vmatprep.subr.bf16.mxu0 0
    %1147 = vmatpush1.bf16.msra.mxu0 0
    %1148 = vmatprep.subr.bf16.mxu0 0
    %1149 = vmatpush1.bf16.msra.mxu0 0
    %1150 = vmatprep.subr.bf16.mxu0 0
    %1151 = vmatpush1.bf16.msra.mxu0 0
    %1152 = vmatprep.subr.bf16.mxu0 0
    %1153 = vmatpush1.bf16.msra.mxu0 0
    %1154 = vmatprep.subr.bf16.mxu0 0
    %1155 = vmatpush1.bf16.msra.mxu0 0
    %1156 = vmatprep.subr.bf16.mxu0 0
    %1157 = vmatpush1.bf16.msra.mxu0 0
    %1158 = vmatprep.subr.bf16.mxu0 0
    %1159 = vmatpush1.bf16.msra.mxu0 0
    %1160 = vmatprep.subr.bf16.mxu0 0
    %1161 = vmatpush1.bf16.msra.mxu0 0
    %1162 = vmatprep.subr.bf16.mxu0 0
    %1163 = vmatpush1.bf16.msra.mxu0 0
    %1164 = vmatprep.subr.bf16.mxu0 0
    %1165 = vmatpush1.bf16.msra.mxu0 0
    %1166 = vmatprep.subr.bf16.mxu0 0
    %1167 = vmatpush1.bf16.msra.mxu0 0
    %1168 = vmatprep.subr.bf16.mxu0 0
    %1169 = vmatpush1.bf16.msra.mxu0 0
    %1170 = vmatprep.mubr.bf16.mxu0 0
    %1171 = vmatmul.mubr.bf16.gmra.mrb[0].mxu0 %v1136
    %v1172 = vpop.f32.mrb[0].mxu0
    %v1173 = vadd.f32 0.0, %v1172
    %v1174 = vpop.f32.mrb[0].mxu0
    %v1175 = vadd.f32 0.0, %v1174
    %v1176 = vpop.f32.mrb[0].mxu0
    %v1177 = vpop.f32.mrb[0].mxu0
    %1178 = vdwg.mxu0
    %v1179 = vld [vmem:[%s486] sm:$0xf]
    %v1180 = vunpack.c.l.bf16 %v1179
    %v1181 = vadd.f32 %v1173, %v1180
    %v1182 = vld [vmem:[%s482 + $0x4] sm:$0xf]
    %v1183 = vunpack.c.l.bf16 %v1182
    %v1184 = vadd.f32 %v1175, %v1183
    %v1185 = vld [vmem:[#allocation4] sm:$0xff]
    %v1186 = vxor.u32 %v1181, 2147483648
    %v1187 = vmul.f32 %v1186, 1.442695
    %v1188 = vpow.pop %v1187
    %v1189 = vadd.f32 %v1188, 1.0
    %v1190 = vrcp.pop %v1189
    %v1191 = vmul.f32 1.0, %v1190
    %v1192 = vtanh.pop %v1181
    %1194 = vrot.lane.b32.xlu0 %v1185, 32
    %v1195 = vpop.permute.xlu0 %1194
    %v1197 = vmul.f32 %v1191, %v1195
    %1199 = vrot.lane.b32.xlu0 %v1192, 64
    %v1200 = vpop.permute.xlu0 %1199
    %v1202 = vmul.f32 %v1191, %v1200
    %1204 = vrot.lane.b32.xlu0 %v1202, 32
    %v1205 = vpop.permute.xlu0 %1204
    %v1207 = vadd.f32 %v1197, %v1205
    %v1208 = vtanh.pop %v1207
    %1210 = vrot.lane.b32.xlu0 %v1208, 64
    %v1211 = vpop.permute.xlu0 %1210
    %v1213 = vmul.f32 %v1191, %v1211
    %v1214 = vxor.u32 %v1184, 2147483648
    %v1215 = vmul.f32 %v1214, 1.442695
    %v1216 = vpow.pop %v1215
    %v1217 = vadd.f32 %v1216, 1.0
    %v1218 = vrcp.pop %v1217
    %v1219 = vmul.f32 1.0, %v1218
    %v1220 = vtanh.pop %v1184
    %v1221 = vmul.f32 %v1219, %v1185
    %1223 = vrot.lane.b32.xlu0 %v1220, 64
    %v1224 = vpop.permute.xlu0 %1223
    %v1226 = vmul.f32 %v1219, %v1224
    %1228 = vrot.lane.b32.xlu0 %v1226, 32
    %v1229 = vpop.permute.xlu0 %1228
    %v1231 = vadd.f32 %v1221, %v1229
    %v1232 = vtanh.pop %v1231
    %1234 = vrot.lane.b32.xlu0 %v1232, 64
    %v1235 = vpop.permute.xlu0 %1234
    %v1237 = vmul.f32 %v1219, %v1235
    %1239 = vrot.lane.b32.xlu0 %v1213, 32
    %v1240 = vpop.permute.xlu0 %1239
    %1242 = vst.msk [vmem:[#allocation3] sm:$0xff] %vm85, %v1240
    %1244 = vrot.lane.b32.xlu0 %v1237, 64
    %v1245 = vpop.permute.xlu0 %1244
    %1247 = vst.msk [vmem:[#allocation3] sm:$0xff] %vm409, %v1245
    %1249 = vrot.lane.b32.xlu0 %v1207, 96
    %v1250 = vpop.permute.xlu0 %1249
    %1252 = vst.msk [vmem:[#allocation4] sm:$0xff] %vm85, %v1250
    %1253 = vst.msk [vmem:[#allocation4] sm:$0xff] %vm409, %v1231
    %v1254 = vpack.c.bf16 %v1213, %v1213
    %v1256 = vunpack.c.l.b16 %v1254
    %v1257 = vpack.c.b16 %v1256, %v1256
    %1258 = vrot.lane.b32.xlu0 %v1257, 32
    %v1259 = vpop.permute.xlu0 %1258
    %1261 = vst.msk [vmem:[%s575] sm:$0xf] %vm424, %v1259
    %v1262 = vpack.c.bf16 %v1237, %v1237
    %v1264 = vunpack.c.l.b16 %v1262
    %v1265 = vpack.c.b16 %v1264, %v1264
    %1266 = vrot.lane.b32.xlu0 %v1265, 64
    %v1267 = vpop.permute.xlu0 %1266
    %1269 = vst.msk [vmem:[%s566] sm:$0xf] %vm434, %v1267
    %v1270 = vld [vmem:[#allocation3] sm:$0xff]
    %v1271 = vpack.c.bf16 %v1270, %v1270
    %v1273 = vsel %vm243, %v1271, 0
    %1275 = vmatprep.subr.bf16.mxu0 %v281
    %1276 = vmatpush1.bf16.msra.mxu0 %v280
    %1277 = vmatprep.subr.bf16.mxu0 %v283
    %1278 = vmatpush1.bf16.msra.mxu0 %v282
    %1279 = vmatprep.subr.bf16.mxu0 %v285
    %1280 = vmatpush1.bf16.msra.mxu0 %v284
    %1281 = vmatprep.subr.bf16.mxu0 %v287
    %1282 = vmatpush1.bf16.msra.mxu0 %v286
    %1283 = vmatprep.subr.bf16.mxu0 0
    %1284 = vmatpush1.bf16.msra.mxu0 0
    %1285 = vmatprep.subr.bf16.mxu0 0
    %1286 = vmatpush1.bf16.msra.mxu0 0
    %1287 = vmatprep.subr.bf16.mxu0 0
    %1288 = vmatpush1.bf16.msra.mxu0 0
    %1289 = vmatprep.subr.bf16.mxu0 0
    %1290 = vmatpush1.bf16.msra.mxu0 0
    %1291 = vmatprep.subr.bf16.mxu0 0
    %1292 = vmatpush1.bf16.msra.mxu0 0
    %1293 = vmatprep.subr.bf16.mxu0 0
    %1294 = vmatpush1.bf16.msra.mxu0 0
    %1295 = vmatprep.subr.bf16.mxu0 0
    %1296 = vmatpush1.bf16.msra.mxu0 0
    %1297 = vmatprep.subr.bf16.mxu0 0
    %1298 = vmatpush1.bf16.msra.mxu0 0
    %1299 = vmatprep.subr.bf16.mxu0 0
    %1300 = vmatpush1.bf16.msra.mxu0 0
    %1301 = vmatprep.subr.bf16.mxu0 0
    %1302 = vmatpush1.bf16.msra.mxu0 0
    %1303 = vmatprep.subr.bf16.mxu0 0
    %1304 = vmatpush1.bf16.msra.mxu0 0
    %1305 = vmatprep.subr.bf16.mxu0 0
    %1306 = vmatpush1.bf16.msra.mxu0 0
    %1307 = vmatprep.mubr.bf16.mxu0 0
    %1308 = vmatmul.mubr.bf16.gmra.mrb[0].mxu0 %v1273
    %v1309 = vpop.f32.mrb[0].mxu0
    %v1310 = vadd.f32 0.0, %v1309
    %v1311 = vpop.f32.mrb[0].mxu0
    %v1312 = vadd.f32 0.0, %v1311
    %v1313 = vpop.f32.mrb[0].mxu0
    %v1314 = vpop.f32.mrb[0].mxu0
    %1315 = vdwg.mxu0
    %v1316 = vld [vmem:[%s343] sm:$0xf]
    %v1317 = vunpack.c.l.bf16 %v1316
    %v1318 = vadd.f32 %v1310, %v1317
    %v1319 = vld [vmem:[#allocation2 + $0x4] sm:$0xf]
    %v1320 = vunpack.c.l.bf16 %v1319
    %v1321 = vadd.f32 %v1312, %v1320
    %v1322 = vld [vmem:[#allocation4] sm:$0xff]
    %v1323 = vxor.u32 %v1318, 2147483648
    %v1324 = vmul.f32 %v1323, 1.442695
    %v1325 = vpow.pop %v1324
    %v1326 = vadd.f32 %v1325, 1.0
    %v1327 = vrcp.pop %v1326
    %v1328 = vmul.f32 1.0, %v1327
    %v1329 = vtanh.pop %v1318
    %1331 = vrot.lane.b32.xlu0 %v1322, 32
    %v1332 = vpop.permute.xlu0 %1331
    %v1334 = vmul.f32 %v1328, %v1332
    %1336 = vrot.lane.b32.xlu0 %v1329, 64
    %v1337 = vpop.permute.xlu0 %1336
    %v1339 = vmul.f32 %v1328, %v1337
    %1341 = vrot.lane.b32.xlu0 %v1339, 32
    %v1342 = vpop.permute.xlu0 %1341
    %v1344 = vadd.f32 %v1334, %v1342
    %v1345 = vtanh.pop %v1344
    %1347 = vrot.lane.b32.xlu0 %v1345, 64
    %v1348 = vpop.permute.xlu0 %1347
    %v1350 = vmul.f32 %v1328, %v1348
    %v1351 = vxor.u32 %v1321, 2147483648
    %v1352 = vmul.f32 %v1351, 1.442695
    %v1353 = vpow.pop %v1352
    %v1354 = vadd.f32 %v1353, 1.0
    %v1355 = vrcp.pop %v1354
    %v1356 = vmul.f32 1.0, %v1355
    %v1357 = vtanh.pop %v1321
    %v1358 = vmul.f32 %v1356, %v1322
    %1360 = vrot.lane.b32.xlu0 %v1357, 64
    %v1361 = vpop.permute.xlu0 %1360
    %v1363 = vmul.f32 %v1356, %v1361
    %1365 = vrot.lane.b32.xlu0 %v1363, 32
    %v1366 = vpop.permute.xlu0 %1365
    %v1368 = vadd.f32 %v1358, %v1366
    %v1369 = vtanh.pop %v1368
    %1371 = vrot.lane.b32.xlu0 %v1369, 64
    %v1372 = vpop.permute.xlu0 %1371
    %v1374 = vmul.f32 %v1356, %v1372
    %1376 = vrot.lane.b32.xlu0 %v1350, 32
    %v1377 = vpop.permute.xlu0 %1376
    %1379 = vst.msk [vmem:[#allocation3] sm:$0xff] %vm85, %v1377
    %1381 = vrot.lane.b32.xlu0 %v1374, 64
    %v1382 = vpop.permute.xlu0 %1381
    %1384 = vst.msk [vmem:[#allocation3] sm:$0xff] %vm409, %v1382
    %1386 = vrot.lane.b32.xlu0 %v1344, 96
    %v1387 = vpop.permute.xlu0 %1386
    %1389 = vst.msk [vmem:[#allocation4] sm:$0xff] %vm85, %v1387
    %1390 = vst.msk [vmem:[#allocation4] sm:$0xff] %vm409, %v1368
    %v1391 = vpack.c.bf16 %v1350, %v1350
    %v1393 = vunpack.c.l.b16 %v1391
    %v1394 = vpack.c.b16 %v1393, %v1393
    %1395 = vrot.lane.b32.xlu0 %v1394, 32
    %v1396 = vpop.permute.xlu0 %1395
    %1398 = vst.msk [vmem:[%s433] sm:$0xf] %vm424, %v1396
    %v1399 = vpack.c.bf16 %v1374, %v1374
    %v1401 = vunpack.c.l.b16 %v1399
    %v1402 = vpack.c.b16 %v1401, %v1401
    %1403 = vrot.lane.b32.xlu0 %v1402, 64
    %v1404 = vpop.permute.xlu0 %1403
    %1406 = vst.msk [vmem:[%s4] sm:$0xf] %vm434, %v1404
    %v1407 = vld [vmem:[#allocation3] sm:$0xff]
    %1408 = vst.msk [vmem:[#allocation5] sm:$0xff] %vm243, %v1407
    // Predicated region
    $region18: #{lstm_forward.2} parent=1 // pred_check
      _
    $region19: #{lstm_forward.2} parent=1 // pred_check_branch
      %1410 = sbr.rel (0) target = $region21
    $region20: #{lstm_forward.2} parent=1 // pred_region
      _
    $region21: #{lstm_forward.2} parent=1 // pred_fallthru
      _
    // Predicated region
    $region22: #{lstm_forward.2} parent=1 // pred_check
      _
    $region23: #{lstm_forward.2} parent=1 // pred_check_branch
      %1412 = sbr.rel (0) target = $region25
    $region24: #{lstm_forward.2} parent=1 // pred_region
      %s1414 = ssub.s32 128, 128
      %1415 = vsyncadd [#allocation6], %s1414
      %s1417 = sshll.u32 [#allocation5], 4
      %s1418 = int_to_ptr.vmem [resolvable:$true] %s1417
      %1420 = dma.vmem_to_hbm [thread:$0]  %s1418, 128, %s5, [#allocation6]
    $region25: #{lstm_forward.2} parent=1 // pred_fallthru
      _
    // Predicated region
    $region26: #{lstm_forward.2} parent=1 // pred_check
      _
    $region27: #{lstm_forward.2} parent=1 // pred_check_branch
      %1422 = sbr.rel (0) target = $region29
    $region28: #{lstm_forward.2} parent=1 // pred_region
      _
    $region29: #{lstm_forward.2} parent=1 // pred_fallthru
      _
    // Predicated region
    $region30: #{lstm_forward.2} parent=1 // pred_check
      _
    $region31: #{lstm_forward.2} parent=1 // pred_check_branch
      %1424 = sbr.rel (0) target = $region33
    $region32: #{lstm_forward.2} parent=1 // pred_region
      %1425 = dma.done [#allocation6], 128
    $region33: #{lstm_forward.2} parent=1 // pred_fallthru
      _
    %1426 = vsyncpa [#allocation6], 1

// kernel: lstm_forward.3
$region0: #{lstm_forward.3}
  #allocation0 [shape = 'u32[]', space=smem, size = 0x4, offset = 0x4, fixed_abs, tag = 'smem constant byte address 0x4 - core index']
  #allocation1 [shape = 'u32[144,128]{1,0:T(1,128)}', space=vmem, size = 0x12000, scoped, tag = 'internal scratch']
  #allocation2 [shape = 'bf16[8,8,256]{2,1,0:T(8,128)(2,1)}', space=vmem, size = 0x8000, scoped, tag = 'scratch operand']
  #allocation3 [shape = 'f32[8,64]{1,0:T(8,128)}', space=vmem, size = 0x1000, scoped, tag = 'scratch operand']
  #allocation4 [shape = 'f32[8,64]{1,0:T(8,128)}', space=vmem, size = 0x1000, scoped, tag = 'scratch operand']
  %s0 = inlined_call_operand.vmem [shape: bf16[8,8,64], index: 0, kind: input, shape index: {}]
  %s1 = inlined_call_operand.vmem [shape: bf16[64,256], index: 1, kind: input, shape index: {}]
  %s2 = inlined_call_operand.vmem [shape: bf16[64,256], index: 2, kind: input, shape index: {}]
  %s3 = inlined_call_operand.vmem [shape: f32[1,256], index: 3, kind: input, shape index: {}]
  %s4 = inlined_call_operand.vmem [shape: bf16[64,4], index: 4, kind: input, shape index: {}]
  %s5 = inlined_call_operand.vmem [shape: f32[1,4], index: 5, kind: input, shape index: {}]
  %s6 = inlined_call_operand.hbm [shape: bf16[8,8,64], index: 6, kind: output, shape index: {0}]
  %s7 = inlined_call_operand.hbm [shape: f32[8,64], index: 7, kind: output, shape index: {1}]
  %s8 = inlined_call_operand.vmem [shape: f32[8,4], index: 8, kind: output, shape index: {2}]
  %9 = xla_tuple %s6, %s7, %s8
  %s10 = sld [smem:[#allocation0]]
  $region50: #{lstm_forward.3} parent=0
    _
  %s12 = ssub.s32 1, %s10
  %s13 = scalar_select 0, %s12, %s10
  $region1: #{lstm_forward.3} parent=0
    #allocation5 [shape = 'u8[16384]{0}', space=vmem, size = 0x4000, scoped, tag = 'output window, operand 0, single buffered']
    #allocation6 [shape = 's32[1]{0}', space=sflag, size = 0x4, scoped, tag = 'scoped memory for lstm_forward.3']
    #allocation7 [shape = 'u8[4096]{0}', space=vmem, size = 0x1000, scoped, tag = 'output window, operand 1, single buffered']
    #allocation8 [shape = 's32[1]{0}', space=sflag, size = 0x4, scoped, tag = 'scoped memory for lstm_forward.3']
    %14 = vsyncpa [#allocation6], 0
    %15 = vsyncpa [#allocation8], 0
    // Predicated region
    $region2: #{lstm_forward.3} parent=1 // pred_check
      _
    $region3: #{lstm_forward.3} parent=1 // pred_check_branch
      %17 = sbr.rel (0) target = $region5
    $region4: #{lstm_forward.3} parent=1 // pred_region
      _
    $region5: #{lstm_forward.3} parent=1 // pred_fallthru
      _
    // Predicated region
    $region6: #{lstm_forward.3} parent=1 // pred_check
      _
    $region7: #{lstm_forward.3} parent=1 // pred_check_branch
      %19 = sbr.rel (0) target = $region9
    $region8: #{lstm_forward.3} parent=1 // pred_region
      _
    $region9: #{lstm_forward.3} parent=1 // pred_fallthru
      _
    // Predicated region
    $region10: #{lstm_forward.3} parent=1 // pred_check
      _
    $region11: #{lstm_forward.3} parent=1 // pred_check_branch
      %21 = sbr.rel (0) target = $region13
    $region12: #{lstm_forward.3} parent=1 // pred_region
      _
    $region13: #{lstm_forward.3} parent=1 // pred_fallthru
      _
    // Predicated region
    $region14: #{lstm_forward.3} parent=1 // pred_check
      _
    $region15: #{lstm_forward.3} parent=1 // pred_check_branch
      %23 = sbr.rel (0) target = $region17
    $region16: #{lstm_forward.3} parent=1 // pred_region
      _
    $region17: #{lstm_forward.3} parent=1 // pred_fallthru
      _
    // Predicated region
    $region18: #{lstm_forward.3} parent=1 // pred_check
      _
    $region19: #{lstm_forward.3} parent=1 // pred_check_branch
      %25 = sbr.rel (0) target = $region21
    $region20: #{lstm_forward.3} parent=1 // pred_region
      _
    $region21: #{lstm_forward.3} parent=1 // pred_fallthru
      _
    // Predicated region
    $region22: #{lstm_forward.3} parent=1 // pred_check
      _
    $region23: #{lstm_forward.3} parent=1 // pred_check_branch
      %27 = sbr.rel (0) target = $region25
    $region24: #{lstm_forward.3} parent=1 // pred_region
      _
    $region25: #{lstm_forward.3} parent=1 // pred_fallthru
      _
    %v29 = vld [vmem:[%s1] sm:$0xff]
    %v30 = vld [vmem:[%s1 + $0x8] sm:$0xff]
    %v31 = vld [vmem:[%s1 + $0x10] sm:$0xff]
    %v32 = vld [vmem:[%s1 + $0x18] sm:$0xff]
    %v33 = vld [vmem:[%s1 + $0x20] sm:$0xff]
    %v34 = vld [vmem:[%s1 + $0x28] sm:$0xff]
    %v35 = vld [vmem:[%s1 + $0x30] sm:$0xff]
    %v36 = vld [vmem:[%s1 + $0x38] sm:$0xff]
    %v37 = vld [vmem:[%s3] sm:$0x3]
    %v38 = vld [vmem:[%s0] sm:$0xf]
    %v39 = vld [vmem:[%s0 + $0x4] sm:$0xf]
    %v40 = vld [vmem:[%s0 + $0x8] sm:$0xf]
    %v41 = vld [vmem:[%s0 + $0xc] sm:$0xf]
    %v42 = vld [vmem:[%s0 + $0x10] sm:$0xf]
    %v43 = vld [vmem:[%s0 + $0x14] sm:$0xf]
    %v44 = vld [vmem:[%s0 + $0x18] sm:$0xf]
    %v45 = vld [vmem:[%s0 + $0x1c] sm:$0xf]
    %v47 = vlaneseq
    %v48 = vshrl.u32 %v47, 7
    %v49 = vsub.s32 0, %v48
    %v50 = vrot.slane %v37, %v49
    %v51 = vlaneseq
    %v52 = vshrl.u32 %v51, 7
    %v53 = vsub.s32 1, %v52
    %v54 = vrot.slane %v37, %v53
    %v65 = vunpack.c.l.b16 %v38
    %v66 = vunpack.c.l.b16 %v39
    %v67 = vunpack.c.l.b16 %v40
    %v68 = vunpack.c.l.b16 %v41
    %v69 = vunpack.c.l.b16 %v42
    %v70 = vunpack.c.l.b16 %v43
    %v71 = vunpack.c.l.b16 %v44
    %v72 = vunpack.c.l.b16 %v45
    %v73 = vpack.c.b16 %v66, %v65
    %v74 = vpack.c.b16 %v68, %v67
    %v75 = vpack.c.b16 %v70, %v69
    %v76 = vpack.c.b16 %v72, %v71
    %v85 = vunpack.c.l.b16 %v29
    %v86 = vunpack.c.h.b16 %v29
    %v87 = vunpack.c.l.b16 %v30
    %v88 = vunpack.c.h.b16 %v30
    %v89 = vunpack.c.l.b16 %v31
    %v90 = vunpack.c.h.b16 %v31
    %v91 = vunpack.c.l.b16 %v32
    %v92 = vunpack.c.h.b16 %v32
    %v93 = vunpack.c.l.b16 %v33
    %v94 = vunpack.c.h.b16 %v33
    %v95 = vunpack.c.l.b16 %v34
    %v96 = vunpack.c.h.b16 %v34
    %v97 = vunpack.c.l.b16 %v35
    %v98 = vunpack.c.h.b16 %v35
    %v99 = vunpack.c.l.b16 %v36
    %v100 = vunpack.c.h.b16 %v36
    %v101 = vpack.c.b16 %v87, %v85
    %v102 = vpack.c.b16 %v88, %v86
    %v103 = vpack.c.b16 %v91, %v89
    %v104 = vpack.c.b16 %v92, %v90
    %v105 = vpack.c.b16 %v95, %v93
    %v106 = vpack.c.b16 %v96, %v94
    %v107 = vpack.c.b16 %v99, %v97
    %v108 = vpack.c.b16 %v100, %v98
    %vm117 = vcmask 523264
    %v119 = vsel %vm117, %v73, 0
    %v122 = vsel %vm117, %v74, 0
    %v125 = vsel %vm117, %v75, 0
    %v128 = vsel %vm117, %v76, 0
    %130 = vmatprep.subr.bf16.mxu0 %v102
    %131 = vmatpush1.bf16.msra.mxu0 %v101
    %132 = vmatprep.subr.bf16.mxu0 %v104
    %133 = vmatpush1.bf16.msra.mxu0 %v103
    %134 = vmatprep.subr.bf16.mxu0 %v106
    %135 = vmatpush1.bf16.msra.mxu0 %v105
    %136 = vmatprep.subr.bf16.mxu0 %v108
    %137 = vmatpush1.bf16.msra.mxu0 %v107
    %138 = vmatprep.subr.bf16.mxu0 0
    %139 = vmatpush1.bf16.msra.mxu0 0
    %140 = vmatprep.subr.bf16.mxu0 0
    %141 = vmatpush1.bf16.msra.mxu0 0
    %142 = vmatprep.subr.bf16.mxu0 0
    %143 = vmatpush1.bf16.msra.mxu0 0
    %144 = vmatprep.subr.bf16.mxu0 0
    %145 = vmatpush1.bf16.msra.mxu0 0
    %146 = vmatprep.subr.bf16.mxu0 0
    %147 = vmatpush1.bf16.msra.mxu0 0
    %148 = vmatprep.subr.bf16.mxu0 0
    %149 = vmatpush1.bf16.msra.mxu0 0
    %150 = vmatprep.subr.bf16.mxu0 0
    %151 = vmatpush1.bf16.msra.mxu0 0
    %152 = vmatprep.subr.bf16.mxu0 0
    %153 = vmatpush1.bf16.msra.mxu0 0
    %154 = vmatprep.subr.bf16.mxu0 0
    %155 = vmatpush1.bf16.msra.mxu0 0
    %156 = vmatprep.subr.bf16.mxu0 0
    %157 = vmatpush1.bf16.msra.mxu0 0
    %158 = vmatprep.subr.bf16.mxu0 0
    %159 = vmatpush1.bf16.msra.mxu0 0
    %160 = vmatprep.subr.bf16.mxu0 0
    %161 = vmatpush1.bf16.msra.mxu0 0
    %162 = vmatprep.mubr.bf16.mxu0 0
    %163 = vmatmul.mubr.bf16.gmra.mrb[0].mxu0 %v119
    %v164 = vpop.f32.mrb[0].mxu0
    %v165 = vadd.f32 %v50, %v164
    %v166 = vpop.f32.mrb[0].mxu0
    %v167 = vadd.f32 %v54, %v166
    %v168 = vpop.f32.mrb[0].mxu0
    %v169 = vadd.f32 %v50, %v168
    %v170 = vpop.f32.mrb[0].mxu0
    %v171 = vadd.f32 %v54, %v170
    %172 = vmatprep.mubr.bf16.mxu0 0
    %173 = vmatmul.mubr.bf16.gmra.mrb[0].mxu0 %v122
    %v174 = vpop.f32.mrb[0].mxu0
    %v175 = vadd.f32 %v50, %v174
    %v176 = vpop.f32.mrb[0].mxu0
    %v177 = vadd.f32 %v54, %v176
    %v178 = vpop.f32.mrb[0].mxu0
    %v179 = vadd.f32 %v50, %v178
    %v180 = vpop.f32.mrb[0].mxu0
    %v181 = vadd.f32 %v54, %v180
    %182 = vmatprep.mubr.bf16.mxu0 0
    %183 = vmatmul.mubr.bf16.gmra.mrb[0].mxu0 %v125
    %v184 = vpop.f32.mrb[0].mxu0
    %v185 = vadd.f32 %v50, %v184
    %v186 = vpop.f32.mrb[0].mxu0
    %v187 = vadd.f32 %v54, %v186
    %v188 = vpop.f32.mrb[0].mxu0
    %v189 = vadd.f32 %v50, %v188
    %v190 = vpop.f32.mrb[0].mxu0
    %v191 = vadd.f32 %v54, %v190
    %192 = vmatprep.mubr.bf16.mxu0 0
    %193 = vmatmul.mubr.bf16.gmra.mrb[0].mxu0 %v128
    %v194 = vpop.f32.mrb[0].mxu0
    %v195 = vadd.f32 %v50, %v194
    %v196 = vpop.f32.mrb[0].mxu0
    %v197 = vadd.f32 %v54, %v196
    %v198 = vpop.f32.mrb[0].mxu0
    %v199 = vadd.f32 %v50, %v198
    %v200 = vpop.f32.mrb[0].mxu0
    %v201 = vadd.f32 %v54, %v200
    %202 = vdwg.mxu0
    %v203 = vpack.c.bf16 %v165, %v165
    %v204 = vpack.c.bf16 %v167, %v167
    %v205 = vpack.c.bf16 %v169, %v169
    %v206 = vpack.c.bf16 %v171, %v171
    %v207 = vpack.c.bf16 %v175, %v175
    %v208 = vpack.c.bf16 %v177, %v177
    %v209 = vpack.c.bf16 %v179, %v179
    %v210 = vpack.c.bf16 %v181, %v181
    %v211 = vpack.c.bf16 %v185, %v185
    %v212 = vpack.c.bf16 %v187, %v187
    %v213 = vpack.c.bf16 %v189, %v189
    %v214 = vpack.c.bf16 %v191, %v191
    %v215 = vpack.c.bf16 %v195, %v195
    %v216 = vpack.c.bf16 %v197, %v197
    %v217 = vpack.c.bf16 %v199, %v199
    %v218 = vpack.c.bf16 %v201, %v201
    %v235 = vunpack.c.l.b16 %v203
    %v236 = vunpack.c.l.b16 %v204
    %v237 = vunpack.c.l.b16 %v205
    %v238 = vunpack.c.l.b16 %v206
    %v239 = vunpack.c.l.b16 %v207
    %v240 = vunpack.c.l.b16 %v208
    %v241 = vunpack.c.l.b16 %v209
    %v242 = vunpack.c.l.b16 %v210
    %v243 = vunpack.c.l.b16 %v211
    %v244 = vunpack.c.l.b16 %v212
    %v245 = vunpack.c.l.b16 %v213
    %v246 = vunpack.c.l.b16 %v214
    %v247 = vunpack.c.l.b16 %v215
    %v248 = vunpack.c.l.b16 %v216
    %v249 = vunpack.c.l.b16 %v217
    %v250 = vunpack.c.l.b16 %v218
    %v251 = vpack.c.b16 %v236, %v235
    %v252 = vpack.c.b16 %v238, %v237
    %v253 = vpack.c.b16 %v240, %v239
    %v254 = vpack.c.b16 %v242, %v241
    %v255 = vpack.c.b16 %v244, %v243
    %v256 = vpack.c.b16 %v246, %v245
    %v257 = vpack.c.b16 %v248, %v247
    %v258 = vpack.c.b16 %v250, %v249
    %267 = vst [vmem:[#allocation2] sm:$0xff] %v251
    %268 = vst [vmem:[#allocation2 + $0x8] sm:$0xff] %v252
    %269 = vst [vmem:[#allocation2 + $0x10] sm:$0xff] %v253
    %270 = vst [vmem:[#allocation2 + $0x18] sm:$0xff] %v254
    %271 = vst [vmem:[#allocation2 + $0x20] sm:$0xff] %v255
    %272 = vst [vmem:[#allocation2 + $0x28] sm:$0xff] %v256
    %273 = vst [vmem:[#allocation2 + $0x30] sm:$0xff] %v257
    %274 = vst [vmem:[#allocation2 + $0x38] sm:$0xff] %v258
    %275 = vst.msk [vmem:[#allocation3] sm:$0xff] %vm117, 0.0
    %276 = vst.msk [vmem:[#allocation4] sm:$0xff] %vm117, 0.0
    %v277 = vld [vmem:[%s2] sm:$0xff]
    %v278 = vld [vmem:[%s2 + $0x8] sm:$0xff]
    %v279 = vld [vmem:[%s2 + $0x10] sm:$0xff]
    %v280 = vld [vmem:[%s2 + $0x18] sm:$0xff]
    %v281 = vld [vmem:[%s2 + $0x20] sm:$0xff]
    %v282 = vld [vmem:[%s2 + $0x28] sm:$0xff]
    %v283 = vld [vmem:[%s2 + $0x30] sm:$0xff]
    %v284 = vld [vmem:[%s2 + $0x38] sm:$0xff]
    %v285 = vld [vmem:[#allocation3] sm:$0xff]
    %v286 = vpack.c.bf16 %v285, %v285
    %v295 = vunpack.c.l.b16 %v277
    %v296 = vunpack.c.h.b16 %v277
    %v297 = vunpack.c.l.b16 %v278
    %v298 = vunpack.c.h.b16 %v278
    %v299 = vunpack.c.l.b16 %v279
    %v300 = vunpack.c.h.b16 %v279
    %v301 = vunpack.c.l.b16 %v280
    %v302 = vunpack.c.h.b16 %v280
    %v303 = vunpack.c.l.b16 %v281
    %v304 = vunpack.c.h.b16 %v281
    %v305 = vunpack.c.l.b16 %v282
    %v306 = vunpack.c.h.b16 %v282
    %v307 = vunpack.c.l.b16 %v283
    %v308 = vunpack.c.h.b16 %v283
    %v309 = vunpack.c.l.b16 %v284
    %v310 = vunpack.c.h.b16 %v284
    %v311 = vpack.c.b16 %v297, %v295
    %v312 = vpack.c.b16 %v298, %v296
    %v313 = vpack.c.b16 %v301, %v299
    %v314 = vpack.c.b16 %v302, %v300
    %v315 = vpack.c.b16 %v305, %v303
    %v316 = vpack.c.b16 %v306, %v304
    %v317 = vpack.c.b16 %v309, %v307
    %v318 = vpack.c.b16 %v310, %v308
    %v328 = vsel %vm117, %v286, 0
    %330 = vmatprep.subr.bf16.mxu0 %v312
    %331 = vmatpush1.bf16.msra.mxu0 %v311
    %332 = vmatprep.subr.bf16.mxu0 %v314
    %333 = vmatpush1.bf16.msra.mxu0 %v313
    %334 = vmatprep.subr.bf16.mxu0 %v316
    %335 = vmatpush1.bf16.msra.mxu0 %v315
    %336 = vmatprep.subr.bf16.mxu0 %v318
    %337 = vmatpush1.bf16.msra.mxu0 %v317
    %338 = vmatprep.subr.bf16.mxu0 0
    %339 = vmatpush1.bf16.msra.mxu0 0
    %340 = vmatprep.subr.bf16.mxu0 0
    %341 = vmatpush1.bf16.msra.mxu0 0
    %342 = vmatprep.subr.bf16.mxu0 0
    %343 = vmatpush1.bf16.msra.mxu0 0
    %344 = vmatprep.subr.bf16.mxu0 0
    %345 = vmatpush1.bf16.msra.mxu0 0
    %346 = vmatprep.subr.bf16.mxu0 0
    %347 = vmatpush1.bf16.msra.mxu0 0
    %348 = vmatprep.subr.bf16.mxu0 0
    %349 = vmatpush1.bf16.msra.mxu0 0
    %350 = vmatprep.subr.bf16.mxu0 0
    %351 = vmatpush1.bf16.msra.mxu0 0
    %352 = vmatprep.subr.bf16.mxu0 0
    %353 = vmatpush1.bf16.msra.mxu0 0
    %354 = vmatprep.subr.bf16.mxu0 0
    %355 = vmatpush1.bf16.msra.mxu0 0
    %356 = vmatprep.subr.bf16.mxu0 0
    %357 = vmatpush1.bf16.msra.mxu0 0
    %358 = vmatprep.subr.bf16.mxu0 0
    %359 = vmatpush1.bf16.msra.mxu0 0
    %360 = vmatprep.subr.bf16.mxu0 0
    %361 = vmatpush1.bf16.msra.mxu0 0
    %362 = vmatprep.mubr.bf16.mxu0 0
    %363 = vmatmul.mubr.bf16.gmra.mrb[0].mxu0 %v328
    %v364 = vpop.f32.mrb[0].mxu0
    %v365 = vadd.f32 0.0, %v364
    %v366 = vpop.f32.mrb[0].mxu0
    %v367 = vadd.f32 0.0, %v366
    %v368 = vpop.f32.mrb[0].mxu0
    %v369 = vpop.f32.mrb[0].mxu0
    %370 = vdwg.mxu0
    %v371 = vld [vmem:[#allocation2] sm:$0xf]
    %v372 = vunpack.c.l.bf16 %v371
    %v373 = vadd.f32 %v365, %v372
    %s374 = scalar_lea.vmem [#allocation2], 56
    %v375 = vld [vmem:[%s374 + $0x4] sm:$0xf]
    %v376 = vunpack.c.l.bf16 %v375
    %v377 = vadd.f32 %v367, %v376
    %v378 = vld [vmem:[#allocation4] sm:$0xff]
    %v379 = vxor.u32 %v373, 2147483648
    %v380 = vmul.f32 %v379, 1.442695
    %v381 = vpow.pop %v380
    %v382 = vadd.f32 %v381, 1.0
    %v383 = vrcp.pop %v382
    %v384 = vmul.f32 1.0, %v383
    %v385 = vtanh.pop %v373
    %387 = vrot.lane.b32.xlu0 %v378, 32
    %v388 = vpop.permute.xlu0 %387
    %v390 = vmul.f32 %v384, %v388
    %392 = vrot.lane.b32.xlu0 %v385, 64
    %v393 = vpop.permute.xlu0 %392
    %v395 = vmul.f32 %v384, %v393
    %397 = vrot.lane.b32.xlu0 %v395, 32
    %v398 = vpop.permute.xlu0 %397
    %v400 = vadd.f32 %v390, %v398
    %v401 = vtanh.pop %v400
    %403 = vrot.lane.b32.xlu0 %v401, 64
    %v404 = vpop.permute.xlu0 %403
    %v406 = vmul.f32 %v384, %v404
    %v407 = vxor.u32 %v377, 2147483648
    %v408 = vmul.f32 %v407, 1.442695
    %v409 = vpow.pop %v408
    %v410 = vadd.f32 %v409, 1.0
    %v411 = vrcp.pop %v410
    %v412 = vmul.f32 1.0, %v411
    %v413 = vtanh.pop %v377
    %v414 = vmul.f32 %v412, %v378
    %416 = vrot.lane.b32.xlu0 %v413, 64
    %v417 = vpop.permute.xlu0 %416
    %v419 = vmul.f32 %v412, %v417
    %421 = vrot.lane.b32.xlu0 %v419, 32
    %v422 = vpop.permute.xlu0 %421
    %v424 = vadd.f32 %v414, %v422
    %v425 = vtanh.pop %v424
    %427 = vrot.lane.b32.xlu0 %v425, 64
    %v428 = vpop.permute.xlu0 %427
    %v430 = vmul.f32 %v412, %v428
    %432 = vrot.lane.b32.xlu0 %v406, 32
    %v433 = vpop.permute.xlu0 %432
    %vm435 = vcmask 261120
    %436 = vst.msk [vmem:[#allocation3] sm:$0xff] %vm435, %v433
    %438 = vrot.lane.b32.xlu0 %v430, 64
    %v439 = vpop.permute.xlu0 %438
    %vm441 = vcmask 523520
    %442 = vst.msk [vmem:[#allocation3] sm:$0xff] %vm441, %v439
    %444 = vrot.lane.b32.xlu0 %v400, 96
    %v445 = vpop.permute.xlu0 %444
    %447 = vst.msk [vmem:[#allocation4] sm:$0xff] %vm435, %v445
    %448 = vst.msk [vmem:[#allocation4] sm:$0xff] %vm441, %v424
    %v449 = vpack.c.bf16 %v406, %v406
    %v451 = vunpack.c.l.b16 %v449
    %v452 = vpack.c.b16 %v451, %v451
    %453 = vrot.lane.b32.xlu0 %v452, 32
    %v454 = vpop.permute.xlu0 %453
    %vm456 = vcmask 257024
    %457 = vst.msk [vmem:[#allocation5] sm:$0xf] %vm456, %v454
    %v458 = vpack.c.bf16 %v430, %v430
    %v460 = vunpack.c.l.b16 %v458
    %v461 = vpack.c.b16 %v460, %v460
    %462 = vrot.lane.b32.xlu0 %v461, 64
    %v463 = vpop.permute.xlu0 %462
    %s465 = scalar_lea.vmem [#allocation5], 28
    %vm466 = vcmask 519424
    %467 = vst.msk [vmem:[%s465] sm:$0xf] %vm466, %v463
    %v468 = vld [vmem:[#allocation3] sm:$0xff]
    %v469 = vpack.c.bf16 %v468, %v468
    %v471 = vsel %vm117, %v469, 0
    %473 = vmatprep.subr.bf16.mxu0 %v312
    %474 = vmatpush1.bf16.msra.mxu0 %v311
    %475 = vmatprep.subr.bf16.mxu0 %v314
    %476 = vmatpush1.bf16.msra.mxu0 %v313
    %477 = vmatprep.subr.bf16.mxu0 %v316
    %478 = vmatpush1.bf16.msra.mxu0 %v315
    %479 = vmatprep.subr.bf16.mxu0 %v318
    %480 = vmatpush1.bf16.msra.mxu0 %v317
    %481 = vmatprep.subr.bf16.mxu0 0
    %482 = vmatpush1.bf16.msra.mxu0 0
    %483 = vmatprep.subr.bf16.mxu0 0
    %484 = vmatpush1.bf16.msra.mxu0 0
    %485 = vmatprep.subr.bf16.mxu0 0
    %486 = vmatpush1.bf16.msra.mxu0 0
    %487 = vmatprep.subr.bf16.mxu0 0
    %488 = vmatpush1.bf16.msra.mxu0 0
    %489 = vmatprep.subr.bf16.mxu0 0
    %490 = vmatpush1.bf16.msra.mxu0 0
    %491 = vmatprep.subr.bf16.mxu0 0
    %492 = vmatpush1.bf16.msra.mxu0 0
    %493 = vmatprep.subr.bf16.mxu0 0
    %494 = vmatpush1.bf16.msra.mxu0 0
    %495 = vmatprep.subr.bf16.mxu0 0
    %496 = vmatpush1.bf16.msra.mxu0 0
    %497 = vmatprep.subr.bf16.mxu0 0
    %498 = vmatpush1.bf16.msra.mxu0 0
    %499 = vmatprep.subr.bf16.mxu0 0
    %500 = vmatpush1.bf16.msra.mxu0 0
    %501 = vmatprep.subr.bf16.mxu0 0
    %502 = vmatpush1.bf16.msra.mxu0 0
    %503 = vmatprep.subr.bf16.mxu0 0
    %504 = vmatpush1.bf16.msra.mxu0 0
    %505 = vmatprep.mubr.bf16.mxu0 0
    %506 = vmatmul.mubr.bf16.gmra.mrb[0].mxu0 %v471
    %v507 = vpop.f32.mrb[0].mxu0
    %v508 = vadd.f32 0.0, %v507
    %v509 = vpop.f32.mrb[0].mxu0
    %v510 = vadd.f32 0.0, %v509
    %v511 = vpop.f32.mrb[0].mxu0
    %v512 = vpop.f32.mrb[0].mxu0
    %513 = vdwg.mxu0
    %s514 = scalar_lea.vmem [#allocation2], 8
    %v515 = vld [vmem:[%s514] sm:$0xf]
    %v516 = vunpack.c.l.bf16 %v515
    %v517 = vadd.f32 %v508, %v516
    %s518 = scalar_lea.vmem [#allocation2], 48
    %v519 = vld [vmem:[%s518 + $0x4] sm:$0xf]
    %v520 = vunpack.c.l.bf16 %v519
    %v521 = vadd.f32 %v510, %v520
    %v522 = vld [vmem:[#allocation4] sm:$0xff]
    %v523 = vxor.u32 %v517, 2147483648
    %v524 = vmul.f32 %v523, 1.442695
    %v525 = vpow.pop %v524
    %v526 = vadd.f32 %v525, 1.0
    %v527 = vrcp.pop %v526
    %v528 = vmul.f32 1.0, %v527
    %v529 = vtanh.pop %v517
    %531 = vrot.lane.b32.xlu0 %v522, 32
    %v532 = vpop.permute.xlu0 %531
    %v534 = vmul.f32 %v528, %v532
    %536 = vrot.lane.b32.xlu0 %v529, 64
    %v537 = vpop.permute.xlu0 %536
    %v539 = vmul.f32 %v528, %v537
    %541 = vrot.lane.b32.xlu0 %v539, 32
    %v542 = vpop.permute.xlu0 %541
    %v544 = vadd.f32 %v534, %v542
    %v545 = vtanh.pop %v544
    %547 = vrot.lane.b32.xlu0 %v545, 64
    %v548 = vpop.permute.xlu0 %547
    %v550 = vmul.f32 %v528, %v548
    %v551 = vxor.u32 %v521, 2147483648
    %v552 = vmul.f32 %v551, 1.442695
    %v553 = vpow.pop %v552
    %v554 = vadd.f32 %v553, 1.0
    %v555 = vrcp.pop %v554
    %v556 = vmul.f32 1.0, %v555
    %v557 = vtanh.pop %v521
    %v558 = vmul.f32 %v556, %v522
    %560 = vrot.lane.b32.xlu0 %v557, 64
    %v561 = vpop.permute.xlu0 %560
    %v563 = vmul.f32 %v556, %v561
    %565 = vrot.lane.b32.xlu0 %v563, 32
    %v566 = vpop.permute.xlu0 %565
    %v568 = vadd.f32 %v558, %v566
    %v569 = vtanh.pop %v568
    %571 = vrot.lane.b32.xlu0 %v569, 64
    %v572 = vpop.permute.xlu0 %571
    %v574 = vmul.f32 %v556, %v572
    %576 = vrot.lane.b32.xlu0 %v550, 32
    %v577 = vpop.permute.xlu0 %576
    %579 = vst.msk [vmem:[#allocation3] sm:$0xff] %vm435, %v577
    %581 = vrot.lane.b32.xlu0 %v574, 64
    %v582 = vpop.permute.xlu0 %581
    %584 = vst.msk [vmem:[#allocation3] sm:$0xff] %vm441, %v582
    %586 = vrot.lane.b32.xlu0 %v544, 96
    %v587 = vpop.permute.xlu0 %586
    %589 = vst.msk [vmem:[#allocation4] sm:$0xff] %vm435, %v587
    %590 = vst.msk [vmem:[#allocation4] sm:$0xff] %vm441, %v568
    %v591 = vpack.c.bf16 %v550, %v550
    %v593 = vunpack.c.l.b16 %v591
    %v594 = vpack.c.b16 %v593, %v593
    %595 = vrot.lane.b32.xlu0 %v594, 32
    %v596 = vpop.permute.xlu0 %595
    %s598 = scalar_lea.vmem [#allocation5], 4
    %599 = vst.msk [vmem:[%s598] sm:$0xf] %vm456, %v596
    %v600 = vpack.c.bf16 %v574, %v574
    %v602 = vunpack.c.l.b16 %v600
    %v603 = vpack.c.b16 %v602, %v602
    %604 = vrot.lane.b32.xlu0 %v603, 64
    %v605 = vpop.permute.xlu0 %604
    %s607 = scalar_lea.vmem [#allocation5], 24
    %608 = vst.msk [vmem:[%s607] sm:$0xf] %vm466, %v605
    %v609 = vld [vmem:[#allocation3] sm:$0xff]
    %v610 = vpack.c.bf16 %v609, %v609
    %v612 = vsel %vm117, %v610, 0
    %614 = vmatprep.subr.bf16.mxu0 %v312
    %615 = vmatpush1.bf16.msra.mxu0 %v311
    %616 = vmatprep.subr.bf16.mxu0 %v314
    %617 = vmatpush1.bf16.msra.mxu0 %v313
    %618 = vmatprep.subr.bf16.mxu0 %v316
    %619 = vmatpush1.bf16.msra.mxu0 %v315
    %620 = vmatprep.subr.bf16.mxu0 %v318
    %621 = vmatpush1.bf16.msra.mxu0 %v317
    %622 = vmatprep.subr.bf16.mxu0 0
    %623 = vmatpush1.bf16.msra.mxu0 0
    %624 = vmatprep.subr.bf16.mxu0 0
    %625 = vmatpush1.bf16.msra.mxu0 0
    %626 = vmatprep.subr.bf16.mxu0 0
    %627 = vmatpush1.bf16.msra.mxu0 0
    %628 = vmatprep.subr.bf16.mxu0 0
    %629 = vmatpush1.bf16.msra.mxu0 0
    %630 = vmatprep.subr.bf16.mxu0 0
    %631 = vmatpush1.bf16.msra.mxu0 0
    %632 = vmatprep.subr.bf16.mxu0 0
    %633 = vmatpush1.bf16.msra.mxu0 0
    %634 = vmatprep.subr.bf16.mxu0 0
    %635 = vmatpush1.bf16.msra.mxu0 0
    %636 = vmatprep.subr.bf16.mxu0 0
    %637 = vmatpush1.bf16.msra.mxu0 0
    %638 = vmatprep.subr.bf16.mxu0 0
    %639 = vmatpush1.bf16.msra.mxu0 0
    %640 = vmatprep.subr.bf16.mxu0 0
    %641 = vmatpush1.bf16.msra.mxu0 0
    %642 = vmatprep.subr.bf16.mxu0 0
    %643 = vmatpush1.bf16.msra.mxu0 0
    %644 = vmatprep.subr.bf16.mxu0 0
    %645 = vmatpush1.bf16.msra.mxu0 0
    %646 = vmatprep.mubr.bf16.mxu0 0
    %647 = vmatmul.mubr.bf16.gmra.mrb[0].mxu0 %v612
    %v648 = vpop.f32.mrb[0].mxu0
    %v649 = vadd.f32 0.0, %v648
    %v650 = vpop.f32.mrb[0].mxu0
    %v651 = vadd.f32 0.0, %v650
    %v652 = vpop.f32.mrb[0].mxu0
    %v653 = vpop.f32.mrb[0].mxu0
    %654 = vdwg.mxu0
    %s655 = scalar_lea.vmem [#allocation2], 16
    %v656 = vld [vmem:[%s655] sm:$0xf]
    %v657 = vunpack.c.l.bf16 %v656
    %v658 = vadd.f32 %v649, %v657
    %s659 = scalar_lea.vmem [#allocation2], 40
    %v660 = vld [vmem:[%s659 + $0x4] sm:$0xf]
    %v661 = vunpack.c.l.bf16 %v660
    %v662 = vadd.f32 %v651, %v661
    %v663 = vld [vmem:[#allocation4] sm:$0xff]
    %v664 = vxor.u32 %v658, 2147483648
    %v665 = vmul.f32 %v664, 1.442695
    %v666 = vpow.pop %v665
    %v667 = vadd.f32 %v666, 1.0
    %v668 = vrcp.pop %v667
    %v669 = vmul.f32 1.0, %v668
    %v670 = vtanh.pop %v658
    %672 = vrot.lane.b32.xlu0 %v663, 32
    %v673 = vpop.permute.xlu0 %672
    %v675 = vmul.f32 %v669, %v673
    %677 = vrot.lane.b32.xlu0 %v670, 64
    %v678 = vpop.permute.xlu0 %677
    %v680 = vmul.f32 %v669, %v678
    %682 = vrot.lane.b32.xlu0 %v680, 32
    %v683 = vpop.permute.xlu0 %682
    %v685 = vadd.f32 %v675, %v683
    %v686 = vtanh.pop %v685
    %688 = vrot.lane.b32.xlu0 %v686, 64
    %v689 = vpop.permute.xlu0 %688
    %v691 = vmul.f32 %v669, %v689
    %v692 = vxor.u32 %v662, 2147483648
    %v693 = vmul.f32 %v692, 1.442695
    %v694 = vpow.pop %v693
    %v695 = vadd.f32 %v694, 1.0
    %v696 = vrcp.pop %v695
    %v697 = vmul.f32 1.0, %v696
    %v698 = vtanh.pop %v662
    %v699 = vmul.f32 %v697, %v663
    %701 = vrot.lane.b32.xlu0 %v698, 64
    %v702 = vpop.permute.xlu0 %701
    %v704 = vmul.f32 %v697, %v702
    %706 = vrot.lane.b32.xlu0 %v704, 32
    %v707 = vpop.permute.xlu0 %706
    %v709 = vadd.f32 %v699, %v707
    %v710 = vtanh.pop %v709
    %712 = vrot.lane.b32.xlu0 %v710, 64
    %v713 = vpop.permute.xlu0 %712
    %v715 = vmul.f32 %v697, %v713
    %717 = vrot.lane.b32.xlu0 %v691, 32
    %v718 = vpop.permute.xlu0 %717
    %720 = vst.msk [vmem:[#allocation3] sm:$0xff] %vm435, %v718
    %722 = vrot.lane.b32.xlu0 %v715, 64
    %v723 = vpop.permute.xlu0 %722
    %725 = vst.msk [vmem:[#allocation3] sm:$0xff] %vm441, %v723
    %727 = vrot.lane.b32.xlu0 %v685, 96
    %v728 = vpop.permute.xlu0 %727
    %730 = vst.msk [vmem:[#allocation4] sm:$0xff] %vm435, %v728
    %731 = vst.msk [vmem:[#allocation4] sm:$0xff] %vm441, %v709
    %v732 = vpack.c.bf16 %v691, %v691
    %v734 = vunpack.c.l.b16 %v732
    %v735 = vpack.c.b16 %v734, %v734
    %736 = vrot.lane.b32.xlu0 %v735, 32
    %v737 = vpop.permute.xlu0 %736
    %s739 = scalar_lea.vmem [#allocation5], 8
    %740 = vst.msk [vmem:[%s739] sm:$0xf] %vm456, %v737
    %v741 = vpack.c.bf16 %v715, %v715
    %v743 = vunpack.c.l.b16 %v741
    %v744 = vpack.c.b16 %v743, %v743
    %745 = vrot.lane.b32.xlu0 %v744, 64
    %v746 = vpop.permute.xlu0 %745
    %s748 = scalar_lea.vmem [#allocation5], 20
    %749 = vst.msk [vmem:[%s748] sm:$0xf] %vm466, %v746
    %v750 = vld [vmem:[#allocation3] sm:$0xff]
    %v751 = vpack.c.bf16 %v750, %v750
    %v753 = vsel %vm117, %v751, 0
    %755 = vmatprep.subr.bf16.mxu0 %v312
    %756 = vmatpush1.bf16.msra.mxu0 %v311
    %757 = vmatprep.subr.bf16.mxu0 %v314
    %758 = vmatpush1.bf16.msra.mxu0 %v313
    %759 = vmatprep.subr.bf16.mxu0 %v316
    %760 = vmatpush1.bf16.msra.mxu0 %v315
    %761 = vmatprep.subr.bf16.mxu0 %v318
    %762 = vmatpush1.bf16.msra.mxu0 %v317
    %763 = vmatprep.subr.bf16.mxu0 0
    %764 = vmatpush1.bf16.msra.mxu0 0
    %765 = vmatprep.subr.bf16.mxu0 0
    %766 = vmatpush1.bf16.msra.mxu0 0
    %767 = vmatprep.subr.bf16.mxu0 0
    %768 = vmatpush1.bf16.msra.mxu0 0
    %769 = vmatprep.subr.bf16.mxu0 0
    %770 = vmatpush1.bf16.msra.mxu0 0
    %771 = vmatprep.subr.bf16.mxu0 0
    %772 = vmatpush1.bf16.msra.mxu0 0
    %773 = vmatprep.subr.bf16.mxu0 0
    %774 = vmatpush1.bf16.msra.mxu0 0
    %775 = vmatprep.subr.bf16.mxu0 0
    %776 = vmatpush1.bf16.msra.mxu0 0
    %777 = vmatprep.subr.bf16.mxu0 0
    %778 = vmatpush1.bf16.msra.mxu0 0
    %779 = vmatprep.subr.bf16.mxu0 0
    %780 = vmatpush1.bf16.msra.mxu0 0
    %781 = vmatprep.subr.bf16.mxu0 0
    %782 = vmatpush1.bf16.msra.mxu0 0
    %783 = vmatprep.subr.bf16.mxu0 0
    %784 = vmatpush1.bf16.msra.mxu0 0
    %785 = vmatprep.subr.bf16.mxu0 0
    %786 = vmatpush1.bf16.msra.mxu0 0
    %787 = vmatprep.mubr.bf16.mxu0 0
    %788 = vmatmul.mubr.bf16.gmra.mrb[0].mxu0 %v753
    %v789 = vpop.f32.mrb[0].mxu0
    %v790 = vadd.f32 0.0, %v789
    %v791 = vpop.f32.mrb[0].mxu0
    %v792 = vadd.f32 0.0, %v791
    %v793 = vpop.f32.mrb[0].mxu0
    %v794 = vpop.f32.mrb[0].mxu0
    %795 = vdwg.mxu0
    %s796 = scalar_lea.vmem [#allocation2], 24
    %v797 = vld [vmem:[%s796] sm:$0xf]
    %v798 = vunpack.c.l.bf16 %v797
    %v799 = vadd.f32 %v790, %v798
    %s800 = scalar_lea.vmem [#allocation2], 32
    %v801 = vld [vmem:[%s800 + $0x4] sm:$0xf]
    %v802 = vunpack.c.l.bf16 %v801
    %v803 = vadd.f32 %v792, %v802
    %v804 = vld [vmem:[#allocation4] sm:$0xff]
    %v805 = vxor.u32 %v799, 2147483648
    %v806 = vmul.f32 %v805, 1.442695
    %v807 = vpow.pop %v806
    %v808 = vadd.f32 %v807, 1.0
    %v809 = vrcp.pop %v808
    %v810 = vmul.f32 1.0, %v809
    %v811 = vtanh.pop %v799
    %813 = vrot.lane.b32.xlu0 %v804, 32
    %v814 = vpop.permute.xlu0 %813
    %v816 = vmul.f32 %v810, %v814
    %818 = vrot.lane.b32.xlu0 %v811, 64
    %v819 = vpop.permute.xlu0 %818
    %v821 = vmul.f32 %v810, %v819
    %823 = vrot.lane.b32.xlu0 %v821, 32
    %v824 = vpop.permute.xlu0 %823
    %v826 = vadd.f32 %v816, %v824
    %v827 = vtanh.pop %v826
    %829 = vrot.lane.b32.xlu0 %v827, 64
    %v830 = vpop.permute.xlu0 %829
    %v832 = vmul.f32 %v810, %v830
    %v833 = vxor.u32 %v803, 2147483648
    %v834 = vmul.f32 %v833, 1.442695
    %v835 = vpow.pop %v834
    %v836 = vadd.f32 %v835, 1.0
    %v837 = vrcp.pop %v836
    %v838 = vmul.f32 1.0, %v837
    %v839 = vtanh.pop %v803
    %v840 = vmul.f32 %v838, %v804
    %842 = vrot.lane.b32.xlu0 %v839, 64
    %v843 = vpop.permute.xlu0 %842
    %v845 = vmul.f32 %v838, %v843
    %847 = vrot.lane.b32.xlu0 %v845, 32
    %v848 = vpop.permute.xlu0 %847
    %v850 = vadd.f32 %v840, %v848
    %v851 = vtanh.pop %v850
    %853 = vrot.lane.b32.xlu0 %v851, 64
    %v854 = vpop.permute.xlu0 %853
    %v856 = vmul.f32 %v838, %v854
    %858 = vrot.lane.b32.xlu0 %v832, 32
    %v859 = vpop.permute.xlu0 %858
    %861 = vst.msk [vmem:[#allocation3] sm:$0xff] %vm435, %v859
    %863 = vrot.lane.b32.xlu0 %v856, 64
    %v864 = vpop.permute.xlu0 %863
    %866 = vst.msk [vmem:[#allocation3] sm:$0xff] %vm441, %v864
    %868 = vrot.lane.b32.xlu0 %v826, 96
    %v869 = vpop.permute.xlu0 %868
    %871 = vst.msk [vmem:[#allocation4] sm:$0xff] %vm435, %v869
    %872 = vst.msk [vmem:[#allocation4] sm:$0xff] %vm441, %v850
    %v873 = vpack.c.bf16 %v832, %v832
    %v875 = vunpack.c.l.b16 %v873
    %v876 = vpack.c.b16 %v875, %v875
    %877 = vrot.lane.b32.xlu0 %v876, 32
    %v878 = vpop.permute.xlu0 %877
    %s880 = scalar_lea.vmem [#allocation5], 12
    %881 = vst.msk [vmem:[%s880] sm:$0xf] %vm456, %v878
    %v882 = vpack.c.bf16 %v856, %v856
    %v884 = vunpack.c.l.b16 %v882
    %v885 = vpack.c.b16 %v884, %v884
    %886 = vrot.lane.b32.xlu0 %v885, 64
    %v887 = vpop.permute.xlu0 %886
    %s889 = scalar_lea.vmem [#allocation5], 16
    %890 = vst.msk [vmem:[%s889] sm:$0xf] %vm466, %v887
    %v891 = vld [vmem:[#allocation3] sm:$0xff]
    %v892 = vpack.c.bf16 %v891, %v891
    %v894 = vsel %vm117, %v892, 0
    %896 = vmatprep.subr.bf16.mxu0 %v312
    %897 = vmatpush1.bf16.msra.mxu0 %v311
    %898 = vmatprep.subr.bf16.mxu0 %v314
    %899 = vmatpush1.bf16.msra.mxu0 %v313
    %900 = vmatprep.subr.bf16.mxu0 %v316
    %901 = vmatpush1.bf16.msra.mxu0 %v315
    %902 = vmatprep.subr.bf16.mxu0 %v318
    %903 = vmatpush1.bf16.msra.mxu0 %v317
    %904 = vmatprep.subr.bf16.mxu0 0
    %905 = vmatpush1.bf16.msra.mxu0 0
    %906 = vmatprep.subr.bf16.mxu0 0
    %907 = vmatpush1.bf16.msra.mxu0 0
    %908 = vmatprep.subr.bf16.mxu0 0
    %909 = vmatpush1.bf16.msra.mxu0 0
    %910 = vmatprep.subr.bf16.mxu0 0
    %911 = vmatpush1.bf16.msra.mxu0 0
    %912 = vmatprep.subr.bf16.mxu0 0
    %913 = vmatpush1.bf16.msra.mxu0 0
    %914 = vmatprep.subr.bf16.mxu0 0
    %915 = vmatpush1.bf16.msra.mxu0 0
    %916 = vmatprep.subr.bf16.mxu0 0
    %917 = vmatpush1.bf16.msra.mxu0 0
    %918 = vmatprep.subr.bf16.mxu0 0
    %919 = vmatpush1.bf16.msra.mxu0 0
    %920 = vmatprep.subr.bf16.mxu0 0
    %921 = vmatpush1.bf16.msra.mxu0 0
    %922 = vmatprep.subr.bf16.mxu0 0
    %923 = vmatpush1.bf16.msra.mxu0 0
    %924 = vmatprep.subr.bf16.mxu0 0
    %925 = vmatpush1.bf16.msra.mxu0 0
    %926 = vmatprep.subr.bf16.mxu0 0
    %927 = vmatpush1.bf16.msra.mxu0 0
    %928 = vmatprep.mubr.bf16.mxu0 0
    %929 = vmatmul.mubr.bf16.gmra.mrb[0].mxu0 %v894
    %v930 = vpop.f32.mrb[0].mxu0
    %v931 = vadd.f32 0.0, %v930
    %v932 = vpop.f32.mrb[0].mxu0
    %v933 = vadd.f32 0.0, %v932
    %v934 = vpop.f32.mrb[0].mxu0
    %v935 = vpop.f32.mrb[0].mxu0
    %936 = vdwg.mxu0
    %v937 = vld [vmem:[%s800] sm:$0xf]
    %v938 = vunpack.c.l.bf16 %v937
    %v939 = vadd.f32 %v931, %v938
    %v940 = vld [vmem:[%s796 + $0x4] sm:$0xf]
    %v941 = vunpack.c.l.bf16 %v940
    %v942 = vadd.f32 %v933, %v941
    %v943 = vld [vmem:[#allocation4] sm:$0xff]
    %v944 = vxor.u32 %v939, 2147483648
    %v945 = vmul.f32 %v944, 1.442695
    %v946 = vpow.pop %v945
    %v947 = vadd.f32 %v946, 1.0
    %v948 = vrcp.pop %v947
    %v949 = vmul.f32 1.0, %v948
    %v950 = vtanh.pop %v939
    %952 = vrot.lane.b32.xlu0 %v943, 32
    %v953 = vpop.permute.xlu0 %952
    %v955 = vmul.f32 %v949, %v953
    %957 = vrot.lane.b32.xlu0 %v950, 64
    %v958 = vpop.permute.xlu0 %957
    %v960 = vmul.f32 %v949, %v958
    %962 = vrot.lane.b32.xlu0 %v960, 32
    %v963 = vpop.permute.xlu0 %962
    %v965 = vadd.f32 %v955, %v963
    %v966 = vtanh.pop %v965
    %968 = vrot.lane.b32.xlu0 %v966, 64
    %v969 = vpop.permute.xlu0 %968
    %v971 = vmul.f32 %v949, %v969
    %v972 = vxor.u32 %v942, 2147483648
    %v973 = vmul.f32 %v972, 1.442695
    %v974 = vpow.pop %v973
    %v975 = vadd.f32 %v974, 1.0
    %v976 = vrcp.pop %v975
    %v977 = vmul.f32 1.0, %v976
    %v978 = vtanh.pop %v942
    %v979 = vmul.f32 %v977, %v943
    %981 = vrot.lane.b32.xlu0 %v978, 64
    %v982 = vpop.permute.xlu0 %981
    %v984 = vmul.f32 %v977, %v982
    %986 = vrot.lane.b32.xlu0 %v984, 32
    %v987 = vpop.permute.xlu0 %986
    %v989 = vadd.f32 %v979, %v987
    %v990 = vtanh.pop %v989
    %992 = vrot.lane.b32.xlu0 %v990, 64
    %v993 = vpop.permute.xlu0 %992
    %v995 = vmul.f32 %v977, %v993
    %997 = vrot.lane.b32.xlu0 %v971, 32
    %v998 = vpop.permute.xlu0 %997
    %1000 = vst.msk [vmem:[#allocation3] sm:$0xff] %vm435, %v998
    %1002 = vrot.lane.b32.xlu0 %v995, 64
    %v1003 = vpop.permute.xlu0 %1002
    %1005 = vst.msk [vmem:[#allocation3] sm:$0xff] %vm441, %v1003
    %1007 = vrot.lane.b32.xlu0 %v965, 96
    %v1008 = vpop.permute.xlu0 %1007
    %1010 = vst.msk [vmem:[#allocation4] sm:$0xff] %vm435, %v1008
    %1011 = vst.msk [vmem:[#allocation4] sm:$0xff] %vm441, %v989
    %v1012 = vpack.c.bf16 %v971, %v971
    %v1014 = vunpack.c.l.b16 %v1012
    %v1015 = vpack.c.b16 %v1014, %v1014
    %1016 = vrot.lane.b32.xlu0 %v1015, 32
    %v1017 = vpop.permute.xlu0 %1016
    %1019 = vst.msk [vmem:[%s889] sm:$0xf] %vm456, %v1017
    %v1020 = vpack.c.bf16 %v995, %v995
    %v1022 = vunpack.c.l.b16 %v1020
    %v1023 = vpack.c.b16 %v1022, %v1022
    %1024 = vrot.lane.b32.xlu0 %v1023, 64
    %v1025 = vpop.permute.xlu0 %1024
    %1027 = vst.msk [vmem:[%s880] sm:$0xf] %vm466, %v1025
    %v1028 = vld [vmem:[#allocation3] sm:$0xff]
    %v1029 = vpack.c.bf16 %v1028, %v1028
    %v1031 = vsel %vm117, %v1029, 0
    %1033 = vmatprep.subr.bf16.mxu0 %v312
    %1034 = vmatpush1.bf16.msra.mxu0 %v311
    %1035 = vmatprep.subr.bf16.mxu0 %v314
    %1036 = vmatpush1.bf16.msra.mxu0 %v313
    %1037 = vmatprep.subr.bf16.mxu0 %v316
    %1038 = vmatpush1.bf16.msra.mxu0 %v315
    %1039 = vmatprep.subr.bf16.mxu0 %v318
    %1040 = vmatpush1.bf16.msra.mxu0 %v317
    %1041 = vmatprep.subr.bf16.mxu0 0
    %1042 = vmatpush1.bf16.msra.mxu0 0
    %1043 = vmatprep.subr.bf16.mxu0 0
    %1044 = vmatpush1.bf16.msra.mxu0 0
    %1045 = vmatprep.subr.bf16.mxu0 0
    %1046 = vmatpush1.bf16.msra.mxu0 0
    %1047 = vmatprep.subr.bf16.mxu0 0
    %1048 = vmatpush1.bf16.msra.mxu0 0
    %1049 = vmatprep.subr.bf16.mxu0 0
    %1050 = vmatpush1.bf16.msra.mxu0 0
    %1051 = vmatprep.subr.bf16.mxu0 0
    %1052 = vmatpush1.bf16.msra.mxu0 0
    %1053 = vmatprep.subr.bf16.mxu0 0
    %1054 = vmatpush1.bf16.msra.mxu0 0
    %1055 = vmatprep.subr.bf16.mxu0 0
    %1056 = vmatpush1.bf16.msra.mxu0 0
    %1057 = vmatprep.subr.bf16.mxu0 0
    %1058 = vmatpush1.bf16.msra.mxu0 0
    %1059 = vmatprep.subr.bf16.mxu0 0
    %1060 = vmatpush1.bf16.msra.mxu0 0
    %1061 = vmatprep.subr.bf16.mxu0 0
    %1062 = vmatpush1.bf16.msra.mxu0 0
    %1063 = vmatprep.subr.bf16.mxu0 0
    %1064 = vmatpush1.bf16.msra.mxu0 0
    %1065 = vmatprep.mubr.bf16.mxu0 0
    %1066 = vmatmul.mubr.bf16.gmra.mrb[0].mxu0 %v1031
    %v1067 = vpop.f32.mrb[0].mxu0
    %v1068 = vadd.f32 0.0, %v1067
    %v1069 = vpop.f32.mrb[0].mxu0
    %v1070 = vadd.f32 0.0, %v1069
    %v1071 = vpop.f32.mrb[0].mxu0
    %v1072 = vpop.f32.mrb[0].mxu0
    %1073 = vdwg.mxu0
    %v1074 = vld [vmem:[%s659] sm:$0xf]
    %v1075 = vunpack.c.l.bf16 %v1074
    %v1076 = vadd.f32 %v1068, %v1075
    %v1077 = vld [vmem:[%s655 + $0x4] sm:$0xf]
    %v1078 = vunpack.c.l.bf16 %v1077
    %v1079 = vadd.f32 %v1070, %v1078
    %v1080 = vld [vmem:[#allocation4] sm:$0xff]
    %v1081 = vxor.u32 %v1076, 2147483648
    %v1082 = vmul.f32 %v1081, 1.442695
    %v1083 = vpow.pop %v1082
    %v1084 = vadd.f32 %v1083, 1.0
    %v1085 = vrcp.pop %v1084
    %v1086 = vmul.f32 1.0, %v1085
    %v1087 = vtanh.pop %v1076
    %1089 = vrot.lane.b32.xlu0 %v1080, 32
    %v1090 = vpop.permute.xlu0 %1089
    %v1092 = vmul.f32 %v1086, %v1090
    %1094 = vrot.lane.b32.xlu0 %v1087, 64
    %v1095 = vpop.permute.xlu0 %1094
    %v1097 = vmul.f32 %v1086, %v1095
    %1099 = vrot.lane.b32.xlu0 %v1097, 32
    %v1100 = vpop.permute.xlu0 %1099
    %v1102 = vadd.f32 %v1092, %v1100
    %v1103 = vtanh.pop %v1102
    %1105 = vrot.lane.b32.xlu0 %v1103, 64
    %v1106 = vpop.permute.xlu0 %1105
    %v1108 = vmul.f32 %v1086, %v1106
    %v1109 = vxor.u32 %v1079, 2147483648
    %v1110 = vmul.f32 %v1109, 1.442695
    %v1111 = vpow.pop %v1110
    %v1112 = vadd.f32 %v1111, 1.0
    %v1113 = vrcp.pop %v1112
    %v1114 = vmul.f32 1.0, %v1113
    %v1115 = vtanh.pop %v1079
    %v1116 = vmul.f32 %v1114, %v1080
    %1118 = vrot.lane.b32.xlu0 %v1115, 64
    %v1119 = vpop.permute.xlu0 %1118
    %v1121 = vmul.f32 %v1114, %v1119
    %1123 = vrot.lane.b32.xlu0 %v1121, 32
    %v1124 = vpop.permute.xlu0 %1123
    %v1126 = vadd.f32 %v1116, %v1124
    %v1127 = vtanh.pop %v1126
    %1129 = vrot.lane.b32.xlu0 %v1127, 64
    %v1130 = vpop.permute.xlu0 %1129
    %v1132 = vmul.f32 %v1114, %v1130
    %1134 = vrot.lane.b32.xlu0 %v1108, 32
    %v1135 = vpop.permute.xlu0 %1134
    %1137 = vst.msk [vmem:[#allocation3] sm:$0xff] %vm435, %v1135
    %1139 = vrot.lane.b32.xlu0 %v1132, 64
    %v1140 = vpop.permute.xlu0 %1139
    %1142 = vst.msk [vmem:[#allocation3] sm:$0xff] %vm441, %v1140
    %1144 = vrot.lane.b32.xlu0 %v1102, 96
    %v1145 = vpop.permute.xlu0 %1144
    %1147 = vst.msk [vmem:[#allocation4] sm:$0xff] %vm435, %v1145
    %1148 = vst.msk [vmem:[#allocation4] sm:$0xff] %vm441, %v1126
    %v1149 = vpack.c.bf16 %v1108, %v1108
    %v1151 = vunpack.c.l.b16 %v1149
    %v1152 = vpack.c.b16 %v1151, %v1151
    %1153 = vrot.lane.b32.xlu0 %v1152, 32
    %v1154 = vpop.permute.xlu0 %1153
    %1156 = vst.msk [vmem:[%s748] sm:$0xf] %vm456, %v1154
    %v1157 = vpack.c.bf16 %v1132, %v1132
    %v1159 = vunpack.c.l.b16 %v1157
    %v1160 = vpack.c.b16 %v1159, %v1159
    %1161 = vrot.lane.b32.xlu0 %v1160, 64
    %v1162 = vpop.permute.xlu0 %1161
    %1164 = vst.msk [vmem:[%s739] sm:$0xf] %vm466, %v1162
    %v1165 = vld [vmem:[#allocation3] sm:$0xff]
    %v1166 = vpack.c.bf16 %v1165, %v1165
    %v1168 = vsel %vm117, %v1166, 0
    %1170 = vmatprep.subr.bf16.mxu0 %v312
    %1171 = vmatpush1.bf16.msra.mxu0 %v311
    %1172 = vmatprep.subr.bf16.mxu0 %v314
    %1173 = vmatpush1.bf16.msra.mxu0 %v313
    %1174 = vmatprep.subr.bf16.mxu0 %v316
    %1175 = vmatpush1.bf16.msra.mxu0 %v315
    %1176 = vmatprep.subr.bf16.mxu0 %v318
    %1177 = vmatpush1.bf16.msra.mxu0 %v317
    %1178 = vmatprep.subr.bf16.mxu0 0
    %1179 = vmatpush1.bf16.msra.mxu0 0
    %1180 = vmatprep.subr.bf16.mxu0 0
    %1181 = vmatpush1.bf16.msra.mxu0 0
    %1182 = vmatprep.subr.bf16.mxu0 0
    %1183 = vmatpush1.bf16.msra.mxu0 0
    %1184 = vmatprep.subr.bf16.mxu0 0
    %1185 = vmatpush1.bf16.msra.mxu0 0
    %1186 = vmatprep.subr.bf16.mxu0 0
    %1187 = vmatpush1.bf16.msra.mxu0 0
    %1188 = vmatprep.subr.bf16.mxu0 0
    %1189 = vmatpush1.bf16.msra.mxu0 0
    %1190 = vmatprep.subr.bf16.mxu0 0
    %1191 = vmatpush1.bf16.msra.mxu0 0
    %1192 = vmatprep.subr.bf16.mxu0 0
    %1193 = vmatpush1.bf16.msra.mxu0 0
    %1194 = vmatprep.subr.bf16.mxu0 0
    %1195 = vmatpush1.bf16.msra.mxu0 0
    %1196 = vmatprep.subr.bf16.mxu0 0
    %1197 = vmatpush1.bf16.msra.mxu0 0
    %1198 = vmatprep.subr.bf16.mxu0 0
    %1199 = vmatpush1.bf16.msra.mxu0 0
    %1200 = vmatprep.subr.bf16.mxu0 0
    %1201 = vmatpush1.bf16.msra.mxu0 0
    %1202 = vmatprep.mubr.bf16.mxu0 0
    %1203 = vmatmul.mubr.bf16.gmra.mrb[0].mxu0 %v1168
    %v1204 = vpop.f32.mrb[0].mxu0
    %v1205 = vadd.f32 0.0, %v1204
    %v1206 = vpop.f32.mrb[0].mxu0
    %v1207 = vadd.f32 0.0, %v1206
    %v1208 = vpop.f32.mrb[0].mxu0
    %v1209 = vpop.f32.mrb[0].mxu0
    %1210 = vdwg.mxu0
    %v1211 = vld [vmem:[%s518] sm:$0xf]
    %v1212 = vunpack.c.l.bf16 %v1211
    %v1213 = vadd.f32 %v1205, %v1212
    %v1214 = vld [vmem:[%s514 + $0x4] sm:$0xf]
    %v1215 = vunpack.c.l.bf16 %v1214
    %v1216 = vadd.f32 %v1207, %v1215
    %v1217 = vld [vmem:[#allocation4] sm:$0xff]
    %v1218 = vxor.u32 %v1213, 2147483648
    %v1219 = vmul.f32 %v1218, 1.442695
    %v1220 = vpow.pop %v1219
    %v1221 = vadd.f32 %v1220, 1.0
    %v1222 = vrcp.pop %v1221
    %v1223 = vmul.f32 1.0, %v1222
    %v1224 = vtanh.pop %v1213
    %1226 = vrot.lane.b32.xlu0 %v1217, 32
    %v1227 = vpop.permute.xlu0 %1226
    %v1229 = vmul.f32 %v1223, %v1227
    %1231 = vrot.lane.b32.xlu0 %v1224, 64
    %v1232 = vpop.permute.xlu0 %1231
    %v1234 = vmul.f32 %v1223, %v1232
    %1236 = vrot.lane.b32.xlu0 %v1234, 32
    %v1237 = vpop.permute.xlu0 %1236
    %v1239 = vadd.f32 %v1229, %v1237
    %v1240 = vtanh.pop %v1239
    %1242 = vrot.lane.b32.xlu0 %v1240, 64
    %v1243 = vpop.permute.xlu0 %1242
    %v1245 = vmul.f32 %v1223, %v1243
    %v1246 = vxor.u32 %v1216, 2147483648
    %v1247 = vmul.f32 %v1246, 1.442695
    %v1248 = vpow.pop %v1247
    %v1249 = vadd.f32 %v1248, 1.0
    %v1250 = vrcp.pop %v1249
    %v1251 = vmul.f32 1.0, %v1250
    %v1252 = vtanh.pop %v1216
    %v1253 = vmul.f32 %v1251, %v1217
    %1255 = vrot.lane.b32.xlu0 %v1252, 64
    %v1256 = vpop.permute.xlu0 %1255
    %v1258 = vmul.f32 %v1251, %v1256
    %1260 = vrot.lane.b32.xlu0 %v1258, 32
    %v1261 = vpop.permute.xlu0 %1260
    %v1263 = vadd.f32 %v1253, %v1261
    %v1264 = vtanh.pop %v1263
    %1266 = vrot.lane.b32.xlu0 %v1264, 64
    %v1267 = vpop.permute.xlu0 %1266
    %v1269 = vmul.f32 %v1251, %v1267
    %1271 = vrot.lane.b32.xlu0 %v1245, 32
    %v1272 = vpop.permute.xlu0 %1271
    %1274 = vst.msk [vmem:[#allocation3] sm:$0xff] %vm435, %v1272
    %1276 = vrot.lane.b32.xlu0 %v1269, 64
    %v1277 = vpop.permute.xlu0 %1276
    %1279 = vst.msk [vmem:[#allocation3] sm:$0xff] %vm441, %v1277
    %1281 = vrot.lane.b32.xlu0 %v1239, 96
    %v1282 = vpop.permute.xlu0 %1281
    %1284 = vst.msk [vmem:[#allocation4] sm:$0xff] %vm435, %v1282
    %1285 = vst.msk [vmem:[#allocation4] sm:$0xff] %vm441, %v1263
    %v1286 = vpack.c.bf16 %v1245, %v1245
    %v1288 = vunpack.c.l.b16 %v1286
    %v1289 = vpack.c.b16 %v1288, %v1288
    %1290 = vrot.lane.b32.xlu0 %v1289, 32
    %v1291 = vpop.permute.xlu0 %1290
    %1293 = vst.msk [vmem:[%s607] sm:$0xf] %vm456, %v1291
    %v1294 = vpack.c.bf16 %v1269, %v1269
    %v1296 = vunpack.c.l.b16 %v1294
    %v1297 = vpack.c.b16 %v1296, %v1296
    %1298 = vrot.lane.b32.xlu0 %v1297, 64
    %v1299 = vpop.permute.xlu0 %1298
    %1301 = vst.msk [vmem:[%s598] sm:$0xf] %vm466, %v1299
    %v1302 = vld [vmem:[#allocation3] sm:$0xff]
    %v1303 = vpack.c.bf16 %v1302, %v1302
    %v1305 = vsel %vm117, %v1303, 0
    %1307 = vmatprep.subr.bf16.mxu0 %v312
    %1308 = vmatpush1.bf16.msra.mxu0 %v311
    %1309 = vmatprep.subr.bf16.mxu0 %v314
    %1310 = vmatpush1.bf16.msra.mxu0 %v313
    %1311 = vmatprep.subr.bf16.mxu0 %v316
    %1312 = vmatpush1.bf16.msra.mxu0 %v315
    %1313 = vmatprep.subr.bf16.mxu0 %v318
    %1314 = vmatpush1.bf16.msra.mxu0 %v317
    %1315 = vmatprep.subr.bf16.mxu0 0
    %1316 = vmatpush1.bf16.msra.mxu0 0
    %1317 = vmatprep.subr.bf16.mxu0 0
    %1318 = vmatpush1.bf16.msra.mxu0 0
    %1319 = vmatprep.subr.bf16.mxu0 0
    %1320 = vmatpush1.bf16.msra.mxu0 0
    %1321 = vmatprep.subr.bf16.mxu0 0
    %1322 = vmatpush1.bf16.msra.mxu0 0
    %1323 = vmatprep.subr.bf16.mxu0 0
    %1324 = vmatpush1.bf16.msra.mxu0 0
    %1325 = vmatprep.subr.bf16.mxu0 0
    %1326 = vmatpush1.bf16.msra.mxu0 0
    %1327 = vmatprep.subr.bf16.mxu0 0
    %1328 = vmatpush1.bf16.msra.mxu0 0
    %1329 = vmatprep.subr.bf16.mxu0 0
    %1330 = vmatpush1.bf16.msra.mxu0 0
    %1331 = vmatprep.subr.bf16.mxu0 0
    %1332 = vmatpush1.bf16.msra.mxu0 0
    %1333 = vmatprep.subr.bf16.mxu0 0
    %1334 = vmatpush1.bf16.msra.mxu0 0
    %1335 = vmatprep.subr.bf16.mxu0 0
    %1336 = vmatpush1.bf16.msra.mxu0 0
    %1337 = vmatprep.subr.bf16.mxu0 0
    %1338 = vmatpush1.bf16.msra.mxu0 0
    %1339 = vmatprep.mubr.bf16.mxu0 0
    %1340 = vmatmul.mubr.bf16.gmra.mrb[0].mxu0 %v1305
    %v1341 = vpop.f32.mrb[0].mxu0
    %v1342 = vadd.f32 0.0, %v1341
    %v1343 = vpop.f32.mrb[0].mxu0
    %v1344 = vadd.f32 0.0, %v1343
    %v1345 = vpop.f32.mrb[0].mxu0
    %v1346 = vpop.f32.mrb[0].mxu0
    %1347 = vdwg.mxu0
    %v1348 = vld [vmem:[%s374] sm:$0xf]
    %v1349 = vunpack.c.l.bf16 %v1348
    %v1350 = vadd.f32 %v1342, %v1349
    %v1351 = vld [vmem:[#allocation2 + $0x4] sm:$0xf]
    %v1352 = vunpack.c.l.bf16 %v1351
    %v1353 = vadd.f32 %v1344, %v1352
    %v1354 = vld [vmem:[#allocation4] sm:$0xff]
    %v1355 = vxor.u32 %v1350, 2147483648
    %v1356 = vmul.f32 %v1355, 1.442695
    %v1357 = vpow.pop %v1356
    %v1358 = vadd.f32 %v1357, 1.0
    %v1359 = vrcp.pop %v1358
    %v1360 = vmul.f32 1.0, %v1359
    %v1361 = vtanh.pop %v1350
    %1363 = vrot.lane.b32.xlu0 %v1354, 32
    %v1364 = vpop.permute.xlu0 %1363
    %v1366 = vmul.f32 %v1360, %v1364
    %1368 = vrot.lane.b32.xlu0 %v1361, 64
    %v1369 = vpop.permute.xlu0 %1368
    %v1371 = vmul.f32 %v1360, %v1369
    %1373 = vrot.lane.b32.xlu0 %v1371, 32
    %v1374 = vpop.permute.xlu0 %1373
    %v1376 = vadd.f32 %v1366, %v1374
    %v1377 = vtanh.pop %v1376
    %1379 = vrot.lane.b32.xlu0 %v1377, 64
    %v1380 = vpop.permute.xlu0 %1379
    %v1382 = vmul.f32 %v1360, %v1380
    %v1383 = vxor.u32 %v1353, 2147483648
    %v1384 = vmul.f32 %v1383, 1.442695
    %v1385 = vpow.pop %v1384
    %v1386 = vadd.f32 %v1385, 1.0
    %v1387 = vrcp.pop %v1386
    %v1388 = vmul.f32 1.0, %v1387
    %v1389 = vtanh.pop %v1353
    %v1390 = vmul.f32 %v1388, %v1354
    %1392 = vrot.lane.b32.xlu0 %v1389, 64
    %v1393 = vpop.permute.xlu0 %1392
    %v1395 = vmul.f32 %v1388, %v1393
    %1397 = vrot.lane.b32.xlu0 %v1395, 32
    %v1398 = vpop.permute.xlu0 %1397
    %v1400 = vadd.f32 %v1390, %v1398
    %v1401 = vtanh.pop %v1400
    %1403 = vrot.lane.b32.xlu0 %v1401, 64
    %v1404 = vpop.permute.xlu0 %1403
    %v1406 = vmul.f32 %v1388, %v1404
    %1408 = vrot.lane.b32.xlu0 %v1382, 32
    %v1409 = vpop.permute.xlu0 %1408
    %1411 = vst.msk [vmem:[#allocation3] sm:$0xff] %vm435, %v1409
    %1413 = vrot.lane.b32.xlu0 %v1406, 64
    %v1414 = vpop.permute.xlu0 %1413
    %1416 = vst.msk [vmem:[#allocation3] sm:$0xff] %vm441, %v1414
    %1418 = vrot.lane.b32.xlu0 %v1376, 96
    %v1419 = vpop.permute.xlu0 %1418
    %1421 = vst.msk [vmem:[#allocation4] sm:$0xff] %vm435, %v1419
    %1422 = vst.msk [vmem:[#allocation4] sm:$0xff] %vm441, %v1400
    %v1423 = vpack.c.bf16 %v1382, %v1382
    %v1425 = vunpack.c.l.b16 %v1423
    %v1426 = vpack.c.b16 %v1425, %v1425
    %1427 = vrot.lane.b32.xlu0 %v1426, 32
    %v1428 = vpop.permute.xlu0 %1427
    %1430 = vst.msk [vmem:[%s465] sm:$0xf] %vm456, %v1428
    %v1431 = vpack.c.bf16 %v1406, %v1406
    %v1433 = vunpack.c.l.b16 %v1431
    %v1434 = vpack.c.b16 %v1433, %v1433
    %1435 = vrot.lane.b32.xlu0 %v1434, 64
    %v1436 = vpop.permute.xlu0 %1435
    %1438 = vst.msk [vmem:[#allocation5] sm:$0xf] %vm466, %v1436
    %v1439 = vld [vmem:[#allocation3] sm:$0xff]
    %1440 = vst.msk [vmem:[#allocation7] sm:$0xff] %vm117, %v1439
    %v1441 = vld [vmem:[#allocation3] sm:$0xff]
    %v1442 = vpack.c.bf16 %v1441, %v1441
    %v1443 = vld [vmem:[%s4] sm:$0xf]
    %v1444 = vld [vmem:[%s4 + $0x4] sm:$0xf]
    %v1445 = vld [vmem:[%s4 + $0x8] sm:$0xf]
    %v1446 = vld [vmem:[%s4 + $0xc] sm:$0xf]
    %v1447 = vld [vmem:[%s4 + $0x10] sm:$0xf]
    %v1448 = vld [vmem:[%s4 + $0x14] sm:$0xf]
    %v1449 = vld [vmem:[%s4 + $0x18] sm:$0xf]
    %v1450 = vld [vmem:[%s4 + $0x1c] sm:$0xf]
    %v1451 = vld [vmem:[%s5] sm:$0x1]
    %v1453 = vlaneseq
    %v1454 = vshrl.u32 %v1453, 7
    %v1455 = vsub.s32 0, %v1454
    %v1456 = vrot.slane %v1451, %v1455
    %v1466 = vunpack.c.l.b16 %v1443
    %v1467 = vunpack.c.l.b16 %v1444
    %v1468 = vunpack.c.l.b16 %v1445
    %v1469 = vunpack.c.l.b16 %v1446
    %v1470 = vunpack.c.l.b16 %v1447
    %v1471 = vunpack.c.l.b16 %v1448
    %v1472 = vunpack.c.l.b16 %v1449
    %v1473 = vunpack.c.l.b16 %v1450
    %v1474 = vpack.c.b16 %v1467, %v1466
    %v1475 = vpack.c.b16 %v1469, %v1468
    %v1476 = vpack.c.b16 %v1471, %v1470
    %v1477 = vpack.c.b16 %v1473, %v1472
    %v1483 = vsel %vm117, %v1442, 0
    %1485 = vmatprep.subr.bf16.mxu0 0
    %1486 = vmatpush1.bf16.msra.mxu0 %v1474
    %1487 = vmatprep.subr.bf16.mxu0 0
    %1488 = vmatpush1.bf16.msra.mxu0 %v1475
    %1489 = vmatprep.subr.bf16.mxu0 0
    %1490 = vmatpush1.bf16.msra.mxu0 %v1476
    %1491 = vmatprep.subr.bf16.mxu0 0
    %1492 = vmatpush1.bf16.msra.mxu0 %v1477
    %1493 = vmatprep.subr.bf16.mxu0 0
    %1494 = vmatpush1.bf16.msra.mxu0 0
    %1495 = vmatprep.subr.bf16.mxu0 0
    %1496 = vmatpush1.bf16.msra.mxu0 0
    %1497 = vmatprep.subr.bf16.mxu0 0
    %1498 = vmatpush1.bf16.msra.mxu0 0
    %1499 = vmatprep.subr.bf16.mxu0 0
    %1500 = vmatpush1.bf16.msra.mxu0 0
    %1501 = vmatprep.subr.bf16.mxu0 0
    %1502 = vmatpush1.bf16.msra.mxu0 0
    %1503 = vmatprep.subr.bf16.mxu0 0
    %1504 = vmatpush1.bf16.msra.mxu0 0
    %1505 = vmatprep.subr.bf16.mxu0 0
    %1506 = vmatpush1.bf16.msra.mxu0 0
    %1507 = vmatprep.subr.bf16.mxu0 0
    %1508 = vmatpush1.bf16.msra.mxu0 0
    %1509 = vmatprep.subr.bf16.mxu0 0
    %1510 = vmatpush1.bf16.msra.mxu0 0
    %1511 = vmatprep.subr.bf16.mxu0 0
    %1512 = vmatpush1.bf16.msra.mxu0 0
    %1513 = vmatprep.subr.bf16.mxu0 0
    %1514 = vmatpush1.bf16.msra.mxu0 0
    %1515 = vmatprep.subr.bf16.mxu0 0
    %1516 = vmatpush1.bf16.msra.mxu0 0
    %1517 = vmatprep.mubr.bf16.mxu0 0
    %1518 = vmatmul.mubr.bf16.gmra.mrb[0].mxu0 %v1483
    %v1519 = vpop.f32.mrb[0].mxu0
    %v1520 = vadd.f32 %v1456, %v1519
    %v1521 = vpop.f32.mrb[0].mxu0
    %v1522 = vpop.f32.mrb[0].mxu0
    %v1523 = vpop.f32.mrb[0].mxu0
    %1524 = vdwg.mxu0
    %vm1525 = vcmask 31744
    %1526 = vst.msk [vmem:[%s8] sm:$0xff] %vm1525, %v1520
    // Predicated region
    $region26: #{lstm_forward.3} parent=1 // pred_check
      _
    $region27: #{lstm_forward.3} parent=1 // pred_check_branch
      %1528 = sbr.rel (0) target = $region29
    $region28: #{lstm_forward.3} parent=1 // pred_region
      %s1530 = ssub.s32 512, 512
      %1531 = vsyncadd [#allocation6], %s1530
      %s1532 = sshll.u32 [#allocation5], 4
      %s1533 = int_to_ptr.vmem [resolvable:$true] %s1532
      %1538 = dma.vmem_to_hbm [thread:$0]  %s1533, 512, %s6, [#allocation6], 64, 64, 4
    $region29: #{lstm_forward.3} parent=1 // pred_fallthru
      _
    // Predicated region
    $region30: #{lstm_forward.3} parent=1 // pred_check
      _
    $region31: #{lstm_forward.3} parent=1 // pred_check_branch
      %1540 = sbr.rel (0) target = $region33
    $region32: #{lstm_forward.3} parent=1 // pred_region
      %s1542 = ssub.s32 128, 128
      %1543 = vsyncadd [#allocation8], %s1542
      %s1545 = sshll.u32 [#allocation7], 4
      %s1546 = int_to_ptr.vmem [resolvable:$true] %s1545
      %1548 = dma.vmem_to_hbm [thread:$0]  %s1546, 128, %s7, [#allocation8]
    $region33: #{lstm_forward.3} parent=1 // pred_fallthru
      _
    // Predicated region
    $region34: #{lstm_forward.3} parent=1 // pred_check
      _
    $region35: #{lstm_forward.3} parent=1 // pred_check_branch
      %1550 = sbr.rel (0) target = $region37
    $region36: #{lstm_forward.3} parent=1 // pred_region
      _
    $region37: #{lstm_forward.3} parent=1 // pred_fallthru
      _
    // Predicated region
    $region38: #{lstm_forward.3} parent=1 // pred_check
      _
    $region39: #{lstm_forward.3} parent=1 // pred_check_branch
      %1552 = sbr.rel (0) target = $region41
    $region40: #{lstm_forward.3} parent=1 // pred_region
      %1553 = dma.done [#allocation6], 512
    $region41: #{lstm_forward.3} parent=1 // pred_fallthru
      _
    // Predicated region
    $region42: #{lstm_forward.3} parent=1 // pred_check
      _
    $region43: #{lstm_forward.3} parent=1 // pred_check_branch
      %1555 = sbr.rel (0) target = $region45
    $region44: #{lstm_forward.3} parent=1 // pred_region
      %1556 = dma.done [#allocation8], 128
    $region45: #{lstm_forward.3} parent=1 // pred_fallthru
      _
    // Predicated region
    $region46: #{lstm_forward.3} parent=1 // pred_check
      _
    $region47: #{lstm_forward.3} parent=1 // pred_check_branch
      %1558 = sbr.rel (0) target = $region49
    $region48: #{lstm_forward.3} parent=1 // pred_region
      _
    $region49: #{lstm_forward.3} parent=1 // pred_fallthru
      _
    %1559 = vsyncpa [#allocation6], 1
    %1560 = vsyncpa [#allocation8], 1

</llo_original>
